<compile_context>
chip_gen: v6e
topology: v6e:2x2x1
jax: 0.10.0
libtpu: 0.0.40
codegen_flags: <defaults>
</compile_context>

<pallas_src>
import functools
import numpy as np

import jax
import jax.numpy as jnp
from jax import lax
from jax.experimental import pallas as pl
from jax.experimental.pallas import tpu as pltpu


def _round_up(a, m):
    return (a + m - 1) // m * m


# ----------------------------- fused Pallas kernel ----------------------------- #

def _upblock_kernel(x_ref, wt_ref, w1_ref, w2_ref, bias_ref, mask_ref, wsp_ref,
                    out_ref, sp_scr, *, k, WS, HWS, Cr, n_valid, margin):
    mask = mask_ref[...]                               # (1, HWS) f32, 1.0 in valid window
    mask_b = mask > 0.5

    bt = bias_ref[:, 0:1]                              # (Cout, 1) conv bias
    b2 = bias_ref[:, 1:2]                              # (Cout, 1) MLP bias 2
    b1 = bias_ref[0:Cr, 2:3]                           # (Cr, 1)   MLP bias 1

    # ---- ConvTranspose2d == full correlation with flipped taps, as ONE fused
    #      K = k*k*Cin matmul: stack the k*k shifted windows along sublanes
    #      (f32 concat -> bf16 MXU operands, f32 accumulation).  Bias only inside
    #      the valid window so the plane border stays exactly zero.
    rhs = jnp.concatenate(
        [x_ref[0, :, pl.ds(p * WS + q, HWS)].astype(jnp.float32)
         for p in range(k) for q in range(k)], axis=0).astype(jnp.bfloat16)
    y = jnp.dot(wt_ref[...], rhs,
                preferred_element_type=jnp.float32) + bt * mask      # (Cout, HWS) f32

    # ---- CBAM channel gate: avg / max / lp / lse pools over the valid window.
    avg = jnp.sum(y, axis=1, keepdims=True) * (1.0 / n_valid)        # border lanes are 0
    lp = jnp.sqrt(jnp.sum(y * y, axis=1, keepdims=True))
    ym = jnp.where(mask_b, y, -jnp.inf)                # mask BEFORE exp -> no overflow
    mx = jnp.max(ym, axis=1, keepdims=True)
    lse = mx + jnp.log(jnp.sum(jnp.exp(ym - mx), axis=1, keepdims=True))
    pools = jnp.concatenate([avg, mx, lp, lse], axis=1)              # (Cout, 4)

    # shared MLP per pool type, summed over pool types
    h = jnp.maximum(
        jnp.dot(w1_ref[...], pools, preferred_element_type=jnp.float32) + b1, 0.0)
    att = jnp.dot(w2_ref[...], h, preferred_element_type=jnp.float32) + b2
    att = jnp.sum(att, axis=1, keepdims=True)                        # (Cout, 1)
    yc = y * jax.nn.sigmoid(att)                                     # channel-gated

    # ---- CBAM spatial gate: [max_C ; mean_C] pooling, then 7x7 conv (BN folded)
    #      as 49 shifted-window (2,HWS) FMAs on a zero-margined VMEM scratch.
    cp = jnp.concatenate([jnp.max(yc, axis=0, keepdims=True),
                          jnp.mean(yc, axis=0, keepdims=True)], axis=0)  # (2, HWS)

    @pl.when(pl.program_id(0) == 0)
    def _():
        # Zero the margins once; scratch persists across grid steps.  Under megacore
        # sharding a core starting at program_id>0 keeps stale margins, but those
        # lanes only feed border outputs that are cropped (and scaled by yc == 0).
        sp_scr[:, 0:margin] = jnp.zeros((2, margin), jnp.float32)
        sp_scr[:, margin + HWS:margin + HWS + margin] = jnp.zeros((2, margin), jnp.float32)

    sp_scr[:, margin:margin + HWS] = cp

    acc = jnp.zeros((2, HWS), jnp.float32)
    for dp in range(-3, 4):
        for dq in range(-3, 4):
            t = (dp + 3) * 7 + (dq + 3)
            r = sp_scr[:, pl.ds(margin + dp * WS + dq, HWS)]          # (2, HWS)
            acc = acc + wsp_ref[:, t:t + 1] * r                       # both channels at once
    s = acc[0:1, :] + acc[1:2, :]                                     # (1, HWS)

    out_ref[0] = yc * jax.nn.sigmoid(s)                # border stays 0 (yc == 0 there)


# ------------------------------ wrapper (glue) ------------------------------ #

def upblock_forward(x, params, k):
    Wt, bt, w1, b1, w2, b2, wsp = params
    B, Cin, H, W = x.shape
    Cout = Wt.shape[1]
    Cr = w1.shape[0]
    Ho, Wo = H + k - 1, W + k - 1          # transposed-conv output size
    PAD = 3                                # 7x7 spatial-gate conv padding
    HS, WS = Ho + 2 * PAD, Wo + 2 * PAD    # work-plane rows / cols (no per-row bump)
    HW = HS * WS
    HWS = _round_up(HW, 128)               # lane-dense: <=127-lane zero tail
    MARGIN = _round_up(max((k - 1) * WS + (k - 1), 3 * WS + 3), 128)
    L_IN = HWS + MARGIN                    # input plane + zero tail for shifted windows

    # glue: place x into the zero work plane at offset (PAD+k-1, PAD+k-1),
    # flatten spatial onto lanes, add zero tail, cast to bf16 for the MXU.
    off = PAD + (k - 1)
    xplane = jnp.zeros((B, Cin, HS, WS), x.dtype)
    xplane = xplane.at[:, :, off:off + H, off:off + W].set(x)
    xflat = jnp.pad(xplane.reshape(B, Cin, HW), ((0, 0), (0, 0), (0, L_IN - HW)))
    xflat = xflat.astype(jnp.bfloat16)

    # ConvTranspose2d weight (Cin,Cout,k,k) -> one packed correlation matrix
    # (Cout, k*k*Cin); column order matches the in-kernel window stack (tap-major).
    wt_pack = (jnp.flip(Wt, axis=(2, 3)).transpose(1, 2, 3, 0)       # (Cout, k, k, Cin)
               .reshape(Cout, k * k * Cin).astype(jnp.bfloat16))

    # valid-window mask (1 inside the (Ho,Wo) output window, 0 in border + tail)
    mask = jnp.zeros((HS, WS), jnp.float32)
    mask = mask.at[PAD:PAD + Ho, PAD:PAD + Wo].set(1.0)
    mask = jnp.pad(mask.reshape(1, HW), ((0, 0), (0, HWS - HW)))

    # pack all bias vectors into one small operand: [bt | b2 | b1 (padded)]
    biases = jnp.zeros((Cout, 3), jnp.float32)
    biases = biases.at[:, 0].set(bt).at[:, 1].set(b2).at[:Cr, 2].set(b1)

    # 7x7 spatial conv weights with eval-mode BatchNorm2d(1) folded in (VMEM operand)
    bn_scale = 1.0 / jnp.sqrt(1.0 + 1e-5)
    wsp_flat = (wsp[0] * bn_scale).reshape(2, 49).astype(jnp.float32)

    kernel = functools.partial(_upblock_kernel, k=k, WS=WS, HWS=HWS, Cr=Cr,
                               n_valid=float(Ho * Wo), margin=MARGIN)
    out_plane = pl.pallas_call(
        kernel,
        out_shape=jax.ShapeDtypeStruct((B, Cout, HWS), jnp.float32),
        grid=(B,),
        in_specs=[
            pl.BlockSpec((1, Cin, L_IN), lambda b: (b, 0, 0)),
            pl.BlockSpec((Cout, k * k * Cin), lambda b: (0, 0)),
            pl.BlockSpec((Cr, Cout), lambda b: (0, 0)),
            pl.BlockSpec((Cout, Cr), lambda b: (0, 0)),
            pl.BlockSpec((Cout, 3), lambda b: (0, 0)),
            pl.BlockSpec((1, HWS), lambda b: (0, 0)),
            pl.BlockSpec((2, 49), lambda b: (0, 0)),
        ],
        out_specs=pl.BlockSpec((1, Cout, HWS), lambda b: (b, 0, 0)),
        scratch_shapes=[pltpu.VMEM((2, MARGIN + HWS + MARGIN), jnp.float32)],
        compiler_params=pltpu.CompilerParams(dimension_semantics=("parallel",)),
    )(xflat, wt_pack, w1, w2, biases, mask, wsp_flat)

    out = out_plane[:, :, :HW].reshape(B, Cout, HS, WS)[:, :, PAD:PAD + Ho, PAD:PAD + Wo]
    return out


# --------------------------- pure-JAX reference ----------------------------- #

def reference_upblock(x, params, k):
    Wt, bt, w1, b1, w2, b2, wsp = params
    B, Cin, H, W = x.shape
    Cout = Wt.shape[1]
    Ho, Wo = H + k - 1, W + k - 1
    # ConvTranspose2d, stride=1, padding=0 (scatter-add definition)
    y = jnp.zeros((B, Cout, Ho, Wo), jnp.float32)
    for p in range(k):
        for q in range(k):
            y = y.at[:, :, p:p + H, q:q + W].add(
                jnp.einsum('bihw,io->bohw', x, Wt[:, :, p, q]))
    y = y + bt[None, :, None, None]
    # CBAM channel gate
    flat = y.reshape(B, Cout, Ho * Wo)
    avg = flat.mean(-1)
    mx = flat.max(-1)
    lp = jnp.sqrt((flat ** 2).sum(-1))
    m = flat.max(-1, keepdims=True)
    lse = (m + jnp.log(jnp.exp(flat - m).sum(-1, keepdims=True)))[..., 0]
    att = 0.0
    for pvec in (avg, mx, lp, lse):
        h = jax.nn.relu(pvec @ w1.T + b1)
        att = att + h @ w2.T + b2
    yc = y * jax.nn.sigmoid(att)[:, :, None, None]
    # CBAM spatial gate
    cp = jnp.stack([yc.max(1), yc.mean(1)], axis=1)
    s = lax.conv_general_dilated(cp, wsp, (1, 1), ((3, 3), (3, 3)),
                                 dimension_numbers=('NCHW', 'OIHW', 'NCHW'))
    s = s / jnp.sqrt(1.0 + 1e-5)
    return yc * jax.nn.sigmoid(s)


# ---------------------------------- main ------------------------------------ #

if __name__ == "__main__":
    B, Cin, Cout, ksz = 2, 4, 8, 3
    H = W = 16
    Cr = Cout // 2  # reduction_ratio = 2

    key = jax.random.PRNGKey(0)
    kx, k1, k2, k3, k4, k5, k6 = jax.random.split(key, 7)

    x = jax.random.normal(kx, (B, Cin, H, W), jnp.float32)

    # ConvTranspose2d: xavier-normal weight (Cin, Cout, k, k), zero bias
    fan_in, fan_out = Cout * ksz * ksz, Cin * ksz * ksz
    std = (2.0 / (fan_in + fan_out)) ** 0.5
    Wt = std * jax.random.normal(k1, (Cin, Cout, ksz, ksz), jnp.float32)
    bt = jnp.zeros((Cout,), jnp.float32)
    # CBAM channel-gate MLP: Linear(C, C//2) -> ReLU -> Linear(C//2, C)
    w1 = 0.3 * jax.random.normal(k2, (Cr, Cout), jnp.float32)
    b1 = 0.1 * jax.random.normal(k3, (Cr,), jnp.float32)
    w2 = 0.3 * jax.random.normal(k4, (Cout, Cr), jnp.float32)
    b2 = 0.1 * jax.random.normal(k5, (Cout,), jnp.float32)
    # CBAM spatial-gate conv: Conv2d(2, 1, 7, padding=3, bias=False)
    wsp = 0.1 * jax.random.normal(k6, (1, 2, 7, 7), jnp.float32)

    params = (Wt, bt, w1, b1, w2, b2, wsp)

    fwd = jax.jit(functools.partial(upblock_forward, params=params, k=ksz))
    out = jax.block_until_ready(fwd(x))

    ref = jax.block_until_ready(reference_upblock(x, params, ksz))
    np.testing.assert_allclose(np.asarray(out), np.asarray(ref), rtol=2e-2, atol=2e-2)

    print("KERNEL_OK")
</pallas_src>

<mosaic_0001>
module attributes {stable_mosaic.version = 11 : i64} {
  func.func @_upblock_kernel(%arg0: i32, %arg1: memref<1x4x768xbf16, #tpu.memory_space<vmem>>, %arg2: memref<8x36xbf16, #tpu.memory_space<vmem>>, %arg3: memref<4x8xf32, #tpu.memory_space<vmem>>, %arg4: memref<8x4xf32, #tpu.memory_space<vmem>>, %arg5: memref<8x3xf32, #tpu.memory_space<vmem>>, %arg6: memref<1x640xf32, #tpu.memory_space<vmem>>, %arg7: memref<2x49xf32, #tpu.memory_space<vmem>>, %arg8: memref<1x8x640xf32, #tpu.memory_space<vmem>>, %arg9: memref<2x896xf32, #tpu.memory_space<vmem>>) attributes {dimension_semantics = [#tpu.dimension_semantics<parallel>], iteration_bounds = array<i64: 2>, scalar_prefetch = 0 : i64, scratch_operands = 1 : i64, tpu.core_type = #tpu.core_type<tc>, window_params = [{transform_indices = @transform_0, window_bounds = array<i64: 1, 4, 768>}, {pipeline_mode = #tpu.pipeline_mode<synchronous>, transform_indices = @transform_1, window_bounds = array<i64: 8, 36>}, {pipeline_mode = #tpu.pipeline_mode<synchronous>, transform_indices = @transform_2, window_bounds = array<i64: 4, 8>}, {pipeline_mode = #tpu.pipeline_mode<synchronous>, transform_indices = @transform_3, window_bounds = array<i64: 8, 4>}, {pipeline_mode = #tpu.pipeline_mode<synchronous>, transform_indices = @transform_4, window_bounds = array<i64: 8, 3>}, {pipeline_mode = #tpu.pipeline_mode<synchronous>, transform_indices = @transform_5, window_bounds = array<i64: 1, 640>}, {pipeline_mode = #tpu.pipeline_mode<synchronous>, transform_indices = @transform_6, window_bounds = array<i64: 2, 49>}, {transform_indices = @transform_7, window_bounds = array<i64: 1, 8, 640>}]} {
    %c0 = arith.constant 0 : index
    %c0_0 = arith.constant 0 : index
    %0 = vector.load %arg6[%c0, %c0_0] : memref<1x640xf32, #tpu.memory_space<vmem>>, vector<1x640xf32>
    %cst = arith.constant 5.000000e-01 : f32
    %1 = vector.broadcast %cst : f32 to vector<1x640xf32>
    %2 = arith.cmpf ogt, %0, %1 : vector<1x640xf32>
    %c0_1 = arith.constant 0 : index
    %c0_2 = arith.constant 0 : index
    %3 = vector.load %arg5[%c0_1, %c0_2] : memref<8x3xf32, #tpu.memory_space<vmem>>, vector<8x1xf32>
    %c0_3 = arith.constant 0 : index
    %c1 = arith.constant 1 : index
    %4 = vector.load %arg5[%c0_3, %c1] : memref<8x3xf32, #tpu.memory_space<vmem>>, vector<8x1xf32>
    %c0_4 = arith.constant 0 : index
    %c2 = arith.constant 2 : index
    %5 = vector.load %arg5[%c0_4, %c2] : memref<8x3xf32, #tpu.memory_space<vmem>>, vector<4x1xf32>
    %c0_5 = arith.constant 0 : index
    %c0_6 = arith.constant 0 : index
    %c0_7 = arith.constant 0 : index
    %6 = vector.load %arg1[%c0_5, %c0_6, %c0_7] : memref<1x4x768xbf16, #tpu.memory_space<vmem>>, vector<1x4x640xbf16>
    %7 = vector.shape_cast %6 : vector<1x4x640xbf16> to vector<4x640xbf16>
    %8 = arith.extf %7 : vector<4x640xbf16> to vector<4x640xf32>
    %c0_8 = arith.constant 0 : index
    %c0_9 = arith.constant 0 : index
    %c1_10 = arith.constant 1 : index
    %9 = vector.load %arg1[%c0_8, %c0_9, %c1_10] : memref<1x4x768xbf16, #tpu.memory_space<vmem>>, vector<1x4x640xbf16>
    %10 = vector.shape_cast %9 : vector<1x4x640xbf16> to vector<4x640xbf16>
    %11 = arith.extf %10 : vector<4x640xbf16> to vector<4x640xf32>
    %c0_11 = arith.constant 0 : index
    %c0_12 = arith.constant 0 : index
    %c2_13 = arith.constant 2 : index
    %12 = vector.load %arg1[%c0_11, %c0_12, %c2_13] : memref<1x4x768xbf16, #tpu.memory_space<vmem>>, vector<1x4x640xbf16>
    %13 = vector.shape_cast %12 : vector<1x4x640xbf16> to vector<4x640xbf16>
    %14 = arith.extf %13 : vector<4x640xbf16> to vector<4x640xf32>
    %c0_14 = arith.constant 0 : index
    %c0_15 = arith.constant 0 : index
    %c24 = arith.constant 24 : index
    %15 = vector.load %arg1[%c0_14, %c0_15, %c24] : memref<1x4x768xbf16, #tpu.memory_space<vmem>>, vector<1x4x640xbf16>
    %16 = vector.shape_cast %15 : vector<1x4x640xbf16> to vector<4x640xbf16>
    %17 = arith.extf %16 : vector<4x640xbf16> to vector<4x640xf32>
    %c0_16 = arith.constant 0 : index
    %c0_17 = arith.constant 0 : index
    %c25 = arith.constant 25 : index
    %18 = vector.load %arg1[%c0_16, %c0_17, %c25] : memref<1x4x768xbf16, #tpu.memory_space<vmem>>, vector<1x4x640xbf16>
    %19 = vector.shape_cast %18 : vector<1x4x640xbf16> to vector<4x640xbf16>
    %20 = arith.extf %19 : vector<4x640xbf16> to vector<4x640xf32>
    %c0_18 = arith.constant 0 : index
    %c0_19 = arith.constant 0 : index
    %c26 = arith.constant 26 : index
    %21 = vector.load %arg1[%c0_18, %c0_19, %c26] : memref<1x4x768xbf16, #tpu.memory_space<vmem>>, vector<1x4x640xbf16>
    %22 = vector.shape_cast %21 : vector<1x4x640xbf16> to vector<4x640xbf16>
    %23 = arith.extf %22 : vector<4x640xbf16> to vector<4x640xf32>
    %c0_20 = arith.constant 0 : index
    %c0_21 = arith.constant 0 : index
    %c48 = arith.constant 48 : index
    %24 = vector.load %arg1[%c0_20, %c0_21, %c48] : memref<1x4x768xbf16, #tpu.memory_space<vmem>>, vector<1x4x640xbf16>
    %25 = vector.shape_cast %24 : vector<1x4x640xbf16> to vector<4x640xbf16>
    %26 = arith.extf %25 : vector<4x640xbf16> to vector<4x640xf32>
    %c0_22 = arith.constant 0 : index
    %c0_23 = arith.constant 0 : index
    %c49 = arith.constant 49 : index
    %27 = vector.load %arg1[%c0_22, %c0_23, %c49] : memref<1x4x768xbf16, #tpu.memory_space<vmem>>, vector<1x4x640xbf16>
    %28 = vector.shape_cast %27 : vector<1x4x640xbf16> to vector<4x640xbf16>
    %29 = arith.extf %28 : vector<4x640xbf16> to vector<4x640xf32>
    %c0_24 = arith.constant 0 : index
    %c0_25 = arith.constant 0 : index
    %c50 = arith.constant 50 : index
    %30 = vector.load %arg1[%c0_24, %c0_25, %c50] : memref<1x4x768xbf16, #tpu.memory_space<vmem>>, vector<1x4x640xbf16>
    %31 = vector.shape_cast %30 : vector<1x4x640xbf16> to vector<4x640xbf16>
    %32 = arith.extf %31 : vector<4x640xbf16> to vector<4x640xf32>
    %33 = tpu.concatenate %8, %11, %14, %17, %20, %23, %26, %29, %32 in 0 : vector<4x640xf32>, vector<4x640xf32>, vector<4x640xf32>, vector<4x640xf32>, vector<4x640xf32>, vector<4x640xf32>, vector<4x640xf32>, vector<4x640xf32>, vector<4x640xf32> -> vector<36x640xf32>
    %34 = arith.truncf %33 : vector<36x640xf32> to vector<36x640xbf16>
    %c0_26 = arith.constant 0 : index
    %c0_27 = arith.constant 0 : index
    %35 = vector.load %arg2[%c0_26, %c0_27] : memref<8x36xbf16, #tpu.memory_space<vmem>>, vector<8x36xbf16>
    %cst_28 = arith.constant dense<0.000000e+00> : vector<8x640xf32>
    %36 = tpu.matmul %35, %34, %cst_28 {dimension_numbers = #tpu.dot_dimension_numbers<[1], [0], [0], [1], [0, 0, 1, 1], [], []>} : vector<8x36xbf16>, vector<36x640xbf16>, vector<8x640xf32> -> vector<8x640xf32>
    %37 = vector.broadcast %3 : vector<8x1xf32> to vector<8x640xf32>
    %38 = vector.broadcast %0 : vector<1x640xf32> to vector<8x640xf32>
    %39 = arith.mulf %37, %38 : vector<8x640xf32>
    %40 = arith.addf %36, %39 : vector<8x640xf32>
    %cst_29 = arith.constant dense<0.000000e+00> : vector<8xf32>
    %41 = vector.multi_reduction <add>, %40, %cst_29 [1] : vector<8x640xf32> to vector<8xf32>
    %42 = vector.shape_cast %41 : vector<8xf32> to vector<8x1xf32>
    %cst_30 = arith.constant 0.00308641978 : f32
    %43 = vector.broadcast %cst_30 : f32 to vector<8x1xf32>
    %44 = arith.mulf %42, %43 : vector<8x1xf32>
    %45 = arith.mulf %40, %40 : vector<8x640xf32>
    %cst_31 = arith.constant dense<0.000000e+00> : vector<8xf32>
    %46 = vector.multi_reduction <add>, %45, %cst_31 [1] : vector<8x640xf32> to vector<8xf32>
    %47 = vector.shape_cast %46 : vector<8xf32> to vector<8x1xf32>
    %48 = math.sqrt %47 : vector<8x1xf32>
    %cst_32 = arith.constant 0xFF800000 : f32
    %49 = vector.shape_cast %2 : vector<1x640xi1> to vector<1x640xi1>
    %50 = vector.broadcast %49 : vector<1x640xi1> to vector<8x640xi1>
    %51 = vector.broadcast %cst_32 : f32 to vector<8x640xf32>
    %52 = arith.select %50, %40, %51 : vector<8x640xi1>, vector<8x640xf32>
    %cst_33 = arith.constant dense<0xFF800000> : vector<8xf32>
    %53 = vector.multi_reduction <maximumf>, %52, %cst_33 [1] : vector<8x640xf32> to vector<8xf32>
    %54 = vector.shape_cast %53 : vector<8xf32> to vector<8x1xf32>
    %55 = vector.broadcast %54 : vector<8x1xf32> to vector<8x640xf32>
    %56 = arith.subf %52, %55 : vector<8x640xf32>
    %57 = math.exp %56 : vector<8x640xf32>
    %cst_34 = arith.constant dense<0.000000e+00> : vector<8xf32>
    %58 = vector.multi_reduction <add>, %57, %cst_34 [1] : vector<8x640xf32> to vector<8xf32>
    %59 = vector.shape_cast %58 : vector<8xf32> to vector<8x1xf32>
    %60 = math.log %59 : vector<8x1xf32>
    %61 = arith.addf %54, %60 : vector<8x1xf32>
    %62 = tpu.concatenate %44, %54, %48, %61 in 1 : vector<8x1xf32>, vector<8x1xf32>, vector<8x1xf32>, vector<8x1xf32> -> vector<8x4xf32>
    %c0_35 = arith.constant 0 : index
    %c0_36 = arith.constant 0 : index
    %63 = vector.load %arg3[%c0_35, %c0_36] : memref<4x8xf32, #tpu.memory_space<vmem>>, vector<4x8xf32>
    %cst_37 = arith.constant dense<0.000000e+00> : vector<4x4xf32>
    %64 = tpu.matmul %63, %62, %cst_37 {dimension_numbers = #tpu.dot_dimension_numbers<[1], [0], [0], [1], [0, 0, 1, 1], [], []>} : vector<4x8xf32>, vector<8x4xf32>, vector<4x4xf32> -> vector<4x4xf32>
    %65 = vector.broadcast %5 : vector<4x1xf32> to vector<4x4xf32>
    %66 = arith.addf %64, %65 : vector<4x4xf32>
    %cst_38 = arith.constant 0.000000e+00 : f32
    %67 = vector.broadcast %cst_38 : f32 to vector<4x4xf32>
    %68 = arith.maximumf %66, %67 : vector<4x4xf32>
    %c0_39 = arith.constant 0 : index
    %c0_40 = arith.constant 0 : index
    %69 = vector.load %arg4[%c0_39, %c0_40] : memref<8x4xf32, #tpu.memory_space<vmem>>, vector<8x4xf32>
    %cst_41 = arith.constant dense<0.000000e+00> : vector<8x4xf32>
    %70 = tpu.matmul %69, %68, %cst_41 {dimension_numbers = #tpu.dot_dimension_numbers<[1], [0], [0], [1], [0, 0, 1, 1], [], []>} : vector<8x4xf32>, vector<4x4xf32>, vector<8x4xf32> -> vector<8x4xf32>
    %71 = vector.broadcast %4 : vector<8x1xf32> to vector<8x4xf32>
    %72 = arith.addf %70, %71 : vector<8x4xf32>
    %cst_42 = arith.constant dense<0.000000e+00> : vector<8xf32>
    %73 = vector.multi_reduction <add>, %72, %cst_42 [1] : vector<8x4xf32> to vector<8xf32>
    %74 = vector.shape_cast %73 : vector<8xf32> to vector<8x1xf32>
    %75 = arith.negf %74 : vector<8x1xf32>
    %76 = math.exp %75 : vector<8x1xf32>
    %cst_43 = arith.constant 1.000000e+00 : f32
    %77 = vector.broadcast %cst_43 : f32 to vector<8x1xf32>
    %78 = arith.addf %77, %76 : vector<8x1xf32>
    %79 = arith.divf %77, %78 : vector<8x1xf32>
    %80 = vector.broadcast %79 : vector<8x1xf32> to vector<8x640xf32>
    %81 = arith.mulf %40, %80 : vector<8x640xf32>
    %cst_44 = arith.constant dense<0xFF800000> : vector<640xf32>
    %82 = vector.multi_reduction <maximumf>, %81, %cst_44 [0] : vector<8x640xf32> to vector<640xf32>
    %83 = vector.shape_cast %82 : vector<640xf32> to vector<1x640xf32>
    %cst_45 = arith.constant dense<0.000000e+00> : vector<640xf32>
    %84 = vector.multi_reduction <add>, %81, %cst_45 [0] : vector<8x640xf32> to vector<640xf32>
    %85 = vector.shape_cast %84 : vector<640xf32> to vector<1x640xf32>
    %cst_46 = arith.constant 8.000000e+00 : f32
    %86 = vector.broadcast %cst_46 : f32 to vector<1x640xf32>
    %87 = arith.divf %85, %86 : vector<1x640xf32>
    %88 = tpu.concatenate %83, %87 in 0 : vector<1x640xf32>, vector<1x640xf32> -> vector<2x640xf32>
    %c0_i32 = arith.constant 0 : i32
    %89 = arith.cmpi eq, %arg0, %c0_i32 : i32
    %90 = arith.extui %89 : i1 to i32
    %c0_i32_47 = arith.constant 0 : i32
    %91 = arith.cmpi ne, %90, %c0_i32_47 : i32
    scf.if %91 {
      %cst_160 = arith.constant 0.000000e+00 : f32
      %352 = vector.broadcast %cst_160 : f32 to vector<2x128xf32>
      %c0_161 = arith.constant 0 : index
      %c0_162 = arith.constant 0 : index
      %353 = vector.load %arg9[%c0_161, %c0_162] : memref<2x896xf32, #tpu.memory_space<vmem>>, vector<2x128xf32>
      tpu.vector_store %arg9[%c0_161, %c0_162], %352 {strides = array<i32>} : memref<2x896xf32, #tpu.memory_space<vmem>>, vector<2x128xf32>,
      %cst_163 = arith.constant 0.000000e+00 : f32
      %354 = vector.broadcast %cst_163 : f32 to vector<2x128xf32>
      %c0_164 = arith.constant 0 : index
      %c768 = arith.constant 768 : index
      %355 = vector.load %arg9[%c0_164, %c768] : memref<2x896xf32, #tpu.memory_space<vmem>>, vector<2x128xf32>
      tpu.vector_store %arg9[%c0_164, %c768], %354 {strides = array<i32>} : memref<2x896xf32, #tpu.memory_space<vmem>>, vector<2x128xf32>,
    } else {
    }
    %c0_48 = arith.constant 0 : index
    %c128 = arith.constant 128 : index
    %92 = vector.load %arg9[%c0_48, %c128] : memref<2x896xf32, #tpu.memory_space<vmem>>, vector<2x640xf32>
    tpu.vector_store %arg9[%c0_48, %c128], %88 {strides = array<i32>} : memref<2x896xf32, #tpu.memory_space<vmem>>, vector<2x640xf32>,
    %cst_49 = arith.constant 0.000000e+00 : f32
    %93 = vector.broadcast %cst_49 : f32 to vector<2x640xf32>
    %c0_50 = arith.constant 0 : index
    %c53 = arith.constant 53 : index
    %94 = vector.load %arg9[%c0_50, %c53] : memref<2x896xf32, #tpu.memory_space<vmem>>, vector<2x640xf32>
    %c0_51 = arith.constant 0 : index
    %c0_52 = arith.constant 0 : index
    %95 = vector.load %arg7[%c0_51, %c0_52] : memref<2x49xf32, #tpu.memory_space<vmem>>, vector<2x1xf32>
    %96 = vector.broadcast %95 : vector<2x1xf32> to vector<2x640xf32>
    %97 = arith.mulf %96, %94 : vector<2x640xf32>
    %98 = arith.addf %93, %97 : vector<2x640xf32>
    %c0_53 = arith.constant 0 : index
    %c54 = arith.constant 54 : index
    %99 = vector.load %arg9[%c0_53, %c54] : memref<2x896xf32, #tpu.memory_space<vmem>>, vector<2x640xf32>
    %c0_54 = arith.constant 0 : index
    %c1_55 = arith.constant 1 : index
    %100 = vector.load %arg7[%c0_54, %c1_55] : memref<2x49xf32, #tpu.memory_space<vmem>>, vector<2x1xf32>
    %101 = vector.broadcast %100 : vector<2x1xf32> to vector<2x640xf32>
    %102 = arith.mulf %101, %99 : vector<2x640xf32>
    %103 = arith.addf %98, %102 : vector<2x640xf32>
    %c0_56 = arith.constant 0 : index
    %c55 = arith.constant 55 : index
    %104 = vector.load %arg9[%c0_56, %c55] : memref<2x896xf32, #tpu.memory_space<vmem>>, vector<2x640xf32>
    %c0_57 = arith.constant 0 : index
    %c2_58 = arith.constant 2 : index
    %105 = vector.load %arg7[%c0_57, %c2_58] : memref<2x49xf32, #tpu.memory_space<vmem>>, vector<2x1xf32>
    %106 = vector.broadcast %105 : vector<2x1xf32> to vector<2x640xf32>
    %107 = arith.mulf %106, %104 : vector<2x640xf32>
    %108 = arith.addf %103, %107 : vector<2x640xf32>
    %c0_59 = arith.constant 0 : index
    %c56 = arith.constant 56 : index
    %109 = vector.load %arg9[%c0_59, %c56] : memref<2x896xf32, #tpu.memory_space<vmem>>, vector<2x640xf32>
    %c0_60 = arith.constant 0 : index
    %c3 = arith.constant 3 : index
    %110 = vector.load %arg7[%c0_60, %c3] : memref<2x49xf32, #tpu.memory_space<vmem>>, vector<2x1xf32>
    %111 = vector.broadcast %110 : vector<2x1xf32> to vector<2x640xf32>
    %112 = arith.mulf %111, %109 : vector<2x640xf32>
    %113 = arith.addf %108, %112 : vector<2x640xf32>
    %c0_61 = arith.constant 0 : index
    %c57 = arith.constant 57 : index
    %114 = vector.load %arg9[%c0_61, %c57] : memref<2x896xf32, #tpu.memory_space<vmem>>, vector<2x640xf32>
    %c0_62 = arith.constant 0 : index
    %c4 = arith.constant 4 : index
    %115 = vector.load %arg7[%c0_62, %c4] : memref<2x49xf32, #tpu.memory_space<vmem>>, vector<2x1xf32>
    %116 = vector.broadcast %115 : vector<2x1xf32> to vector<2x640xf32>
    %117 = arith.mulf %116, %114 : vector<2x640xf32>
    %118 = arith.addf %113, %117 : vector<2x640xf32>
    %c0_63 = arith.constant 0 : index
    %c58 = arith.constant 58 : index
    %119 = vector.load %arg9[%c0_63, %c58] : memref<2x896xf32, #tpu.memory_space<vmem>>, vector<2x640xf32>
    %c0_64 = arith.constant 0 : index
    %c5 = arith.constant 5 : index
    %120 = vector.load %arg7[%c0_64, %c5] : memref<2x49xf32, #tpu.memory_space<vmem>>, vector<2x1xf32>
    %121 = vector.broadcast %120 : vector<2x1xf32> to vector<2x640xf32>
    %122 = arith.mulf %121, %119 : vector<2x640xf32>
    %123 = arith.addf %118, %122 : vector<2x640xf32>
    %c0_65 = arith.constant 0 : index
    %c59 = arith.constant 59 : index
    %124 = vector.load %arg9[%c0_65, %c59] : memref<2x896xf32, #tpu.memory_space<vmem>>, vector<2x640xf32>
    %c0_66 = arith.constant 0 : index
    %c6 = arith.constant 6 : index
    %125 = vector.load %arg7[%c0_66, %c6] : memref<2x49xf32, #tpu.memory_space<vmem>>, vector<2x1xf32>
    %126 = vector.broadcast %125 : vector<2x1xf32> to vector<2x640xf32>
    %127 = arith.mulf %126, %124 : vector<2x640xf32>
    %128 = arith.addf %123, %127 : vector<2x640xf32>
    %c0_67 = arith.constant 0 : index
    %c77 = arith.constant 77 : index
    %129 = vector.load %arg9[%c0_67, %c77] : memref<2x896xf32, #tpu.memory_space<vmem>>, vector<2x640xf32>
    %c0_68 = arith.constant 0 : index
    %c7 = arith.constant 7 : index
    %130 = vector.load %arg7[%c0_68, %c7] : memref<2x49xf32, #tpu.memory_space<vmem>>, vector<2x1xf32>
    %131 = vector.broadcast %130 : vector<2x1xf32> to vector<2x640xf32>
    %132 = arith.mulf %131, %129 : vector<2x640xf32>
    %133 = arith.addf %128, %132 : vector<2x640xf32>
    %c0_69 = arith.constant 0 : index
    %c78 = arith.constant 78 : index
    %134 = vector.load %arg9[%c0_69, %c78] : memref<2x896xf32, #tpu.memory_space<vmem>>, vector<2x640xf32>
    %c0_70 = arith.constant 0 : index
    %c8 = arith.constant 8 : index
    %135 = vector.load %arg7[%c0_70, %c8] : memref<2x49xf32, #tpu.memory_space<vmem>>, vector<2x1xf32>
    %136 = vector.broadcast %135 : vector<2x1xf32> to vector<2x640xf32>
    %137 = arith.mulf %136, %134 : vector<2x640xf32>
    %138 = arith.addf %133, %137 : vector<2x640xf32>
    %c0_71 = arith.constant 0 : index
    %c79 = arith.constant 79 : index
    %139 = vector.load %arg9[%c0_71, %c79] : memref<2x896xf32, #tpu.memory_space<vmem>>, vector<2x640xf32>
    %c0_72 = arith.constant 0 : index
    %c9 = arith.constant 9 : index
    %140 = vector.load %arg7[%c0_72, %c9] : memref<2x49xf32, #tpu.memory_space<vmem>>, vector<2x1xf32>
    %141 = vector.broadcast %140 : vector<2x1xf32> to vector<2x640xf32>
    %142 = arith.mulf %141, %139 : vector<2x640xf32>
    %143 = arith.addf %138, %142 : vector<2x640xf32>
    %c0_73 = arith.constant 0 : index
    %c80 = arith.constant 80 : index
    %144 = vector.load %arg9[%c0_73, %c80] : memref<2x896xf32, #tpu.memory_space<vmem>>, vector<2x640xf32>
    %c0_74 = arith.constant 0 : index
    %c10 = arith.constant 10 : index
    %145 = vector.load %arg7[%c0_74, %c10] : memref<2x49xf32, #tpu.memory_space<vmem>>, vector<2x1xf32>
    %146 = vector.broadcast %145 : vector<2x1xf32> to vector<2x640xf32>
    %147 = arith.mulf %146, %144 : vector<2x640xf32>
    %148 = arith.addf %143, %147 : vector<2x640xf32>
    %c0_75 = arith.constant 0 : index
    %c81 = arith.constant 81 : index
    %149 = vector.load %arg9[%c0_75, %c81] : memref<2x896xf32, #tpu.memory_space<vmem>>, vector<2x640xf32>
    %c0_76 = arith.constant 0 : index
    %c11 = arith.constant 11 : index
    %150 = vector.load %arg7[%c0_76, %c11] : memref<2x49xf32, #tpu.memory_space<vmem>>, vector<2x1xf32>
    %151 = vector.broadcast %150 : vector<2x1xf32> to vector<2x640xf32>
    %152 = arith.mulf %151, %149 : vector<2x640xf32>
    %153 = arith.addf %148, %152 : vector<2x640xf32>
    %c0_77 = arith.constant 0 : index
    %c82 = arith.constant 82 : index
    %154 = vector.load %arg9[%c0_77, %c82] : memref<2x896xf32, #tpu.memory_space<vmem>>, vector<2x640xf32>
    %c0_78 = arith.constant 0 : index
    %c12 = arith.constant 12 : index
    %155 = vector.load %arg7[%c0_78, %c12] : memref<2x49xf32, #tpu.memory_space<vmem>>, vector<2x1xf32>
    %156 = vector.broadcast %155 : vector<2x1xf32> to vector<2x640xf32>
    %157 = arith.mulf %156, %154 : vector<2x640xf32>
    %158 = arith.addf %153, %157 : vector<2x640xf32>
    %c0_79 = arith.constant 0 : index
    %c83 = arith.constant 83 : index
    %159 = vector.load %arg9[%c0_79, %c83] : memref<2x896xf32, #tpu.memory_space<vmem>>, vector<2x640xf32>
    %c0_80 = arith.constant 0 : index
    %c13 = arith.constant 13 : index
    %160 = vector.load %arg7[%c0_80, %c13] : memref<2x49xf32, #tpu.memory_space<vmem>>, vector<2x1xf32>
    %161 = vector.broadcast %160 : vector<2x1xf32> to vector<2x640xf32>
    %162 = arith.mulf %161, %159 : vector<2x640xf32>
    %163 = arith.addf %158, %162 : vector<2x640xf32>
    %c0_81 = arith.constant 0 : index
    %c101 = arith.constant 101 : index
    %164 = vector.load %arg9[%c0_81, %c101] : memref<2x896xf32, #tpu.memory_space<vmem>>, vector<2x640xf32>
    %c0_82 = arith.constant 0 : index
    %c14 = arith.constant 14 : index
    %165 = vector.load %arg7[%c0_82, %c14] : memref<2x49xf32, #tpu.memory_space<vmem>>, vector<2x1xf32>
    %166 = vector.broadcast %165 : vector<2x1xf32> to vector<2x640xf32>
    %167 = arith.mulf %166, %164 : vector<2x640xf32>
    %168 = arith.addf %163, %167 : vector<2x640xf32>
    %c0_83 = arith.constant 0 : index
    %c102 = arith.constant 102 : index
    %169 = vector.load %arg9[%c0_83, %c102] : memref<2x896xf32, #tpu.memory_space<vmem>>, vector<2x640xf32>
    %c0_84 = arith.constant 0 : index
    %c15 = arith.constant 15 : index
    %170 = vector.load %arg7[%c0_84, %c15] : memref<2x49xf32, #tpu.memory_space<vmem>>, vector<2x1xf32>
    %171 = vector.broadcast %170 : vector<2x1xf32> to vector<2x640xf32>
    %172 = arith.mulf %171, %169 : vector<2x640xf32>
    %173 = arith.addf %168, %172 : vector<2x640xf32>
    %c0_85 = arith.constant 0 : index
    %c103 = arith.constant 103 : index
    %174 = vector.load %arg9[%c0_85, %c103] : memref<2x896xf32, #tpu.memory_space<vmem>>, vector<2x640xf32>
    %c0_86 = arith.constant 0 : index
    %c16 = arith.constant 16 : index
    %175 = vector.load %arg7[%c0_86, %c16] : memref<2x49xf32, #tpu.memory_space<vmem>>, vector<2x1xf32>
    %176 = vector.broadcast %175 : vector<2x1xf32> to vector<2x640xf32>
    %177 = arith.mulf %176, %174 : vector<2x640xf32>
    %178 = arith.addf %173, %177 : vector<2x640xf32>
    %c0_87 = arith.constant 0 : index
    %c104 = arith.constant 104 : index
    %179 = vector.load %arg9[%c0_87, %c104] : memref<2x896xf32, #tpu.memory_space<vmem>>, vector<2x640xf32>
    %c0_88 = arith.constant 0 : index
    %c17 = arith.constant 17 : index
    %180 = vector.load %arg7[%c0_88, %c17] : memref<2x49xf32, #tpu.memory_space<vmem>>, vector<2x1xf32>
    %181 = vector.broadcast %180 : vector<2x1xf32> to vector<2x640xf32>
    %182 = arith.mulf %181, %179 : vector<2x640xf32>
    %183 = arith.addf %178, %182 : vector<2x640xf32>
    %c0_89 = arith.constant 0 : index
    %c105 = arith.constant 105 : index
    %184 = vector.load %arg9[%c0_89, %c105] : memref<2x896xf32, #tpu.memory_space<vmem>>, vector<2x640xf32>
    %c0_90 = arith.constant 0 : index
    %c18 = arith.constant 18 : index
    %185 = vector.load %arg7[%c0_90, %c18] : memref<2x49xf32, #tpu.memory_space<vmem>>, vector<2x1xf32>
    %186 = vector.broadcast %185 : vector<2x1xf32> to vector<2x640xf32>
    %187 = arith.mulf %186, %184 : vector<2x640xf32>
    %188 = arith.addf %183, %187 : vector<2x640xf32>
    %c0_91 = arith.constant 0 : index
    %c106 = arith.constant 106 : index
    %189 = vector.load %arg9[%c0_91, %c106] : memref<2x896xf32, #tpu.memory_space<vmem>>, vector<2x640xf32>
    %c0_92 = arith.constant 0 : index
    %c19 = arith.constant 19 : index
    %190 = vector.load %arg7[%c0_92, %c19] : memref<2x49xf32, #tpu.memory_space<vmem>>, vector<2x1xf32>
    %191 = vector.broadcast %190 : vector<2x1xf32> to vector<2x640xf32>
    %192 = arith.mulf %191, %189 : vector<2x640xf32>
    %193 = arith.addf %188, %192 : vector<2x640xf32>
    %c0_93 = arith.constant 0 : index
    %c107 = arith.constant 107 : index
    %194 = vector.load %arg9[%c0_93, %c107] : memref<2x896xf32, #tpu.memory_space<vmem>>, vector<2x640xf32>
    %c0_94 = arith.constant 0 : index
    %c20 = arith.constant 20 : index
    %195 = vector.load %arg7[%c0_94, %c20] : memref<2x49xf32, #tpu.memory_space<vmem>>, vector<2x1xf32>
    %196 = vector.broadcast %195 : vector<2x1xf32> to vector<2x640xf32>
    %197 = arith.mulf %196, %194 : vector<2x640xf32>
    %198 = arith.addf %193, %197 : vector<2x640xf32>
    %c0_95 = arith.constant 0 : index
    %c125 = arith.constant 125 : index
    %199 = vector.load %arg9[%c0_95, %c125] : memref<2x896xf32, #tpu.memory_space<vmem>>, vector<2x640xf32>
    %c0_96 = arith.constant 0 : index
    %c21 = arith.constant 21 : index
    %200 = vector.load %arg7[%c0_96, %c21] : memref<2x49xf32, #tpu.memory_space<vmem>>, vector<2x1xf32>
    %201 = vector.broadcast %200 : vector<2x1xf32> to vector<2x640xf32>
    %202 = arith.mulf %201, %199 : vector<2x640xf32>
    %203 = arith.addf %198, %202 : vector<2x640xf32>
    %c0_97 = arith.constant 0 : index
    %c126 = arith.constant 126 : index
    %204 = vector.load %arg9[%c0_97, %c126] : memref<2x896xf32, #tpu.memory_space<vmem>>, vector<2x640xf32>
    %c0_98 = arith.constant 0 : index
    %c22 = arith.constant 22 : index
    %205 = vector.load %arg7[%c0_98, %c22] : memref<2x49xf32, #tpu.memory_space<vmem>>, vector<2x1xf32>
    %206 = vector.broadcast %205 : vector<2x1xf32> to vector<2x640xf32>
    %207 = arith.mulf %206, %204 : vector<2x640xf32>
    %208 = arith.addf %203, %207 : vector<2x640xf32>
    %c0_99 = arith.constant 0 : index
    %c127 = arith.constant 127 : index
    %209 = vector.load %arg9[%c0_99, %c127] : memref<2x896xf32, #tpu.memory_space<vmem>>, vector<2x640xf32>
    %c0_100 = arith.constant 0 : index
    %c23 = arith.constant 23 : index
    %210 = vector.load %arg7[%c0_100, %c23] : memref<2x49xf32, #tpu.memory_space<vmem>>, vector<2x1xf32>
    %211 = vector.broadcast %210 : vector<2x1xf32> to vector<2x640xf32>
    %212 = arith.mulf %211, %209 : vector<2x640xf32>
    %213 = arith.addf %208, %212 : vector<2x640xf32>
    %c0_101 = arith.constant 0 : index
    %c128_102 = arith.constant 128 : index
    %214 = vector.load %arg9[%c0_101, %c128_102] : memref<2x896xf32, #tpu.memory_space<vmem>>, vector<2x640xf32>
    %c0_103 = arith.constant 0 : index
    %c24_104 = arith.constant 24 : index
    %215 = vector.load %arg7[%c0_103, %c24_104] : memref<2x49xf32, #tpu.memory_space<vmem>>, vector<2x1xf32>
    %216 = vector.broadcast %215 : vector<2x1xf32> to vector<2x640xf32>
    %217 = arith.mulf %216, %214 : vector<2x640xf32>
    %218 = arith.addf %213, %217 : vector<2x640xf32>
    %c0_105 = arith.constant 0 : index
    %c129 = arith.constant 129 : index
    %219 = vector.load %arg9[%c0_105, %c129] : memref<2x896xf32, #tpu.memory_space<vmem>>, vector<2x640xf32>
    %c0_106 = arith.constant 0 : index
    %c25_107 = arith.constant 25 : index
    %220 = vector.load %arg7[%c0_106, %c25_107] : memref<2x49xf32, #tpu.memory_space<vmem>>, vector<2x1xf32>
    %221 = vector.broadcast %220 : vector<2x1xf32> to vector<2x640xf32>
    %222 = arith.mulf %221, %219 : vector<2x640xf32>
    %223 = arith.addf %218, %222 : vector<2x640xf32>
    %c0_108 = arith.constant 0 : index
    %c130 = arith.constant 130 : index
    %224 = vector.load %arg9[%c0_108, %c130] : memref<2x896xf32, #tpu.memory_space<vmem>>, vector<2x640xf32>
    %c0_109 = arith.constant 0 : index
    %c26_110 = arith.constant 26 : index
    %225 = vector.load %arg7[%c0_109, %c26_110] : memref<2x49xf32, #tpu.memory_space<vmem>>, vector<2x1xf32>
    %226 = vector.broadcast %225 : vector<2x1xf32> to vector<2x640xf32>
    %227 = arith.mulf %226, %224 : vector<2x640xf32>
    %228 = arith.addf %223, %227 : vector<2x640xf32>
    %c0_111 = arith.constant 0 : index
    %c131 = arith.constant 131 : index
    %229 = vector.load %arg9[%c0_111, %c131] : memref<2x896xf32, #tpu.memory_space<vmem>>, vector<2x640xf32>
    %c0_112 = arith.constant 0 : index
    %c27 = arith.constant 27 : index
    %230 = vector.load %arg7[%c0_112, %c27] : memref<2x49xf32, #tpu.memory_space<vmem>>, vector<2x1xf32>
    %231 = vector.broadcast %230 : vector<2x1xf32> to vector<2x640xf32>
    %232 = arith.mulf %231, %229 : vector<2x640xf32>
    %233 = arith.addf %228, %232 : vector<2x640xf32>
    %c0_113 = arith.constant 0 : index
    %c149 = arith.constant 149 : index
    %234 = vector.load %arg9[%c0_113, %c149] : memref<2x896xf32, #tpu.memory_space<vmem>>, vector<2x640xf32>
    %c0_114 = arith.constant 0 : index
    %c28 = arith.constant 28 : index
    %235 = vector.load %arg7[%c0_114, %c28] : memref<2x49xf32, #tpu.memory_space<vmem>>, vector<2x1xf32>
    %236 = vector.broadcast %235 : vector<2x1xf32> to vector<2x640xf32>
    %237 = arith.mulf %236, %234 : vector<2x640xf32>
    %238 = arith.addf %233, %237 : vector<2x640xf32>
    %c0_115 = arith.constant 0 : index
    %c150 = arith.constant 150 : index
    %239 = vector.load %arg9[%c0_115, %c150] : memref<2x896xf32, #tpu.memory_space<vmem>>, vector<2x640xf32>
    %c0_116 = arith.constant 0 : index
    %c29 = arith.constant 29 : index
    %240 = vector.load %arg7[%c0_116, %c29] : memref<2x49xf32, #tpu.memory_space<vmem>>, vector<2x1xf32>
    %241 = vector.broadcast %240 : vector<2x1xf32> to vector<2x640xf32>
    %242 = arith.mulf %241, %239 : vector<2x640xf32>
    %243 = arith.addf %238, %242 : vector<2x640xf32>
    %c0_117 = arith.constant 0 : index
    %c151 = arith.constant 151 : index
    %244 = vector.load %arg9[%c0_117, %c151] : memref<2x896xf32, #tpu.memory_space<vmem>>, vector<2x640xf32>
    %c0_118 = arith.constant 0 : index
    %c30 = arith.constant 30 : index
    %245 = vector.load %arg7[%c0_118, %c30] : memref<2x49xf32, #tpu.memory_space<vmem>>, vector<2x1xf32>
    %246 = vector.broadcast %245 : vector<2x1xf32> to vector<2x640xf32>
    %247 = arith.mulf %246, %244 : vector<2x640xf32>
    %248 = arith.addf %243, %247 : vector<2x640xf32>
    %c0_119 = arith.constant 0 : index
    %c152 = arith.constant 152 : index
    %249 = vector.load %arg9[%c0_119, %c152] : memref<2x896xf32, #tpu.memory_space<vmem>>, vector<2x640xf32>
    %c0_120 = arith.constant 0 : index
    %c31 = arith.constant 31 : index
    %250 = vector.load %arg7[%c0_120, %c31] : memref<2x49xf32, #tpu.memory_space<vmem>>, vector<2x1xf32>
    %251 = vector.broadcast %250 : vector<2x1xf32> to vector<2x640xf32>
    %252 = arith.mulf %251, %249 : vector<2x640xf32>
    %253 = arith.addf %248, %252 : vector<2x640xf32>
    %c0_121 = arith.constant 0 : index
    %c153 = arith.constant 153 : index
    %254 = vector.load %arg9[%c0_121, %c153] : memref<2x896xf32, #tpu.memory_space<vmem>>, vector<2x640xf32>
    %c0_122 = arith.constant 0 : index
    %c32 = arith.constant 32 : index
    %255 = vector.load %arg7[%c0_122, %c32] : memref<2x49xf32, #tpu.memory_space<vmem>>, vector<2x1xf32>
    %256 = vector.broadcast %255 : vector<2x1xf32> to vector<2x640xf32>
    %257 = arith.mulf %256, %254 : vector<2x640xf32>
    %258 = arith.addf %253, %257 : vector<2x640xf32>
    %c0_123 = arith.constant 0 : index
    %c154 = arith.constant 154 : index
    %259 = vector.load %arg9[%c0_123, %c154] : memref<2x896xf32, #tpu.memory_space<vmem>>, vector<2x640xf32>
    %c0_124 = arith.constant 0 : index
    %c33 = arith.constant 33 : index
    %260 = vector.load %arg7[%c0_124, %c33] : memref<2x49xf32, #tpu.memory_space<vmem>>, vector<2x1xf32>
    %261 = vector.broadcast %260 : vector<2x1xf32> to vector<2x640xf32>
    %262 = arith.mulf %261, %259 : vector<2x640xf32>
    %263 = arith.addf %258, %262 : vector<2x640xf32>
    %c0_125 = arith.constant 0 : index
    %c155 = arith.constant 155 : index
    %264 = vector.load %arg9[%c0_125, %c155] : memref<2x896xf32, #tpu.memory_space<vmem>>, vector<2x640xf32>
    %c0_126 = arith.constant 0 : index
    %c34 = arith.constant 34 : index
    %265 = vector.load %arg7[%c0_126, %c34] : memref<2x49xf32, #tpu.memory_space<vmem>>, vector<2x1xf32>
    %266 = vector.broadcast %265 : vector<2x1xf32> to vector<2x640xf32>
    %267 = arith.mulf %266, %264 : vector<2x640xf32>
    %268 = arith.addf %263, %267 : vector<2x640xf32>
    %c0_127 = arith.constant 0 : index
    %c173 = arith.constant 173 : index
    %269 = vector.load %arg9[%c0_127, %c173] : memref<2x896xf32, #tpu.memory_space<vmem>>, vector<2x640xf32>
    %c0_128 = arith.constant 0 : index
    %c35 = arith.constant 35 : index
    %270 = vector.load %arg7[%c0_128, %c35] : memref<2x49xf32, #tpu.memory_space<vmem>>, vector<2x1xf32>
    %271 = vector.broadcast %270 : vector<2x1xf32> to vector<2x640xf32>
    %272 = arith.mulf %271, %269 : vector<2x640xf32>
    %273 = arith.addf %268, %272 : vector<2x640xf32>
    %c0_129 = arith.constant 0 : index
    %c174 = arith.constant 174 : index
    %274 = vector.load %arg9[%c0_129, %c174] : memref<2x896xf32, #tpu.memory_space<vmem>>, vector<2x640xf32>
    %c0_130 = arith.constant 0 : index
    %c36 = arith.constant 36 : index
    %275 = vector.load %arg7[%c0_130, %c36] : memref<2x49xf32, #tpu.memory_space<vmem>>, vector<2x1xf32>
    %276 = vector.broadcast %275 : vector<2x1xf32> to vector<2x640xf32>
    %277 = arith.mulf %276, %274 : vector<2x640xf32>
    %278 = arith.addf %273, %277 : vector<2x640xf32>
    %c0_131 = arith.constant 0 : index
    %c175 = arith.constant 175 : index
    %279 = vector.load %arg9[%c0_131, %c175] : memref<2x896xf32, #tpu.memory_space<vmem>>, vector<2x640xf32>
    %c0_132 = arith.constant 0 : index
    %c37 = arith.constant 37 : index
    %280 = vector.load %arg7[%c0_132, %c37] : memref<2x49xf32, #tpu.memory_space<vmem>>, vector<2x1xf32>
    %281 = vector.broadcast %280 : vector<2x1xf32> to vector<2x640xf32>
    %282 = arith.mulf %281, %279 : vector<2x640xf32>
    %283 = arith.addf %278, %282 : vector<2x640xf32>
    %c0_133 = arith.constant 0 : index
    %c176 = arith.constant 176 : index
    %284 = vector.load %arg9[%c0_133, %c176] : memref<2x896xf32, #tpu.memory_space<vmem>>, vector<2x640xf32>
    %c0_134 = arith.constant 0 : index
    %c38 = arith.constant 38 : index
    %285 = vector.load %arg7[%c0_134, %c38] : memref<2x49xf32, #tpu.memory_space<vmem>>, vector<2x1xf32>
    %286 = vector.broadcast %285 : vector<2x1xf32> to vector<2x640xf32>
    %287 = arith.mulf %286, %284 : vector<2x640xf32>
    %288 = arith.addf %283, %287 : vector<2x640xf32>
    %c0_135 = arith.constant 0 : index
    %c177 = arith.constant 177 : index
    %289 = vector.load %arg9[%c0_135, %c177] : memref<2x896xf32, #tpu.memory_space<vmem>>, vector<2x640xf32>
    %c0_136 = arith.constant 0 : index
    %c39 = arith.constant 39 : index
    %290 = vector.load %arg7[%c0_136, %c39] : memref<2x49xf32, #tpu.memory_space<vmem>>, vector<2x1xf32>
    %291 = vector.broadcast %290 : vector<2x1xf32> to vector<2x640xf32>
    %292 = arith.mulf %291, %289 : vector<2x640xf32>
    %293 = arith.addf %288, %292 : vector<2x640xf32>
    %c0_137 = arith.constant 0 : index
    %c178 = arith.constant 178 : index
    %294 = vector.load %arg9[%c0_137, %c178] : memref<2x896xf32, #tpu.memory_space<vmem>>, vector<2x640xf32>
    %c0_138 = arith.constant 0 : index
    %c40 = arith.constant 40 : index
    %295 = vector.load %arg7[%c0_138, %c40] : memref<2x49xf32, #tpu.memory_space<vmem>>, vector<2x1xf32>
    %296 = vector.broadcast %295 : vector<2x1xf32> to vector<2x640xf32>
    %297 = arith.mulf %296, %294 : vector<2x640xf32>
    %298 = arith.addf %293, %297 : vector<2x640xf32>
    %c0_139 = arith.constant 0 : index
    %c179 = arith.constant 179 : index
    %299 = vector.load %arg9[%c0_139, %c179] : memref<2x896xf32, #tpu.memory_space<vmem>>, vector<2x640xf32>
    %c0_140 = arith.constant 0 : index
    %c41 = arith.constant 41 : index
    %300 = vector.load %arg7[%c0_140, %c41] : memref<2x49xf32, #tpu.memory_space<vmem>>, vector<2x1xf32>
    %301 = vector.broadcast %300 : vector<2x1xf32> to vector<2x640xf32>
    %302 = arith.mulf %301, %299 : vector<2x640xf32>
    %303 = arith.addf %298, %302 : vector<2x640xf32>
    %c0_141 = arith.constant 0 : index
    %c197 = arith.constant 197 : index
    %304 = vector.load %arg9[%c0_141, %c197] : memref<2x896xf32, #tpu.memory_space<vmem>>, vector<2x640xf32>
    %c0_142 = arith.constant 0 : index
    %c42 = arith.constant 42 : index
    %305 = vector.load %arg7[%c0_142, %c42] : memref<2x49xf32, #tpu.memory_space<vmem>>, vector<2x1xf32>
    %306 = vector.broadcast %305 : vector<2x1xf32> to vector<2x640xf32>
    %307 = arith.mulf %306, %304 : vector<2x640xf32>
    %308 = arith.addf %303, %307 : vector<2x640xf32>
    %c0_143 = arith.constant 0 : index
    %c198 = arith.constant 198 : index
    %309 = vector.load %arg9[%c0_143, %c198] : memref<2x896xf32, #tpu.memory_space<vmem>>, vector<2x640xf32>
    %c0_144 = arith.constant 0 : index
    %c43 = arith.constant 43 : index
    %310 = vector.load %arg7[%c0_144, %c43] : memref<2x49xf32, #tpu.memory_space<vmem>>, vector<2x1xf32>
    %311 = vector.broadcast %310 : vector<2x1xf32> to vector<2x640xf32>
    %312 = arith.mulf %311, %309 : vector<2x640xf32>
    %313 = arith.addf %308, %312 : vector<2x640xf32>
    %c0_145 = arith.constant 0 : index
    %c199 = arith.constant 199 : index
    %314 = vector.load %arg9[%c0_145, %c199] : memref<2x896xf32, #tpu.memory_space<vmem>>, vector<2x640xf32>
    %c0_146 = arith.constant 0 : index
    %c44 = arith.constant 44 : index
    %315 = vector.load %arg7[%c0_146, %c44] : memref<2x49xf32, #tpu.memory_space<vmem>>, vector<2x1xf32>
    %316 = vector.broadcast %315 : vector<2x1xf32> to vector<2x640xf32>
    %317 = arith.mulf %316, %314 : vector<2x640xf32>
    %318 = arith.addf %313, %317 : vector<2x640xf32>
    %c0_147 = arith.constant 0 : index
    %c200 = arith.constant 200 : index
    %319 = vector.load %arg9[%c0_147, %c200] : memref<2x896xf32, #tpu.memory_space<vmem>>, vector<2x640xf32>
    %c0_148 = arith.constant 0 : index
    %c45 = arith.constant 45 : index
    %320 = vector.load %arg7[%c0_148, %c45] : memref<2x49xf32, #tpu.memory_space<vmem>>, vector<2x1xf32>
    %321 = vector.broadcast %320 : vector<2x1xf32> to vector<2x640xf32>
    %322 = arith.mulf %321, %319 : vector<2x640xf32>
    %323 = arith.addf %318, %322 : vector<2x640xf32>
    %c0_149 = arith.constant 0 : index
    %c201 = arith.constant 201 : index
    %324 = vector.load %arg9[%c0_149, %c201] : memref<2x896xf32, #tpu.memory_space<vmem>>, vector<2x640xf32>
    %c0_150 = arith.constant 0 : index
    %c46 = arith.constant 46 : index
    %325 = vector.load %arg7[%c0_150, %c46] : memref<2x49xf32, #tpu.memory_space<vmem>>, vector<2x1xf32>
    %326 = vector.broadcast %325 : vector<2x1xf32> to vector<2x640xf32>
    %327 = arith.mulf %326, %324 : vector<2x640xf32>
    %328 = arith.addf %323, %327 : vector<2x640xf32>
    %c0_151 = arith.constant 0 : index
    %c202 = arith.constant 202 : index
    %329 = vector.load %arg9[%c0_151, %c202] : memref<2x896xf32, #tpu.memory_space<vmem>>, vector<2x640xf32>
    %c0_152 = arith.constant 0 : index
    %c47 = arith.constant 47 : index
    %330 = vector.load %arg7[%c0_152, %c47] : memref<2x49xf32, #tpu.memory_space<vmem>>, vector<2x1xf32>
    %331 = vector.broadcast %330 : vector<2x1xf32> to vector<2x640xf32>
    %332 = arith.mulf %331, %329 : vector<2x640xf32>
    %333 = arith.addf %328, %332 : vector<2x640xf32>
    %c0_153 = arith.constant 0 : index
    %c203 = arith.constant 203 : index
    %334 = vector.load %arg9[%c0_153, %c203] : memref<2x896xf32, #tpu.memory_space<vmem>>, vector<2x640xf32>
    %c0_154 = arith.constant 0 : index
    %c48_155 = arith.constant 48 : index
    %335 = vector.load %arg7[%c0_154, %c48_155] : memref<2x49xf32, #tpu.memory_space<vmem>>, vector<2x1xf32>
    %336 = vector.broadcast %335 : vector<2x1xf32> to vector<2x640xf32>
    %337 = arith.mulf %336, %334 : vector<2x640xf32>
    %338 = arith.addf %333, %337 : vector<2x640xf32>
    %339 = vector.extract_strided_slice %338 {offsets = [0, 0], sizes = [1, 640], strides = [1, 1]} : vector<2x640xf32> to vector<1x640xf32>
    %340 = vector.extract_strided_slice %338 {offsets = [1, 0], sizes = [1, 640], strides = [1, 1]} : vector<2x640xf32> to vector<1x640xf32>
    %341 = arith.addf %339, %340 : vector<1x640xf32>
    %342 = arith.negf %341 : vector<1x640xf32>
    %343 = math.exp %342 : vector<1x640xf32>
    %cst_156 = arith.constant 1.000000e+00 : f32
    %344 = vector.broadcast %cst_156 : f32 to vector<1x640xf32>
    %345 = arith.addf %344, %343 : vector<1x640xf32>
    %346 = arith.divf %344, %345 : vector<1x640xf32>
    %347 = vector.broadcast %346 : vector<1x640xf32> to vector<8x640xf32>
    %348 = arith.mulf %81, %347 : vector<8x640xf32>
    %c0_157 = arith.constant 0 : index
    %c0_158 = arith.constant 0 : index
    %c0_159 = arith.constant 0 : index
    %349 = vector.load %arg8[%c0_157, %c0_158, %c0_159] : memref<1x8x640xf32, #tpu.memory_space<vmem>>, vector<1x8x640xf32>
    %350 = vector.shape_cast %349 : vector<1x8x640xf32> to vector<8x640xf32>
    %351 = vector.shape_cast %348 : vector<8x640xf32> to vector<1x8x640xf32>
    tpu.vector_store %arg8[%c0_157, %c0_158, %c0_159], %351 {strides = array<i32>} : memref<1x8x640xf32, #tpu.memory_space<vmem>>, vector<1x8x640xf32>,
    return
  }
  func.func @transform_0(%arg0: i32) -> (i32, i32, i32) {
    %c0_i32 = arith.constant 0 : i32
    %c0_i32_0 = arith.constant 0 : i32
    %c0_i32_1 = arith.constant 0 : i32
    return %arg0, %c0_i32, %c0_i32_0 : i32, i32, i32
  }
  func.func @transform_1(%arg0: i32) -> (i32, i32) {
    %c0_i32 = arith.constant 0 : i32
    %c0_i32_0 = arith.constant 0 : i32
    %c0_i32_1 = arith.constant 0 : i32
    return %c0_i32, %c0_i32_0 : i32, i32
  }
  func.func @transform_2(%arg0: i32) -> (i32, i32) {
    %c0_i32 = arith.constant 0 : i32
    %c0_i32_0 = arith.constant 0 : i32
    %c0_i32_1 = arith.constant 0 : i32
    return %c0_i32, %c0_i32_0 : i32, i32
  }
  func.func @transform_3(%arg0: i32) -> (i32, i32) {
    %c0_i32 = arith.constant 0 : i32
    %c0_i32_0 = arith.constant 0 : i32
    %c0_i32_1 = arith.constant 0 : i32
    return %c0_i32, %c0_i32_0 : i32, i32
  }
  func.func @transform_4(%arg0: i32) -> (i32, i32) {
    %c0_i32 = arith.constant 0 : i32
    %c0_i32_0 = arith.constant 0 : i32
    %c0_i32_1 = arith.constant 0 : i32
    return %c0_i32, %c0_i32_0 : i32, i32
  }
  func.func @transform_5(%arg0: i32) -> (i32, i32) {
    %c0_i32 = arith.constant 0 : i32
    %c0_i32_0 = arith.constant 0 : i32
    %c0_i32_1 = arith.constant 0 : i32
    return %c0_i32, %c0_i32_0 : i32, i32
  }
  func.func @transform_6(%arg0: i32) -> (i32, i32) {
    %c0_i32 = arith.constant 0 : i32
    %c0_i32_0 = arith.constant 0 : i32
    %c0_i32_1 = arith.constant 0 : i32
    return %c0_i32, %c0_i32_0 : i32, i32
  }
  func.func @transform_7(%arg0: i32) -> (i32, i32, i32) {
    %c0_i32 = arith.constant 0 : i32
    %c0_i32_0 = arith.constant 0 : i32
    %c0_i32_1 = arith.constant 0 : i32
    return %arg0, %c0_i32, %c0_i32_0 : i32, i32, i32
  }
}

</mosaic_0001>

<llo_original>
// kernel: upblock_forward.1
$region0: #{upblock_forward.1}
  #allocation0 [shape = 'u32[]', space=smem, size = 0x4, offset = 0x4, fixed_abs, tag = 'smem constant byte address 0x4 - core index']
  #allocation1 [shape = 'u32[144,128]{1,0:T(1,128)}', space=vmem, size = 0x12000, scoped, tag = 'internal scratch']
  #allocation2 [shape = 'f32[2,896]{1,0:T(2,128)}', space=vmem, size = 0x1c00, scoped, tag = 'scratch operand']
  %s0 = inlined_call_operand.vmem [shape: bf16[2,4,768], index: 0, kind: input, shape index: {}]
  %s1 = inlined_call_operand.vmem [shape: bf16[8,36], index: 1, kind: input, shape index: {}]
  %s2 = inlined_call_operand.vmem [shape: f32[4,8], index: 2, kind: input, shape index: {}]
  %s3 = inlined_call_operand.vmem [shape: f32[8,4], index: 3, kind: input, shape index: {}]
  %s4 = inlined_call_operand.vmem [shape: f32[8,3], index: 4, kind: input, shape index: {}]
  %s5 = inlined_call_operand.vmem [shape: f32[1,640], index: 5, kind: input, shape index: {}]
  %s6 = inlined_call_operand.vmem [shape: f32[2,49], index: 6, kind: input, shape index: {}]
  %s7 = inlined_call_operand.vmem [shape: f32[2,8,640], index: 7, kind: output, shape index: {}]
  %s8 = sld [smem:[#allocation0]]
  $region65: #{upblock_forward.1} parent=0
    _
  %s10 = ssub.s32 1, %s8
  %s11 = scalar_select 0, %s10, %s8
  loop: start=0, step=1, limit=4
  $region2: #{upblock_forward.1} parent=0 // loop_pre_header
    _
  $region3: #{upblock_forward.1} parent=0 // loop_header
    %s13 = sphi 0, %s17
    %p14 = scmp.ge.s32.totalorder %s13, 4
    %s23 = sphi 0, %s25
    %s26 = sphi 0, %s23
    %s27 = sphi 0, %s26
    %s43 = sphi 0, %s27
    %s47 = sphi 0, %s47
    %s49 = sphi 0, %s47
    %s50 = sphi 0, %s49
    %s64 = sphi 0, %s50
    %s68 = sphi 0, %s68
    %s70 = sphi 0, %s68
    %s71 = sphi 0, %s70
    %s85 = sphi 0, %s71
    %s89 = sphi 0, %s89
    %s91 = sphi 0, %s89
    %s92 = sphi 0, %s91
    %s106 = sphi 0, %s92
    %s110 = sphi 0, %s110
    %s112 = sphi 0, %s110
    %s113 = sphi 0, %s112
    %s127 = sphi 0, %s113
    %s131 = sphi 0, %s131
    %s133 = sphi 0, %s131
    %s134 = sphi 0, %s133
    %s148 = sphi 0, %s134
    %s152 = sphi 0, %s152
    %s154 = sphi 0, %s152
    %s155 = sphi 0, %s154
    %s169 = sphi 0, %s155
    %s175 = sphi 0, %s177
    %s178 = sphi 0, %s175
    %s179 = sphi 0, %s178
    %s195 = sphi 0, %s179
  $region4: #{upblock_forward.1} parent=0 // loop_header_branch
    %16 = sbr.rel (%p14) target = $region8
  $region5: #{upblock_forward.1} parent=0 // loop_body
    %s18 = ssub.s32 %s13, 1
    %s19 = ssub.s32 %s13, 2
    %s20 = sadd.s32 %s13, 1
    %s21 = ssub.s32 %s13, %s20
    %p22 = scmp.eq.s32.totalorder %s21, 0
    %s24 = sadd.s32 %s23, 1
    %s25 = scalar_select %p22, %s23, %s24
    %p28 = pneg %p22
    %p29 = scmp.eq.s32.totalorder %s13, 1
    %p30 = por %p28, %p29
    %p31 = scmp.ne.s32.totalorder %s23, %s26
    %p32 = scmp.eq.s32.totalorder %s13, 0
    %p33 = por %p31, %p32
    %p34 = scmp.ne.s32.totalorder %s23, %s26
    %p35 = scmp.eq.s32.totalorder %s18, 1
    %p36 = por %p34, %p35
    %p37 = scmp.ne.s32.totalorder %s26, %s27
    %p38 = scmp.eq.s32.totalorder %s18, 0
    %p39 = por %p37, %p38
    %p40 = scmp.ne.s32.totalorder %s26, %s27
    %p41 = scmp.eq.s32.totalorder %s19, 1
    %p42 = por %p40, %p41
    %p44 = scmp.ne.s32.totalorder %s27, %s43
    %p45 = scmp.eq.s32.totalorder %s19, 0
    %p46 = por %p44, %p45
    %s48 = sadd.s32 %s47, 1
    %p51 = scmp.eq.s32.totalorder %s13, 1
    %p52 = scmp.ne.s32.totalorder %s47, %s49
    %p53 = scmp.eq.s32.totalorder %s13, 0
    %p54 = por %p52, %p53
    %p55 = scmp.ne.s32.totalorder %s47, %s49
    %p56 = scmp.eq.s32.totalorder %s18, 1
    %p57 = por %p55, %p56
    %p58 = scmp.ne.s32.totalorder %s49, %s50
    %p59 = scmp.eq.s32.totalorder %s18, 0
    %p60 = por %p58, %p59
    %p61 = scmp.ne.s32.totalorder %s49, %s50
    %p62 = scmp.eq.s32.totalorder %s19, 1
    %p63 = por %p61, %p62
    %p65 = scmp.ne.s32.totalorder %s50, %s64
    %p66 = scmp.eq.s32.totalorder %s19, 0
    %p67 = por %p65, %p66
    %s69 = sadd.s32 %s68, 1
    %p72 = scmp.eq.s32.totalorder %s13, 1
    %p73 = scmp.ne.s32.totalorder %s68, %s70
    %p74 = scmp.eq.s32.totalorder %s13, 0
    %p75 = por %p73, %p74
    %p76 = scmp.ne.s32.totalorder %s68, %s70
    %p77 = scmp.eq.s32.totalorder %s18, 1
    %p78 = por %p76, %p77
    %p79 = scmp.ne.s32.totalorder %s70, %s71
    %p80 = scmp.eq.s32.totalorder %s18, 0
    %p81 = por %p79, %p80
    %p82 = scmp.ne.s32.totalorder %s70, %s71
    %p83 = scmp.eq.s32.totalorder %s19, 1
    %p84 = por %p82, %p83
    %p86 = scmp.ne.s32.totalorder %s71, %s85
    %p87 = scmp.eq.s32.totalorder %s19, 0
    %p88 = por %p86, %p87
    %s90 = sadd.s32 %s89, 1
    %p93 = scmp.eq.s32.totalorder %s13, 1
    %p94 = scmp.ne.s32.totalorder %s89, %s91
    %p95 = scmp.eq.s32.totalorder %s13, 0
    %p96 = por %p94, %p95
    %p97 = scmp.ne.s32.totalorder %s89, %s91
    %p98 = scmp.eq.s32.totalorder %s18, 1
    %p99 = por %p97, %p98
    %p100 = scmp.ne.s32.totalorder %s91, %s92
    %p101 = scmp.eq.s32.totalorder %s18, 0
    %p102 = por %p100, %p101
    %p103 = scmp.ne.s32.totalorder %s91, %s92
    %p104 = scmp.eq.s32.totalorder %s19, 1
    %p105 = por %p103, %p104
    %p107 = scmp.ne.s32.totalorder %s92, %s106
    %p108 = scmp.eq.s32.totalorder %s19, 0
    %p109 = por %p107, %p108
    %s111 = sadd.s32 %s110, 1
    %p114 = scmp.eq.s32.totalorder %s13, 1
    %p115 = scmp.ne.s32.totalorder %s110, %s112
    %p116 = scmp.eq.s32.totalorder %s13, 0
    %p117 = por %p115, %p116
    %p118 = scmp.ne.s32.totalorder %s110, %s112
    %p119 = scmp.eq.s32.totalorder %s18, 1
    %p120 = por %p118, %p119
    %p121 = scmp.ne.s32.totalorder %s112, %s113
    %p122 = scmp.eq.s32.totalorder %s18, 0
    %p123 = por %p121, %p122
    %p124 = scmp.ne.s32.totalorder %s112, %s113
    %p125 = scmp.eq.s32.totalorder %s19, 1
    %p126 = por %p124, %p125
    %p128 = scmp.ne.s32.totalorder %s113, %s127
    %p129 = scmp.eq.s32.totalorder %s19, 0
    %p130 = por %p128, %p129
    %s132 = sadd.s32 %s131, 1
    %p135 = scmp.eq.s32.totalorder %s13, 1
    %p136 = scmp.ne.s32.totalorder %s131, %s133
    %p137 = scmp.eq.s32.totalorder %s13, 0
    %p138 = por %p136, %p137
    %p139 = scmp.ne.s32.totalorder %s131, %s133
    %p140 = scmp.eq.s32.totalorder %s18, 1
    %p141 = por %p139, %p140
    %p142 = scmp.ne.s32.totalorder %s133, %s134
    %p143 = scmp.eq.s32.totalorder %s18, 0
    %p144 = por %p142, %p143
    %p145 = scmp.ne.s32.totalorder %s133, %s134
    %p146 = scmp.eq.s32.totalorder %s19, 1
    %p147 = por %p145, %p146
    %p149 = scmp.ne.s32.totalorder %s134, %s148
    %p150 = scmp.eq.s32.totalorder %s19, 0
    %p151 = por %p149, %p150
    %s153 = sadd.s32 %s152, 1
    %p156 = scmp.eq.s32.totalorder %s13, 1
    %p157 = scmp.ne.s32.totalorder %s152, %s154
    %p158 = scmp.eq.s32.totalorder %s13, 0
    %p159 = por %p157, %p158
    %p160 = scmp.ne.s32.totalorder %s152, %s154
    %p161 = scmp.eq.s32.totalorder %s18, 1
    %p162 = por %p160, %p161
    %p163 = scmp.ne.s32.totalorder %s154, %s155
    %p164 = scmp.eq.s32.totalorder %s18, 0
    %p165 = por %p163, %p164
    %p166 = scmp.ne.s32.totalorder %s154, %s155
    %p167 = scmp.eq.s32.totalorder %s19, 1
    %p168 = por %p166, %p167
    %p170 = scmp.ne.s32.totalorder %s155, %s169
    %p171 = scmp.eq.s32.totalorder %s19, 0
    %p172 = por %p170, %p171
    %s173 = ssub.s32 %s13, %s20
    %p174 = scmp.eq.s32.totalorder %s173, 0
    %s176 = sadd.s32 %s175, 1
    %s177 = scalar_select %p174, %s175, %s176
    %p180 = pneg %p174
    %p181 = scmp.eq.s32.totalorder %s13, 1
    %p182 = por %p180, %p181
    %p183 = scmp.ne.s32.totalorder %s175, %s178
    %p184 = scmp.eq.s32.totalorder %s13, 0
    %p185 = por %p183, %p184
    %p186 = scmp.ne.s32.totalorder %s175, %s178
    %p187 = scmp.eq.s32.totalorder %s18, 1
    %p188 = por %p186, %p187
    %p189 = scmp.ne.s32.totalorder %s178, %s179
    %p190 = scmp.eq.s32.totalorder %s18, 0
    %p191 = por %p189, %p190
    %p192 = scmp.ne.s32.totalorder %s178, %s179
    %p193 = scmp.eq.s32.totalorder %s19, 1
    %p194 = por %p192, %p193
    %p196 = scmp.ne.s32.totalorder %s179, %s195
    %p197 = scmp.eq.s32.totalorder %s19, 0
    %p198 = por %p196, %p197
    %p199 = scmp.le.s32.totalorder 1, %s13
    %p200 = scmp.lt.s32.totalorder %s13, 3
    %p201 = pnand %p199, %p200
    %p202 = pneg %p201
    // Predicated region
    $region9: #{upblock_forward.1} parent=5 // pred_check
      _
    $region10: #{upblock_forward.1} parent=5 // pred_check_branch
      %204 = sbr.rel (%p201) target = $region12
    $region11: #{upblock_forward.1} parent=5 // pred_region
      %s205 = ssub.s32 %s13, 1
      // Predicated region
      $region13: #{upblock_forward.1} parent=11 // pred_check
        %p206 = pneg %p60
      $region14: #{upblock_forward.1} parent=11 // pred_check_branch
        %208 = sbr.rel (%p206) target = $region16
      $region15: #{upblock_forward.1} parent=11 // pred_region
        _
      $region16: #{upblock_forward.1} parent=11 // pred_fallthru
        _
      // Predicated region
      $region17: #{upblock_forward.1} parent=11 // pred_check
        %p209 = pneg %p81
      $region18: #{upblock_forward.1} parent=11 // pred_check_branch
        %211 = sbr.rel (%p209) target = $region20
      $region19: #{upblock_forward.1} parent=11 // pred_region
        _
      $region20: #{upblock_forward.1} parent=11 // pred_fallthru
        _
      // Predicated region
      $region21: #{upblock_forward.1} parent=11 // pred_check
        %p212 = pneg %p102
      $region22: #{upblock_forward.1} parent=11 // pred_check_branch
        %214 = sbr.rel (%p212) target = $region24
      $region23: #{upblock_forward.1} parent=11 // pred_region
        _
      $region24: #{upblock_forward.1} parent=11 // pred_fallthru
        _
      // Predicated region
      $region25: #{upblock_forward.1} parent=11 // pred_check
        %p215 = pneg %p123
      $region26: #{upblock_forward.1} parent=11 // pred_check_branch
        %217 = sbr.rel (%p215) target = $region28
      $region27: #{upblock_forward.1} parent=11 // pred_region
        _
      $region28: #{upblock_forward.1} parent=11 // pred_fallthru
        _
      // Predicated region
      $region29: #{upblock_forward.1} parent=11 // pred_check
        %p218 = pneg %p144
      $region30: #{upblock_forward.1} parent=11 // pred_check_branch
        %220 = sbr.rel (%p218) target = $region32
      $region31: #{upblock_forward.1} parent=11 // pred_region
        _
      $region32: #{upblock_forward.1} parent=11 // pred_fallthru
        _
      // Predicated region
      $region33: #{upblock_forward.1} parent=11 // pred_check
        %p221 = pneg %p165
      $region34: #{upblock_forward.1} parent=11 // pred_check_branch
        %223 = sbr.rel (%p221) target = $region36
      $region35: #{upblock_forward.1} parent=11 // pred_region
        _
      $region36: #{upblock_forward.1} parent=11 // pred_fallthru
        _
    $region12: #{upblock_forward.1} parent=5 // pred_fallthru
      _
    %p224 = scmp.lt.s32.totalorder %s13, 2
    // Predicated region
    $region37: #{upblock_forward.1} parent=5 // pred_check
      %p225 = pneg %p224
    $region38: #{upblock_forward.1} parent=5 // pred_check_branch
      %227 = sbr.rel (%p225) target = $region40
    $region39: #{upblock_forward.1} parent=5 // pred_region
      // Predicated region
      $region41: #{upblock_forward.1} parent=39 // pred_check
        %p228 = pneg %p33
      $region42: #{upblock_forward.1} parent=39 // pred_check_branch
        %230 = sbr.rel (%p228) target = $region44
      $region43: #{upblock_forward.1} parent=39 // pred_region
        %p231 = scmp.lt.s32.totalorder %s13, 1
        %s232 = scalar_select %p231, %s13, 1
        %s233 = smul.addr %s232, 6
        %s234 = smul.addr %s233, 2
        %s235 = scalar_lea.vmem %s0, %s234
      $region44: #{upblock_forward.1} parent=39 // pred_fallthru
        _
    $region40: #{upblock_forward.1} parent=5 // pred_fallthru
      _
    %p236 = scmp.le.s32.totalorder 1, %s13
    %p237 = scmp.lt.s32.totalorder %s13, 3
    %p238 = pnand %p236, %p237
    %p239 = pneg %p238
    // Predicated region
    $region45: #{upblock_forward.1} parent=5 // pred_check
      _
    $region46: #{upblock_forward.1} parent=5 // pred_check_branch
      %241 = sbr.rel (%p238) target = $region48
    $region47: #{upblock_forward.1} parent=5 // pred_region
      %s242 = ssub.s32 %s13, 1
      %p243 = scmp.lt.s32.totalorder %s18, 1
      %s244 = scalar_select %p243, %s18, 1
      %s245 = smul.addr %s244, 6
      %s246 = smul.addr %s245, 2
      %s247 = scalar_lea.vmem %s0, %s246
      %p248 = pneg %p39
      %p249 = pneg %p36
      %p250 = pneg %p60
      %p251 = pneg %p57
      %p252 = pneg %p81
      %p253 = pneg %p78
      %p254 = pneg %p102
      %p255 = pneg %p99
      %p256 = pneg %p123
      %p257 = pneg %p120
      %p258 = pneg %p144
      %p259 = pneg %p141
      %p260 = pneg %p165
      %p261 = pneg %p162
      %p262 = pneg %p191
      %p263 = pneg %p188
      %p264 = scmp.lt.s32.totalorder %s18, 1
      %s265 = scalar_select %p264, %s18, 1
      %s266 = smul.addr %s265, 5
      %s267 = smul.addr %s266, 8
      %s268 = scalar_lea.vmem %s7, %s267
      %p269 = scmp.lt.s32.totalorder %s18, 1
      %s270 = scalar_select %p269, %s18, 1
      %s271 = smul.addr %s270, 6
      %s272 = smul.addr %s271, 2
      %s273 = scalar_lea.vmem %s0, %s272
      %p274 = scmp.lt.s32.totalorder %s18, 1
      %s275 = scalar_select %p274, %s18, 1
      %s276 = smul.addr %s275, 5
      %s277 = smul.addr %s276, 8
      %s278 = scalar_lea.vmem %s7, %s277
      %v280 = vld [vmem:[%s5] sm:$0x1f]
      %vm281 = vcmp.gt.f32.partialorder %v280, 0.5
      %v282 = vld [vmem:[%s4] sm:$0xff]
      %v283 = vld [vmem:[%s4] sm:$0xf]
      %v284 = vld [vmem:[%s273] sm:$0xff]
      %v285 = vld [vmem:[%s273 + $0x8] sm:$0x3]
      %v286 = vunpack.c.l.bf16 %v284
      %v287 = vunpack.c.h.bf16 %v284
      %v288 = vunpack.c.l.bf16 %v285
      %v289 = vld [vmem:[%s273] sm:$0xff]
      %v290 = vld [vmem:[%s273 + $0x8] sm:$0xf]
      %v291 = vunpack.c.l.bf16 %v289
      %v292 = vunpack.c.h.bf16 %v289
      %v293 = vunpack.c.l.bf16 %v290
      %v296 = vcombine.high %v286, %v286
      %v297 = vcombine.high %v287, %v287
      %v303 = vcombine.low %v291, %v291
      %v304 = vcombine.low %v292, %v292
      %v305 = vcombine.low %v293, %v293
      %306 = vrot.lane.b32.xlu0 %v303, 127
      %v307 = vpop.permute.xlu0 %306
      %308 = vrot.lane.b32.xlu0 %v291, 127
      %v309 = vpop.permute.xlu0 %308
      %310 = vrot.lane.b32.xlu0 %v304, 127
      %v311 = vpop.permute.xlu0 %310
      %312 = vrot.lane.b32.xlu0 %v292, 127
      %v313 = vpop.permute.xlu0 %312
      %314 = vrot.lane.b32.xlu0 %v305, 127
      %v315 = vpop.permute.xlu0 %314
      %316 = vrot.lane.b32.xlu0 %v293, 127
      %v317 = vpop.permute.xlu0 %316
      %vm318 = vcmask 1039360
      %v319 = vsel %vm318, %v307, %v309
      %v320 = vsel %vm318, %v309, %v311
      %v321 = vsel %vm318, %v311, %v313
      %v322 = vsel %vm318, %v313, %v315
      %v323 = vsel %vm318, %v315, %v317
      %v329 = vcombine.high %v291, %v291
      %v330 = vcombine.high %v292, %v292
      %v331 = vcombine.high %v293, %v293
      %332 = vrot.lane.b32.xlu0 %v291, 126
      %v333 = vpop.permute.xlu0 %332
      %334 = vrot.lane.b32.xlu0 %v329, 126
      %v335 = vpop.permute.xlu0 %334
      %336 = vrot.lane.b32.xlu0 %v292, 126
      %v337 = vpop.permute.xlu0 %336
      %338 = vrot.lane.b32.xlu0 %v330, 126
      %v339 = vpop.permute.xlu0 %338
      %340 = vrot.lane.b32.xlu0 %v293, 126
      %v341 = vpop.permute.xlu0 %340
      %342 = vrot.lane.b32.xlu0 %v331, 126
      %v343 = vpop.permute.xlu0 %342
      %vm344 = vcmask 1031168
      %v345 = vsel %vm344, %v333, %v335
      %v346 = vsel %vm344, %v335, %v337
      %v347 = vsel %vm344, %v337, %v339
      %v348 = vsel %vm344, %v339, %v341
      %v349 = vsel %vm344, %v341, %v343
      %355 = vrot.lane.b32.xlu0 %v303, 104
      %v356 = vpop.permute.xlu0 %355
      %357 = vrot.lane.b32.xlu0 %v291, 104
      %v358 = vpop.permute.xlu0 %357
      %359 = vrot.lane.b32.xlu0 %v304, 104
      %v360 = vpop.permute.xlu0 %359
      %361 = vrot.lane.b32.xlu0 %v292, 104
      %v362 = vpop.permute.xlu0 %361
      %363 = vrot.lane.b32.xlu0 %v305, 104
      %v364 = vpop.permute.xlu0 %363
      %365 = vrot.lane.b32.xlu0 %v293, 104
      %v366 = vpop.permute.xlu0 %365
      %vm367 = vcmask 850944
      %v368 = vsel %vm367, %v356, %v358
      %v369 = vsel %vm367, %v358, %v360
      %v370 = vsel %vm367, %v360, %v362
      %v371 = vsel %vm367, %v362, %v364
      %v372 = vsel %vm367, %v364, %v366
      %378 = vrot.lane.b32.xlu0 %v291, 103
      %v379 = vpop.permute.xlu0 %378
      %380 = vrot.lane.b32.xlu0 %v329, 103
      %v381 = vpop.permute.xlu0 %380
      %382 = vrot.lane.b32.xlu0 %v292, 103
      %v383 = vpop.permute.xlu0 %382
      %384 = vrot.lane.b32.xlu0 %v330, 103
      %v385 = vpop.permute.xlu0 %384
      %386 = vrot.lane.b32.xlu0 %v293, 103
      %v387 = vpop.permute.xlu0 %386
      %388 = vrot.lane.b32.xlu0 %v331, 103
      %v389 = vpop.permute.xlu0 %388
      %vm390 = vcmask 842752
      %v391 = vsel %vm390, %v379, %v381
      %v392 = vsel %vm390, %v381, %v383
      %v393 = vsel %vm390, %v383, %v385
      %v394 = vsel %vm390, %v385, %v387
      %v395 = vsel %vm390, %v387, %v389
      %401 = vrot.lane.b32.xlu0 %v303, 102
      %v402 = vpop.permute.xlu0 %401
      %403 = vrot.lane.b32.xlu0 %v291, 102
      %v404 = vpop.permute.xlu0 %403
      %405 = vrot.lane.b32.xlu0 %v304, 102
      %v406 = vpop.permute.xlu0 %405
      %407 = vrot.lane.b32.xlu0 %v292, 102
      %v408 = vpop.permute.xlu0 %407
      %409 = vrot.lane.b32.xlu0 %v305, 102
      %v410 = vpop.permute.xlu0 %409
      %411 = vrot.lane.b32.xlu0 %v293, 102
      %v412 = vpop.permute.xlu0 %411
      %vm413 = vcmask 834560
      %v414 = vsel %vm413, %v402, %v404
      %v415 = vsel %vm413, %v404, %v406
      %v416 = vsel %vm413, %v406, %v408
      %v417 = vsel %vm413, %v408, %v410
      %v418 = vsel %vm413, %v410, %v412
      %424 = vrot.lane.b32.xlu0 %v291, 80
      %v425 = vpop.permute.xlu0 %424
      %426 = vrot.lane.b32.xlu0 %v329, 80
      %v427 = vpop.permute.xlu0 %426
      %428 = vrot.lane.b32.xlu0 %v292, 80
      %v429 = vpop.permute.xlu0 %428
      %430 = vrot.lane.b32.xlu0 %v330, 80
      %v431 = vpop.permute.xlu0 %430
      %432 = vrot.lane.b32.xlu0 %v293, 80
      %v433 = vpop.permute.xlu0 %432
      %434 = vrot.lane.b32.xlu0 %v331, 80
      %v435 = vpop.permute.xlu0 %434
      %vm436 = vcmask 654336
      %v437 = vsel %vm436, %v425, %v427
      %v438 = vsel %vm436, %v427, %v429
      %v439 = vsel %vm436, %v429, %v431
      %v440 = vsel %vm436, %v431, %v433
      %v441 = vsel %vm436, %v433, %v435
      %447 = vrot.lane.b32.xlu0 %v303, 79
      %v448 = vpop.permute.xlu0 %447
      %449 = vrot.lane.b32.xlu0 %v291, 79
      %v450 = vpop.permute.xlu0 %449
      %451 = vrot.lane.b32.xlu0 %v304, 79
      %v452 = vpop.permute.xlu0 %451
      %453 = vrot.lane.b32.xlu0 %v292, 79
      %v454 = vpop.permute.xlu0 %453
      %455 = vrot.lane.b32.xlu0 %v305, 79
      %v456 = vpop.permute.xlu0 %455
      %457 = vrot.lane.b32.xlu0 %v293, 79
      %v458 = vpop.permute.xlu0 %457
      %vm459 = vcmask 646144
      %v460 = vsel %vm459, %v448, %v450
      %v461 = vsel %vm459, %v450, %v452
      %v462 = vsel %vm459, %v452, %v454
      %v463 = vsel %vm459, %v454, %v456
      %v464 = vsel %vm459, %v456, %v458
      %470 = vrot.lane.b32.xlu0 %v291, 78
      %v471 = vpop.permute.xlu0 %470
      %472 = vrot.lane.b32.xlu0 %v329, 78
      %v473 = vpop.permute.xlu0 %472
      %474 = vrot.lane.b32.xlu0 %v292, 78
      %v475 = vpop.permute.xlu0 %474
      %476 = vrot.lane.b32.xlu0 %v330, 78
      %v477 = vpop.permute.xlu0 %476
      %478 = vrot.lane.b32.xlu0 %v293, 78
      %v479 = vpop.permute.xlu0 %478
      %480 = vrot.lane.b32.xlu0 %v331, 78
      %v481 = vpop.permute.xlu0 %480
      %vm482 = vcmask 637952
      %v483 = vsel %vm482, %v471, %v473
      %v484 = vsel %vm482, %v473, %v475
      %v485 = vsel %vm482, %v475, %v477
      %v486 = vsel %vm482, %v477, %v479
      %v487 = vsel %vm482, %v479, %v481
      %vm493 = vcmask 1043456
      %v494 = vsel %vm493, %v286, %v319
      %v495 = vsel %vm493, %v296, %v320
      %v496 = vsel %vm493, %v287, %v321
      %v497 = vsel %vm493, %v297, %v322
      %v498 = vsel %vm493, %v288, %v323
      %v499 = vsel %vm493, %v345, %v368
      %v500 = vsel %vm493, %v346, %v369
      %v501 = vsel %vm493, %v347, %v370
      %v502 = vsel %vm493, %v348, %v371
      %v503 = vsel %vm493, %v349, %v372
      %v504 = vsel %vm493, %v391, %v414
      %v505 = vsel %vm493, %v392, %v415
      %v506 = vsel %vm493, %v393, %v416
      %v507 = vsel %vm493, %v394, %v417
      %v508 = vsel %vm493, %v395, %v418
      %v509 = vsel %vm493, %v437, %v460
      %v510 = vsel %vm493, %v438, %v461
      %v511 = vsel %vm493, %v439, %v462
      %v512 = vsel %vm493, %v440, %v463
      %v513 = vsel %vm493, %v441, %v464
      %v514 = vpack.c.bf16 %v499, %v494
      %v515 = vpack.c.bf16 %v500, %v495
      %v516 = vpack.c.bf16 %v501, %v496
      %v517 = vpack.c.bf16 %v502, %v497
      %v518 = vpack.c.bf16 %v503, %v498
      %v519 = vpack.c.bf16 %v509, %v504
      %v520 = vpack.c.bf16 %v510, %v505
      %v521 = vpack.c.bf16 %v511, %v506
      %v522 = vpack.c.bf16 %v512, %v507
      %v523 = vpack.c.bf16 %v513, %v508
      %v524 = vpack.c.bf16 %v483, %v483
      %v525 = vpack.c.bf16 %v484, %v484
      %v526 = vpack.c.bf16 %v485, %v485
      %v527 = vpack.c.bf16 %v486, %v486
      %v528 = vpack.c.bf16 %v487, %v487
      %v529 = vld [vmem:[%s1] sm:$0xf]
      %531 = vset.pattern.permute.xlu0 0
      %532 = vperm.xlu0 %531, %v282
      %v533 = vpop.permute.xlu0 %532
      %v536 = vlaneseq
      %v537 = vshrl.u32 %v536, 7
      %v538 = vsub.s32 0, %v537
      %v539 = vrot.slane %v280, %v538
      %v540 = vlaneseq
      %v541 = vshrl.u32 %v540, 7
      %v542 = vsub.s32 1, %v541
      %v543 = vrot.slane %v280, %v542
      %v544 = vlaneseq
      %v545 = vshrl.u32 %v544, 7
      %v546 = vsub.s32 2, %v545
      %v547 = vrot.slane %v280, %v546
      %v548 = vlaneseq
      %v549 = vshrl.u32 %v548, 7
      %v550 = vsub.s32 3, %v549
      %v551 = vrot.slane %v280, %v550
      %v552 = vlaneseq
      %v553 = vshrl.u32 %v552, 7
      %v554 = vsub.s32 4, %v553
      %v555 = vrot.slane %v280, %v554
      %v561 = vmul.f32 %v533, %v539
      %v562 = vmul.f32 %v533, %v543
      %v563 = vmul.f32 %v533, %v547
      %v564 = vmul.f32 %v533, %v551
      %v565 = vmul.f32 %v533, %v555
      %vm566 = vcmask 293888
      %v568 = vsel %vm566, %v529, 0
      %vm570 = vcmask 1041408
      %v572 = vsel %vm570, %v524, 0
      %v575 = vsel %vm570, %v525, 0
      %v578 = vsel %vm570, %v526, 0
      %v581 = vsel %vm570, %v527, 0
      %v584 = vsel %vm570, %v528, 0
      %586 = vmatprep.subr.bf16.mxu0 0
      %587 = vmatpush1.bf16.msra.mxu0 0
      %588 = vmatprep.subr.bf16.mxu0 0
      %589 = vmatpush1.bf16.msra.mxu0 0
      %590 = vmatprep.subr.bf16.mxu0 0
      %591 = vmatpush1.bf16.msra.mxu0 0
      %592 = vmatprep.subr.bf16.mxu0 0
      %593 = vmatpush1.bf16.msra.mxu0 0
      %594 = vmatprep.subr.bf16.mxu0 0
      %595 = vmatpush1.bf16.msra.mxu0 0
      %596 = vmatprep.subr.bf16.mxu0 %v575
      %597 = vmatpush1.bf16.msra.mxu0 %v572
      %598 = vmatprep.subr.bf16.mxu0 %v520
      %599 = vmatpush1.bf16.msra.mxu0 %v519
      %600 = vmatprep.subr.bf16.mxu0 %v515
      %601 = vmatpush1.bf16.msra.mxu0 %v514
      %602 = vmatprep.subr.bf16.mxu0 0
      %603 = vmatpush2.bf16.msra.mxu0 0
      %604 = vmatprep.subr.bf16.mxu0 0
      %605 = vmatpush2.bf16.msra.mxu0 0
      %606 = vmatprep.subr.bf16.mxu0 0
      %607 = vmatpush2.bf16.msra.mxu0 0
      %608 = vmatprep.subr.bf16.mxu0 0
      %609 = vmatpush2.bf16.msra.mxu0 0
      %610 = vmatprep.subr.bf16.mxu0 0
      %611 = vmatpush2.bf16.msra.mxu0 0
      %612 = vmatprep.subr.bf16.mxu0 0
      %613 = vmatpush2.bf16.msra.mxu0 0
      %614 = vmatprep.subr.bf16.mxu0 0
      %615 = vmatpush2.bf16.msra.mxu0 0
      %616 = vmatprep.subr.bf16.mxu0 0
      %617 = vmatpush2.bf16.msra.mxu0 0
      %618 = vmatprep.mubr.bf16.mxu0 0
      %619 = vmatmul.mubr.bf16.gmra.mxu0 %v568
      %v620 = vpop.f32.mrf.mxu0
      %v621 = vadd.f32 %v561, %v620
      %v622 = vpop.f32.mrf.mxu0
      %v623 = vadd.f32 %v562, %v622
      %v624 = vpop.f32.mrf.mxu0
      %v625 = vpop.f32.mrf.mxu0
      %626 = vdwg.mxu0
      %627 = vmatprep.subr.bf16.mxu0 0
      %628 = vmatpush1.bf16.msra.mxu0 0
      %629 = vmatprep.subr.bf16.mxu0 0
      %630 = vmatpush1.bf16.msra.mxu0 0
      %631 = vmatprep.subr.bf16.mxu0 0
      %632 = vmatpush1.bf16.msra.mxu0 0
      %633 = vmatprep.subr.bf16.mxu0 0
      %634 = vmatpush1.bf16.msra.mxu0 0
      %635 = vmatprep.subr.bf16.mxu0 0
      %636 = vmatpush1.bf16.msra.mxu0 0
      %637 = vmatprep.subr.bf16.mxu0 %v581
      %638 = vmatpush1.bf16.msra.mxu0 %v578
      %639 = vmatprep.subr.bf16.mxu0 %v522
      %640 = vmatpush1.bf16.msra.mxu0 %v521
      %641 = vmatprep.subr.bf16.mxu0 %v517
      %642 = vmatpush1.bf16.msra.mxu0 %v516
      %643 = vmatprep.subr.bf16.mxu0 0
      %644 = vmatpush2.bf16.msra.mxu0 0
      %645 = vmatprep.subr.bf16.mxu0 0
      %646 = vmatpush2.bf16.msra.mxu0 0
      %647 = vmatprep.subr.bf16.mxu0 0
      %648 = vmatpush2.bf16.msra.mxu0 0
      %649 = vmatprep.subr.bf16.mxu0 0
      %650 = vmatpush2.bf16.msra.mxu0 0
      %651 = vmatprep.subr.bf16.mxu0 0
      %652 = vmatpush2.bf16.msra.mxu0 0
      %653 = vmatprep.subr.bf16.mxu0 0
      %654 = vmatpush2.bf16.msra.mxu0 0
      %655 = vmatprep.subr.bf16.mxu0 0
      %656 = vmatpush2.bf16.msra.mxu0 0
      %657 = vmatprep.subr.bf16.mxu0 0
      %658 = vmatpush2.bf16.msra.mxu0 0
      %659 = vmatprep.mubr.bf16.mxu0 0
      %660 = vmatmul.mubr.bf16.gmra.mxu0 %v568
      %v661 = vpop.f32.mrf.mxu0
      %v662 = vadd.f32 %v563, %v661
      %v663 = vpop.f32.mrf.mxu0
      %v664 = vadd.f32 %v564, %v663
      %v665 = vpop.f32.mrf.mxu0
      %v666 = vpop.f32.mrf.mxu0
      %667 = vdwg.mxu0
      %668 = vmatprep.subr.bf16.mxu0 0
      %669 = vmatpush1.bf16.msra.mxu0 0
      %670 = vmatprep.subr.bf16.mxu0 0
      %671 = vmatpush1.bf16.msra.mxu0 0
      %672 = vmatprep.subr.bf16.mxu0 0
      %673 = vmatpush1.bf16.msra.mxu0 0
      %674 = vmatprep.subr.bf16.mxu0 0
      %675 = vmatpush1.bf16.msra.mxu0 0
      %676 = vmatprep.subr.bf16.mxu0 0
      %677 = vmatpush1.bf16.msra.mxu0 0
      %678 = vmatprep.subr.bf16.mxu0 0
      %679 = vmatpush1.bf16.msra.mxu0 %v584
      %680 = vmatprep.subr.bf16.mxu0 0
      %681 = vmatpush1.bf16.msra.mxu0 %v523
      %682 = vmatprep.subr.bf16.mxu0 0
      %683 = vmatpush1.bf16.msra.mxu0 %v518
      %684 = vmatprep.subr.bf16.mxu0 0
      %685 = vmatpush2.bf16.msra.mxu0 0
      %686 = vmatprep.subr.bf16.mxu0 0
      %687 = vmatpush2.bf16.msra.mxu0 0
      %688 = vmatprep.subr.bf16.mxu0 0
      %689 = vmatpush2.bf16.msra.mxu0 0
      %690 = vmatprep.subr.bf16.mxu0 0
      %691 = vmatpush2.bf16.msra.mxu0 0
      %692 = vmatprep.subr.bf16.mxu0 0
      %693 = vmatpush2.bf16.msra.mxu0 0
      %694 = vmatprep.subr.bf16.mxu0 0
      %695 = vmatpush2.bf16.msra.mxu0 0
      %696 = vmatprep.subr.bf16.mxu0 0
      %697 = vmatpush2.bf16.msra.mxu0 0
      %698 = vmatprep.subr.bf16.mxu0 0
      %699 = vmatpush2.bf16.msra.mxu0 0
      %700 = vmatprep.mubr.bf16.mxu0 0
      %701 = vmatmul.mubr.bf16.gmra.mxu0 %v568
      %v702 = vpop.f32.mrf.mxu0
      %v703 = vadd.f32 %v565, %v702
      %v704 = vpop.f32.mrf.mxu0
      %v705 = vpop.f32.mrf.mxu0
      %v706 = vpop.f32.mrf.mxu0
      %707 = vdwg.mxu0
      %v708 = vadd.f32 %v621, %v623
      %v709 = vadd.f32 %v708, %v662
      %v710 = vadd.f32 %v709, %v664
      %v711 = vadd.f32 %v710, %v703
      %712 = vadd.xlane.f32.xlu0 %v711
      %v713 = vpop.xlane.xlu0 %712
      %v714 = vmul.f32 %v713, 0.0030864198
      %v715 = vmul.f32 %v621, %v621
      %v716 = vmul.f32 %v623, %v623
      %v717 = vmul.f32 %v662, %v662
      %v718 = vmul.f32 %v664, %v664
      %v719 = vmul.f32 %v703, %v703
      %v720 = vadd.f32 %v715, %v716
      %v721 = vadd.f32 %v720, %v717
      %v722 = vadd.f32 %v721, %v718
      %v723 = vadd.f32 %v722, %v719
      %724 = vadd.xlane.f32.xlu0 %v723
      %v725 = vpop.xlane.xlu0 %724
      %v726 = vrsqrt.pop %v725
      %v727 = vmul.f32 %v725, %v726
      %vm728 = vcmp.eq.f32.partialorder %v725, inf
      %v729 = vsel %vm728, %v725, %v727
      %vm730 = vcmp.eq.f32.partialorder %v725, 0.0
      %v731 = vand.u32 %v725, 2147483648
      %v732 = vsel %vm730, %v731, %v729
      %v733 = vsel %vm281, 1, 0
      %v734 = vlaneseq
      %v735 = vshrl.u32 %v734, 7
      %v736 = vsub.s32 0, %v735
      %v737 = vrot.slane %v733, %v736
      %v738 = vlaneseq
      %v739 = vshrl.u32 %v738, 7
      %v740 = vsub.s32 1, %v739
      %v741 = vrot.slane %v733, %v740
      %v742 = vlaneseq
      %v743 = vshrl.u32 %v742, 7
      %v744 = vsub.s32 2, %v743
      %v745 = vrot.slane %v733, %v744
      %v746 = vlaneseq
      %v747 = vshrl.u32 %v746, 7
      %v748 = vsub.s32 3, %v747
      %v749 = vrot.slane %v733, %v748
      %v750 = vlaneseq
      %v751 = vshrl.u32 %v750, 7
      %v752 = vsub.s32 4, %v751
      %v753 = vrot.slane %v733, %v752
      %vm754 = vcmp.eq.s32.totalorder %v737, 1
      %vm755 = vcmp.eq.s32.totalorder %v741, 1
      %vm756 = vcmp.eq.s32.totalorder %v745, 1
      %vm757 = vcmp.eq.s32.totalorder %v749, 1
      %vm758 = vcmp.eq.s32.totalorder %v753, 1
      %v759 = vsel %vm754, %v621, -inf
      %v760 = vsel %vm755, %v623, -inf
      %v761 = vsel %vm756, %v662, -inf
      %v762 = vsel %vm757, %v664, -inf
      %v763 = vsel %vm758, %v703, -inf
      %v764 = vmax.f32 %v759, %v763
      %v765 = vmax.f32 %v764, %v760
      %v766 = vmax.f32 %v761, %v762
      %v767 = vmax.f32 %v765, %v766
      %768 = vmax.xlane.f32.xlu0 %v767
      %v769 = vpop.xlane.xlu0 %768
      %v770 = vsub.f32 %v759, %v769
      %v771 = vsub.f32 %v760, %v769
      %v772 = vsub.f32 %v761, %v769
      %v773 = vsub.f32 %v762, %v769
      %v774 = vsub.f32 %v763, %v769
      %v775 = vmul.f32 %v770, 1.442695
      %v776 = vpow.pop %v775
      %v777 = vmul.f32 %v771, 1.442695
      %v778 = vpow.pop %v777
      %v779 = vmul.f32 %v772, 1.442695
      %v780 = vpow.pop %v779
      %v781 = vmul.f32 %v773, 1.442695
      %v782 = vpow.pop %v781
      %v783 = vmul.f32 %v774, 1.442695
      %v784 = vpow.pop %v783
      %v785 = vadd.f32 %v776, %v778
      %v786 = vadd.f32 %v785, %v780
      %v787 = vadd.f32 %v786, %v782
      %v788 = vadd.f32 %v787, %v784
      %789 = vadd.xlane.f32.xlu0 %v788
      %v790 = vpop.xlane.xlu0 %789
      %v791 = vlog2.pop %v790
      %v792 = vmul.f32 %v791, 0.6931472
      %v793 = vadd.f32 %v769, %v792
      %vm794 = vcmask 7168
      %v795 = vsel %vm794, %v714, %v769
      %vm796 = vcmask 15360
      %v797 = vsel %vm796, %v795, %v732
      %vm798 = vcmask 23552
      %v799 = vsel %vm798, %v797, %v793
      %v800 = vld [vmem:[%s2] sm:$0xf]
      %802 = vset.pattern.permute.xlu0 2
      %803 = vperm.xlu0 %802, %v283
      %v804 = vpop.permute.xlu0 %803
      %vm806 = vcmask 64512
      %v808 = vsel %vm806, %v800, 0
      %810 = vmatprep.subr.mxu0 0.0
      %811 = vmatpush1.msra.mxu0 0.0
      %812 = vmatprep.subr.mxu0 0.0
      %813 = vmatpush1.msra.mxu0 0.0
      %814 = vmatprep.subr.mxu0 0.0
      %815 = vmatpush1.msra.mxu0 0.0
      %816 = vmatprep.subr.mxu0 0.0
      %817 = vmatpush1.msra.mxu0 0.0
      %818 = vmatprep.subr.mxu0 0.0
      %819 = vmatpush1.msra.mxu0 0.0
      %820 = vmatprep.subr.mxu0 0.0
      %821 = vmatpush1.msra.mxu0 0.0
      %822 = vmatprep.subr.mxu0 0.0
      %823 = vmatpush1.msra.mxu0 0.0
      %824 = vmatprep.subr.mxu0 0.0
      %825 = vmatpush1.msra.mxu0 0.0
      %826 = vmatprep.subr.mxu0 0.0
      %827 = vmatpush1.msra.mxu0 0.0
      %828 = vmatprep.subr.mxu0 0.0
      %829 = vmatpush1.msra.mxu0 0.0
      %830 = vmatprep.subr.mxu0 0.0
      %831 = vmatpush1.msra.mxu0 0.0
      %832 = vmatprep.subr.mxu0 0.0
      %833 = vmatpush1.msra.mxu0 0.0
      %834 = vmatprep.subr.mxu0 0.0
      %835 = vmatpush1.msra.mxu0 0.0
      %836 = vmatprep.subr.mxu0 0.0
      %837 = vmatpush1.msra.mxu0 0.0
      %838 = vmatprep.subr.mxu0 0.0
      %839 = vmatpush1.msra.mxu0 0.0
      %840 = vmatprep.subr.mxu0 0.0
      %841 = vmatpush1.msra.mxu0 %v799
      %842 = vmatprep.subr.mxu0 0.0
      %843 = vmatpush2.msra.mxu0 0.0
      %844 = vmatprep.subr.mxu0 0.0
      %845 = vmatpush2.msra.mxu0 0.0
      %846 = vmatprep.subr.mxu0 0.0
      %847 = vmatpush2.msra.mxu0 0.0
      %848 = vmatprep.subr.mxu0 0.0
      %849 = vmatpush2.msra.mxu0 0.0
      %850 = vmatprep.subr.mxu0 0.0
      %851 = vmatpush2.msra.mxu0 0.0
      %852 = vmatprep.subr.mxu0 0.0
      %853 = vmatpush2.msra.mxu0 0.0
      %854 = vmatprep.subr.mxu0 0.0
      %855 = vmatpush2.msra.mxu0 0.0
      %856 = vmatprep.subr.mxu0 0.0
      %857 = vmatpush2.msra.mxu0 0.0
      %858 = vmatprep.subr.mxu0 0.0
      %859 = vmatpush2.msra.mxu0 0.0
      %860 = vmatprep.subr.mxu0 0.0
      %861 = vmatpush2.msra.mxu0 0.0
      %862 = vmatprep.subr.mxu0 0.0
      %863 = vmatpush2.msra.mxu0 0.0
      %864 = vmatprep.subr.mxu0 0.0
      %865 = vmatpush2.msra.mxu0 0.0
      %866 = vmatprep.subr.mxu0 0.0
      %867 = vmatpush2.msra.mxu0 0.0
      %868 = vmatprep.subr.mxu0 0.0
      %869 = vmatpush2.msra.mxu0 0.0
      %870 = vmatprep.subr.mxu0 0.0
      %871 = vmatpush2.msra.mxu0 0.0
      %872 = vmatprep.subr.mxu0 0.0
      %873 = vmatpush2.msra.mxu0 0.0
      %874 = vmatprep.mubr.f32.mxu0 0.0
      %875 = vmatmul.mubr.f32.gmra.mxu0 %v808
      %v876 = vpop.f32.mrf.mxu0
      %v877 = vadd.f32 %v804, %v876
      %v878 = vpop.f32.mrf.mxu0
      %879 = vdwg.mxu0
      %v880 = vmax.f32 %v877, 0.0
      %v881 = vld [vmem:[%s3] sm:$0xff]
      %882 = vset.pattern.permute.xlu0 1
      %883 = vperm.xlu0 %882, %v282
      %v884 = vpop.permute.xlu0 %883
      %vm886 = vcmask 31744
      %v888 = vsel %vm886, %v881, 0
      %v891 = vsel %vm493, %v880, 0
      %893 = vmatprep.subr.mxu0 0.0
      %894 = vmatpush1.msra.mxu0 0.0
      %895 = vmatprep.subr.mxu0 0.0
      %896 = vmatpush1.msra.mxu0 0.0
      %897 = vmatprep.subr.mxu0 0.0
      %898 = vmatpush1.msra.mxu0 0.0
      %899 = vmatprep.subr.mxu0 0.0
      %900 = vmatpush1.msra.mxu0 0.0
      %901 = vmatprep.subr.mxu0 0.0
      %902 = vmatpush1.msra.mxu0 0.0
      %903 = vmatprep.subr.mxu0 0.0
      %904 = vmatpush1.msra.mxu0 0.0
      %905 = vmatprep.subr.mxu0 0.0
      %906 = vmatpush1.msra.mxu0 0.0
      %907 = vmatprep.subr.mxu0 0.0
      %908 = vmatpush1.msra.mxu0 0.0
      %909 = vmatprep.subr.mxu0 0.0
      %910 = vmatpush1.msra.mxu0 0.0
      %911 = vmatprep.subr.mxu0 0.0
      %912 = vmatpush1.msra.mxu0 0.0
      %913 = vmatprep.subr.mxu0 0.0
      %914 = vmatpush1.msra.mxu0 0.0
      %915 = vmatprep.subr.mxu0 0.0
      %916 = vmatpush1.msra.mxu0 0.0
      %917 = vmatprep.subr.mxu0 0.0
      %918 = vmatpush1.msra.mxu0 0.0
      %919 = vmatprep.subr.mxu0 0.0
      %920 = vmatpush1.msra.mxu0 0.0
      %921 = vmatprep.subr.mxu0 0.0
      %922 = vmatpush1.msra.mxu0 0.0
      %923 = vmatprep.subr.mxu0 0.0
      %924 = vmatpush1.msra.mxu0 %v891
      %925 = vmatprep.subr.mxu0 0.0
      %926 = vmatpush2.msra.mxu0 0.0
      %927 = vmatprep.subr.mxu0 0.0
      %928 = vmatpush2.msra.mxu0 0.0
      %929 = vmatprep.subr.mxu0 0.0
      %930 = vmatpush2.msra.mxu0 0.0
      %931 = vmatprep.subr.mxu0 0.0
      %932 = vmatpush2.msra.mxu0 0.0
      %933 = vmatprep.subr.mxu0 0.0
      %934 = vmatpush2.msra.mxu0 0.0
      %935 = vmatprep.subr.mxu0 0.0
      %936 = vmatpush2.msra.mxu0 0.0
      %937 = vmatprep.subr.mxu0 0.0
      %938 = vmatpush2.msra.mxu0 0.0
      %939 = vmatprep.subr.mxu0 0.0
      %940 = vmatpush2.msra.mxu0 0.0
      %941 = vmatprep.subr.mxu0 0.0
      %942 = vmatpush2.msra.mxu0 0.0
      %943 = vmatprep.subr.mxu0 0.0
      %944 = vmatpush2.msra.mxu0 0.0
      %945 = vmatprep.subr.mxu0 0.0
      %946 = vmatpush2.msra.mxu0 0.0
      %947 = vmatprep.subr.mxu0 0.0
      %948 = vmatpush2.msra.mxu0 0.0
      %949 = vmatprep.subr.mxu0 0.0
      %950 = vmatpush2.msra.mxu0 0.0
      %951 = vmatprep.subr.mxu0 0.0
      %952 = vmatpush2.msra.mxu0 0.0
      %953 = vmatprep.subr.mxu0 0.0
      %954 = vmatpush2.msra.mxu0 0.0
      %955 = vmatprep.subr.mxu0 0.0
      %956 = vmatpush2.msra.mxu0 0.0
      %957 = vmatprep.mubr.f32.mxu0 0.0
      %958 = vmatmul.mubr.f32.gmra.mxu0 %v888
      %v959 = vpop.f32.mrf.mxu0
      %v960 = vadd.f32 %v884, %v959
      %v961 = vpop.f32.mrf.mxu0
      %962 = vdwg.mxu0
      %v963 = vsel %vm886, %v960, 0.0
      %964 = vadd.xlane.f32.xlu0 %v963
      %v965 = vpop.xlane.xlu0 %964
      %v966 = vxor.u32 %v965, 2147483648
      %v967 = vmul.f32 %v966, 1.442695
      %v968 = vpow.pop %v967
      %v969 = vadd.f32 %v968, 1.0
      %v970 = vrcp.pop %v969
      %v971 = vmul.f32 1.0, %v970
      %v972 = vmul.f32 %v621, %v971
      %v973 = vmul.f32 %v623, %v971
      %v974 = vmul.f32 %v662, %v971
      %v975 = vmul.f32 %v664, %v971
      %v976 = vmul.f32 %v703, %v971
      %v977 = vrot.slane %v972, 4
      %v978 = vmax.f32 %v972, %v977
      %v979 = vrot.slane %v978, 2
      %v980 = vmax.f32 %v978, %v979
      %v981 = vrot.slane %v980, 1
      %v982 = vmax.f32 %v980, %v981
      %v983 = vrot.slane %v973, 4
      %v984 = vmax.f32 %v973, %v983
      %v985 = vrot.slane %v984, 2
      %v986 = vmax.f32 %v984, %v985
      %v987 = vrot.slane %v986, 1
      %v988 = vmax.f32 %v986, %v987
      %v989 = vrot.slane %v974, 4
      %v990 = vmax.f32 %v974, %v989
      %v991 = vrot.slane %v990, 2
      %v992 = vmax.f32 %v990, %v991
      %v993 = vrot.slane %v992, 1
      %v994 = vmax.f32 %v992, %v993
      %v995 = vrot.slane %v975, 4
      %v996 = vmax.f32 %v975, %v995
      %v997 = vrot.slane %v996, 2
      %v998 = vmax.f32 %v996, %v997
      %v999 = vrot.slane %v998, 1
      %v1000 = vmax.f32 %v998, %v999
      %v1001 = vrot.slane %v976, 4
      %v1002 = vmax.f32 %v976, %v1001
      %v1003 = vrot.slane %v1002, 2
      %v1004 = vmax.f32 %v1002, %v1003
      %v1005 = vrot.slane %v1004, 1
      %v1006 = vmax.f32 %v1004, %v1005
      %v1007 = vrot.slane %v972, 4
      %v1008 = vadd.f32 %v972, %v1007
      %v1009 = vrot.slane %v1008, 2
      %v1010 = vadd.f32 %v1008, %v1009
      %v1011 = vrot.slane %v1010, 1
      %v1012 = vadd.f32 %v1010, %v1011
      %v1013 = vrot.slane %v973, 4
      %v1014 = vadd.f32 %v973, %v1013
      %v1015 = vrot.slane %v1014, 2
      %v1016 = vadd.f32 %v1014, %v1015
      %v1017 = vrot.slane %v1016, 1
      %v1018 = vadd.f32 %v1016, %v1017
      %v1019 = vrot.slane %v974, 4
      %v1020 = vadd.f32 %v974, %v1019
      %v1021 = vrot.slane %v1020, 2
      %v1022 = vadd.f32 %v1020, %v1021
      %v1023 = vrot.slane %v1022, 1
      %v1024 = vadd.f32 %v1022, %v1023
      %v1025 = vrot.slane %v975, 4
      %v1026 = vadd.f32 %v975, %v1025
      %v1027 = vrot.slane %v1026, 2
      %v1028 = vadd.f32 %v1026, %v1027
      %v1029 = vrot.slane %v1028, 1
      %v1030 = vadd.f32 %v1028, %v1029
      %v1031 = vrot.slane %v976, 4
      %v1032 = vadd.f32 %v976, %v1031
      %v1033 = vrot.slane %v1032, 2
      %v1034 = vadd.f32 %v1032, %v1033
      %v1035 = vrot.slane %v1034, 1
      %v1036 = vadd.f32 %v1034, %v1035
      %v1037 = vrcp.pop 8.0
      %v1038 = vmul.f32 %v1012, %v1037
      %v1039 = vmul.f32 %v1018, %v1037
      %v1040 = vmul.f32 %v1024, %v1037
      %v1041 = vmul.f32 %v1030, %v1037
      %v1042 = vmul.f32 %v1036, %v1037
      %vm1043 = vcmask 1040384
      %v1044 = vsel %vm1043, %v982, %v1038
      %v1045 = vsel %vm1043, %v988, %v1039
      %v1046 = vsel %vm1043, %v994, %v1040
      %v1047 = vsel %vm1043, %v1000, %v1041
      %v1048 = vsel %vm1043, %v1006, %v1042
      %p1049 = scmp.eq.s32.totalorder %s18, 0
      // Predicated region
      $region49: #{upblock_forward.1} parent=47 // pred_check
        %p1050 = pneg %p1049
      $region50: #{upblock_forward.1} parent=47 // pred_check_branch
        %1052 = sbr.rel (%p1050) target = $region52
      $region51: #{upblock_forward.1} parent=47 // pred_region
        %1053 = vst [vmem:[#allocation2] sm:$0x3] 0.0
        %1054 = vst [vmem:[#allocation2 + $0xc] sm:$0x3] 0.0
      $region52: #{upblock_forward.1} parent=47 // pred_fallthru
        _
      %v1060 = vcombine.low %v1044, %v1045
      %v1061 = vcombine.low %v1046, %v1047
      %v1063 = vunpack.c.l.s4 1983009808
      %v1064 = vunpack.c.0.s8 %v1063
      %v1065 = vlaneseq
      %v1066 = vshrl.u32 %v1065, 7
      %v1067 = vsub.s32 %v1064, %v1066
      %v1068 = vrot.slane %v1060, %v1067
      %v1070 = vunpack.c.l.s4 1983009808
      %v1071 = vunpack.c.0.s8 %v1070
      %v1072 = vlaneseq
      %v1073 = vshrl.u32 %v1072, 7
      %v1074 = vsub.s32 %v1071, %v1073
      %v1075 = vrot.slane %v1061, %v1074
      %v1076 = vcombine.low %v1068, %v1075
      %v1078 = vunpack.c.l.s4 1983009808
      %v1079 = vunpack.c.0.s8 %v1078
      %v1080 = vlaneseq
      %v1081 = vshrl.u32 %v1080, 7
      %v1082 = vsub.s32 %v1079, %v1081
      %v1083 = vrot.slane %v1048, %v1082
      %1086 = vst [vmem:[#allocation2 + $0x2] sm:$0xff] %v1076
      %1087 = vst [vmem:[#allocation2 + $0xa] sm:$0x3] %v1083
      %v1088 = vld [vmem:[#allocation2] sm:$0xff]
      %v1089 = vld [vmem:[#allocation2 + $0x8] sm:$0xf]
      %v1090 = vld [vmem:[%s6] sm:$0x3]
      %1092 = vset.pattern.permute.xlu0 0
      %1093 = vperm.xlu0 %1092, %v1090
      %v1094 = vpop.permute.xlu0 %1093
      %v1098 = vcombine.high %v1088, %v1088
      %v1100 = vunpack.c.l.s4 1983009808
      %v1101 = vunpack.c.0.s8 %v1100
      %v1102 = vlaneseq
      %v1103 = vshrl.u32 %v1102, 7
      %v1104 = vsub.s32 %v1101, %v1103
      %v1105 = vrot.slane %v1088, %v1104
      %v1107 = vunpack.c.l.s4 1983009808
      %v1108 = vunpack.c.0.s8 %v1107
      %v1109 = vlaneseq
      %v1110 = vshrl.u32 %v1109, 7
      %v1111 = vsub.s32 %v1108, %v1110
      %v1112 = vrot.slane %v1098, %v1111
      %v1113 = vcombine.high %v1105, %v1105
      %v1114 = vcombine.high %v1112, %v1112
      %v1116 = vunpack.c.l.s4 1983009808
      %v1117 = vunpack.c.0.s8 %v1116
      %v1118 = vlaneseq
      %v1119 = vshrl.u32 %v1118, 7
      %v1120 = vsub.s32 %v1117, %v1119
      %v1121 = vrot.slane %v1089, %v1120
      %v1122 = vcombine.high %v1121, %v1121
      %1123 = vrot.lane.b32.xlu0 %v1105, 75
      %v1124 = vpop.permute.xlu0 %1123
      %1125 = vrot.lane.b32.xlu0 %v1113, 75
      %v1126 = vpop.permute.xlu0 %1125
      %1127 = vrot.lane.b32.xlu0 %v1112, 75
      %v1128 = vpop.permute.xlu0 %1127
      %1129 = vrot.lane.b32.xlu0 %v1114, 75
      %v1130 = vpop.permute.xlu0 %1129
      %1131 = vrot.lane.b32.xlu0 %v1121, 75
      %v1132 = vpop.permute.xlu0 %1131
      %1133 = vrot.lane.b32.xlu0 %v1122, 75
      %v1134 = vpop.permute.xlu0 %1133
      %vm1135 = vcmask 613376
      %v1136 = vsel %vm1135, %v1124, %v1126
      %v1137 = vsel %vm1135, %v1126, %v1128
      %v1138 = vsel %vm1135, %v1128, %v1130
      %v1139 = vsel %vm1135, %v1130, %v1132
      %v1140 = vsel %vm1135, %v1132, %v1134
      %v1146 = vmul.f32 %v1094, %v1136
      %v1147 = vmul.f32 %v1094, %v1137
      %v1148 = vmul.f32 %v1094, %v1138
      %v1149 = vmul.f32 %v1094, %v1139
      %v1150 = vmul.f32 %v1094, %v1140
      %v1151 = vadd.f32 %v1146, 0.0
      %v1152 = vadd.f32 %v1147, 0.0
      %v1153 = vadd.f32 %v1148, 0.0
      %v1154 = vadd.f32 %v1149, 0.0
      %v1155 = vadd.f32 %v1150, 0.0
      %v1156 = vld [vmem:[#allocation2] sm:$0xff]
      %v1157 = vld [vmem:[#allocation2 + $0x8] sm:$0xf]
      %v1158 = vld [vmem:[%s6] sm:$0x3]
      %1160 = vset.pattern.permute.xlu0 1
      %1161 = vperm.xlu0 %1160, %v1158
      %v1162 = vpop.permute.xlu0 %1161
      %v1166 = vcombine.high %v1156, %v1156
      %v1168 = vunpack.c.l.s4 1983009808
      %v1169 = vunpack.c.0.s8 %v1168
      %v1170 = vlaneseq
      %v1171 = vshrl.u32 %v1170, 7
      %v1172 = vsub.s32 %v1169, %v1171
      %v1173 = vrot.slane %v1156, %v1172
      %v1175 = vunpack.c.l.s4 1983009808
      %v1176 = vunpack.c.0.s8 %v1175
      %v1177 = vlaneseq
      %v1178 = vshrl.u32 %v1177, 7
      %v1179 = vsub.s32 %v1176, %v1178
      %v1180 = vrot.slane %v1166, %v1179
      %v1181 = vcombine.high %v1173, %v1173
      %v1182 = vcombine.high %v1180, %v1180
      %v1184 = vunpack.c.l.s4 1983009808
      %v1185 = vunpack.c.0.s8 %v1184
      %v1186 = vlaneseq
      %v1187 = vshrl.u32 %v1186, 7
      %v1188 = vsub.s32 %v1185, %v1187
      %v1189 = vrot.slane %v1157, %v1188
      %v1190 = vcombine.high %v1189, %v1189
      %1191 = vrot.lane.b32.xlu0 %v1173, 74
      %v1192 = vpop.permute.xlu0 %1191
      %1193 = vrot.lane.b32.xlu0 %v1181, 74
      %v1194 = vpop.permute.xlu0 %1193
      %1195 = vrot.lane.b32.xlu0 %v1180, 74
      %v1196 = vpop.permute.xlu0 %1195
      %1197 = vrot.lane.b32.xlu0 %v1182, 74
      %v1198 = vpop.permute.xlu0 %1197
      %1199 = vrot.lane.b32.xlu0 %v1189, 74
      %v1200 = vpop.permute.xlu0 %1199
      %1201 = vrot.lane.b32.xlu0 %v1190, 74
      %v1202 = vpop.permute.xlu0 %1201
      %vm1203 = vcmask 605184
      %v1204 = vsel %vm1203, %v1192, %v1194
      %v1205 = vsel %vm1203, %v1194, %v1196
      %v1206 = vsel %vm1203, %v1196, %v1198
      %v1207 = vsel %vm1203, %v1198, %v1200
      %v1208 = vsel %vm1203, %v1200, %v1202
      %v1214 = vmul.f32 %v1162, %v1204
      %v1215 = vmul.f32 %v1162, %v1205
      %v1216 = vmul.f32 %v1162, %v1206
      %v1217 = vmul.f32 %v1162, %v1207
      %v1218 = vmul.f32 %v1162, %v1208
      %v1219 = vadd.f32 %v1151, %v1214
      %v1220 = vadd.f32 %v1152, %v1215
      %v1221 = vadd.f32 %v1153, %v1216
      %v1222 = vadd.f32 %v1154, %v1217
      %v1223 = vadd.f32 %v1155, %v1218
      %v1224 = vld [vmem:[#allocation2] sm:$0xff]
      %v1225 = vld [vmem:[#allocation2 + $0x8] sm:$0xf]
      %v1226 = vld [vmem:[%s6] sm:$0x3]
      %1228 = vset.pattern.permute.xlu0 2
      %1229 = vperm.xlu0 %1228, %v1226
      %v1230 = vpop.permute.xlu0 %1229
      %v1234 = vcombine.high %v1224, %v1224
      %v1236 = vunpack.c.l.s4 1983009808
      %v1237 = vunpack.c.0.s8 %v1236
      %v1238 = vlaneseq
      %v1239 = vshrl.u32 %v1238, 7
      %v1240 = vsub.s32 %v1237, %v1239
      %v1241 = vrot.slane %v1224, %v1240
      %v1243 = vunpack.c.l.s4 1983009808
      %v1244 = vunpack.c.0.s8 %v1243
      %v1245 = vlaneseq
      %v1246 = vshrl.u32 %v1245, 7
      %v1247 = vsub.s32 %v1244, %v1246
      %v1248 = vrot.slane %v1234, %v1247
      %v1249 = vcombine.high %v1241, %v1241
      %v1250 = vcombine.high %v1248, %v1248
      %v1252 = vunpack.c.l.s4 1983009808
      %v1253 = vunpack.c.0.s8 %v1252
      %v1254 = vlaneseq
      %v1255 = vshrl.u32 %v1254, 7
      %v1256 = vsub.s32 %v1253, %v1255
      %v1257 = vrot.slane %v1225, %v1256
      %v1258 = vcombine.high %v1257, %v1257
      %1259 = vrot.lane.b32.xlu0 %v1241, 73
      %v1260 = vpop.permute.xlu0 %1259
      %1261 = vrot.lane.b32.xlu0 %v1249, 73
      %v1262 = vpop.permute.xlu0 %1261
      %1263 = vrot.lane.b32.xlu0 %v1248, 73
      %v1264 = vpop.permute.xlu0 %1263
      %1265 = vrot.lane.b32.xlu0 %v1250, 73
      %v1266 = vpop.permute.xlu0 %1265
      %1267 = vrot.lane.b32.xlu0 %v1257, 73
      %v1268 = vpop.permute.xlu0 %1267
      %1269 = vrot.lane.b32.xlu0 %v1258, 73
      %v1270 = vpop.permute.xlu0 %1269
      %vm1271 = vcmask 596992
      %v1272 = vsel %vm1271, %v1260, %v1262
      %v1273 = vsel %vm1271, %v1262, %v1264
      %v1274 = vsel %vm1271, %v1264, %v1266
      %v1275 = vsel %vm1271, %v1266, %v1268
      %v1276 = vsel %vm1271, %v1268, %v1270
      %v1282 = vmul.f32 %v1230, %v1272
      %v1283 = vmul.f32 %v1230, %v1273
      %v1284 = vmul.f32 %v1230, %v1274
      %v1285 = vmul.f32 %v1230, %v1275
      %v1286 = vmul.f32 %v1230, %v1276
      %v1287 = vadd.f32 %v1219, %v1282
      %v1288 = vadd.f32 %v1220, %v1283
      %v1289 = vadd.f32 %v1221, %v1284
      %v1290 = vadd.f32 %v1222, %v1285
      %v1291 = vadd.f32 %v1223, %v1286
      %v1292 = vld [vmem:[#allocation2] sm:$0xff]
      %v1293 = vld [vmem:[#allocation2 + $0x8] sm:$0xf]
      %v1294 = vld [vmem:[%s6] sm:$0x3]
      %1296 = vset.pattern.permute.xlu0 3
      %1297 = vperm.xlu0 %1296, %v1294
      %v1298 = vpop.permute.xlu0 %1297
      %v1302 = vcombine.high %v1292, %v1292
      %v1304 = vunpack.c.l.s4 1983009808
      %v1305 = vunpack.c.0.s8 %v1304
      %v1306 = vlaneseq
      %v1307 = vshrl.u32 %v1306, 7
      %v1308 = vsub.s32 %v1305, %v1307
      %v1309 = vrot.slane %v1292, %v1308
      %v1311 = vunpack.c.l.s4 1983009808
      %v1312 = vunpack.c.0.s8 %v1311
      %v1313 = vlaneseq
      %v1314 = vshrl.u32 %v1313, 7
      %v1315 = vsub.s32 %v1312, %v1314
      %v1316 = vrot.slane %v1302, %v1315
      %v1317 = vcombine.high %v1309, %v1309
      %v1318 = vcombine.high %v1316, %v1316
      %v1320 = vunpack.c.l.s4 1983009808
      %v1321 = vunpack.c.0.s8 %v1320
      %v1322 = vlaneseq
      %v1323 = vshrl.u32 %v1322, 7
      %v1324 = vsub.s32 %v1321, %v1323
      %v1325 = vrot.slane %v1293, %v1324
      %v1326 = vcombine.high %v1325, %v1325
      %1327 = vrot.lane.b32.xlu0 %v1309, 72
      %v1328 = vpop.permute.xlu0 %1327
      %1329 = vrot.lane.b32.xlu0 %v1317, 72
      %v1330 = vpop.permute.xlu0 %1329
      %1331 = vrot.lane.b32.xlu0 %v1316, 72
      %v1332 = vpop.permute.xlu0 %1331
      %1333 = vrot.lane.b32.xlu0 %v1318, 72
      %v1334 = vpop.permute.xlu0 %1333
      %1335 = vrot.lane.b32.xlu0 %v1325, 72
      %v1336 = vpop.permute.xlu0 %1335
      %1337 = vrot.lane.b32.xlu0 %v1326, 72
      %v1338 = vpop.permute.xlu0 %1337
      %vm1339 = vcmask 588800
      %v1340 = vsel %vm1339, %v1328, %v1330
      %v1341 = vsel %vm1339, %v1330, %v1332
      %v1342 = vsel %vm1339, %v1332, %v1334
      %v1343 = vsel %vm1339, %v1334, %v1336
      %v1344 = vsel %vm1339, %v1336, %v1338
      %v1350 = vmul.f32 %v1298, %v1340
      %v1351 = vmul.f32 %v1298, %v1341
      %v1352 = vmul.f32 %v1298, %v1342
      %v1353 = vmul.f32 %v1298, %v1343
      %v1354 = vmul.f32 %v1298, %v1344
      %v1355 = vadd.f32 %v1287, %v1350
      %v1356 = vadd.f32 %v1288, %v1351
      %v1357 = vadd.f32 %v1289, %v1352
      %v1358 = vadd.f32 %v1290, %v1353
      %v1359 = vadd.f32 %v1291, %v1354
      %v1360 = vld [vmem:[#allocation2] sm:$0xff]
      %v1361 = vld [vmem:[#allocation2 + $0x8] sm:$0xf]
      %v1362 = vld [vmem:[%s6] sm:$0x3]
      %1364 = vset.pattern.permute.xlu0 4
      %1365 = vperm.xlu0 %1364, %v1362
      %v1366 = vpop.permute.xlu0 %1365
      %v1370 = vcombine.high %v1360, %v1360
      %v1372 = vunpack.c.l.s4 1983009808
      %v1373 = vunpack.c.0.s8 %v1372
      %v1374 = vlaneseq
      %v1375 = vshrl.u32 %v1374, 7
      %v1376 = vsub.s32 %v1373, %v1375
      %v1377 = vrot.slane %v1360, %v1376
      %v1379 = vunpack.c.l.s4 1983009808
      %v1380 = vunpack.c.0.s8 %v1379
      %v1381 = vlaneseq
      %v1382 = vshrl.u32 %v1381, 7
      %v1383 = vsub.s32 %v1380, %v1382
      %v1384 = vrot.slane %v1370, %v1383
      %v1385 = vcombine.high %v1377, %v1377
      %v1386 = vcombine.high %v1384, %v1384
      %v1388 = vunpack.c.l.s4 1983009808
      %v1389 = vunpack.c.0.s8 %v1388
      %v1390 = vlaneseq
      %v1391 = vshrl.u32 %v1390, 7
      %v1392 = vsub.s32 %v1389, %v1391
      %v1393 = vrot.slane %v1361, %v1392
      %v1394 = vcombine.high %v1393, %v1393
      %1395 = vrot.lane.b32.xlu0 %v1377, 71
      %v1396 = vpop.permute.xlu0 %1395
      %1397 = vrot.lane.b32.xlu0 %v1385, 71
      %v1398 = vpop.permute.xlu0 %1397
      %1399 = vrot.lane.b32.xlu0 %v1384, 71
      %v1400 = vpop.permute.xlu0 %1399
      %1401 = vrot.lane.b32.xlu0 %v1386, 71
      %v1402 = vpop.permute.xlu0 %1401
      %1403 = vrot.lane.b32.xlu0 %v1393, 71
      %v1404 = vpop.permute.xlu0 %1403
      %1405 = vrot.lane.b32.xlu0 %v1394, 71
      %v1406 = vpop.permute.xlu0 %1405
      %vm1407 = vcmask 580608
      %v1408 = vsel %vm1407, %v1396, %v1398
      %v1409 = vsel %vm1407, %v1398, %v1400
      %v1410 = vsel %vm1407, %v1400, %v1402
      %v1411 = vsel %vm1407, %v1402, %v1404
      %v1412 = vsel %vm1407, %v1404, %v1406
      %v1418 = vmul.f32 %v1366, %v1408
      %v1419 = vmul.f32 %v1366, %v1409
      %v1420 = vmul.f32 %v1366, %v1410
      %v1421 = vmul.f32 %v1366, %v1411
      %v1422 = vmul.f32 %v1366, %v1412
      %v1423 = vadd.f32 %v1355, %v1418
      %v1424 = vadd.f32 %v1356, %v1419
      %v1425 = vadd.f32 %v1357, %v1420
      %v1426 = vadd.f32 %v1358, %v1421
      %v1427 = vadd.f32 %v1359, %v1422
      %v1428 = vld [vmem:[#allocation2] sm:$0xff]
      %v1429 = vld [vmem:[#allocation2 + $0x8] sm:$0xf]
      %v1430 = vld [vmem:[%s6] sm:$0x3]
      %1432 = vset.pattern.permute.xlu0 5
      %1433 = vperm.xlu0 %1432, %v1430
      %v1434 = vpop.permute.xlu0 %1433
      %v1438 = vcombine.high %v1428, %v1428
      %v1440 = vunpack.c.l.s4 1983009808
      %v1441 = vunpack.c.0.s8 %v1440
      %v1442 = vlaneseq
      %v1443 = vshrl.u32 %v1442, 7
      %v1444 = vsub.s32 %v1441, %v1443
      %v1445 = vrot.slane %v1428, %v1444
      %v1447 = vunpack.c.l.s4 1983009808
      %v1448 = vunpack.c.0.s8 %v1447
      %v1449 = vlaneseq
      %v1450 = vshrl.u32 %v1449, 7
      %v1451 = vsub.s32 %v1448, %v1450
      %v1452 = vrot.slane %v1438, %v1451
      %v1453 = vcombine.high %v1445, %v1445
      %v1454 = vcombine.high %v1452, %v1452
      %v1456 = vunpack.c.l.s4 1983009808
      %v1457 = vunpack.c.0.s8 %v1456
      %v1458 = vlaneseq
      %v1459 = vshrl.u32 %v1458, 7
      %v1460 = vsub.s32 %v1457, %v1459
      %v1461 = vrot.slane %v1429, %v1460
      %v1462 = vcombine.high %v1461, %v1461
      %1463 = vrot.lane.b32.xlu0 %v1445, 70
      %v1464 = vpop.permute.xlu0 %1463
      %1465 = vrot.lane.b32.xlu0 %v1453, 70
      %v1466 = vpop.permute.xlu0 %1465
      %1467 = vrot.lane.b32.xlu0 %v1452, 70
      %v1468 = vpop.permute.xlu0 %1467
      %1469 = vrot.lane.b32.xlu0 %v1454, 70
      %v1470 = vpop.permute.xlu0 %1469
      %1471 = vrot.lane.b32.xlu0 %v1461, 70
      %v1472 = vpop.permute.xlu0 %1471
      %1473 = vrot.lane.b32.xlu0 %v1462, 70
      %v1474 = vpop.permute.xlu0 %1473
      %vm1475 = vcmask 572416
      %v1476 = vsel %vm1475, %v1464, %v1466
      %v1477 = vsel %vm1475, %v1466, %v1468
      %v1478 = vsel %vm1475, %v1468, %v1470
      %v1479 = vsel %vm1475, %v1470, %v1472
      %v1480 = vsel %vm1475, %v1472, %v1474
      %v1486 = vmul.f32 %v1434, %v1476
      %v1487 = vmul.f32 %v1434, %v1477
      %v1488 = vmul.f32 %v1434, %v1478
      %v1489 = vmul.f32 %v1434, %v1479
      %v1490 = vmul.f32 %v1434, %v1480
      %v1491 = vadd.f32 %v1423, %v1486
      %v1492 = vadd.f32 %v1424, %v1487
      %v1493 = vadd.f32 %v1425, %v1488
      %v1494 = vadd.f32 %v1426, %v1489
      %v1495 = vadd.f32 %v1427, %v1490
      %v1496 = vld [vmem:[#allocation2] sm:$0xff]
      %v1497 = vld [vmem:[#allocation2 + $0x8] sm:$0xf]
      %v1498 = vld [vmem:[%s6] sm:$0x3]
      %1500 = vset.pattern.permute.xlu0 6
      %1501 = vperm.xlu0 %1500, %v1498
      %v1502 = vpop.permute.xlu0 %1501
      %v1506 = vcombine.high %v1496, %v1496
      %v1508 = vunpack.c.l.s4 1983009808
      %v1509 = vunpack.c.0.s8 %v1508
      %v1510 = vlaneseq
      %v1511 = vshrl.u32 %v1510, 7
      %v1512 = vsub.s32 %v1509, %v1511
      %v1513 = vrot.slane %v1496, %v1512
      %v1515 = vunpack.c.l.s4 1983009808
      %v1516 = vunpack.c.0.s8 %v1515
      %v1517 = vlaneseq
      %v1518 = vshrl.u32 %v1517, 7
      %v1519 = vsub.s32 %v1516, %v1518
      %v1520 = vrot.slane %v1506, %v1519
      %v1521 = vcombine.high %v1513, %v1513
      %v1522 = vcombine.high %v1520, %v1520
      %v1524 = vunpack.c.l.s4 1983009808
      %v1525 = vunpack.c.0.s8 %v1524
      %v1526 = vlaneseq
      %v1527 = vshrl.u32 %v1526, 7
      %v1528 = vsub.s32 %v1525, %v1527
      %v1529 = vrot.slane %v1497, %v1528
      %v1530 = vcombine.high %v1529, %v1529
      %1531 = vrot.lane.b32.xlu0 %v1513, 69
      %v1532 = vpop.permute.xlu0 %1531
      %1533 = vrot.lane.b32.xlu0 %v1521, 69
      %v1534 = vpop.permute.xlu0 %1533
      %1535 = vrot.lane.b32.xlu0 %v1520, 69
      %v1536 = vpop.permute.xlu0 %1535
      %1537 = vrot.lane.b32.xlu0 %v1522, 69
      %v1538 = vpop.permute.xlu0 %1537
      %1539 = vrot.lane.b32.xlu0 %v1529, 69
      %v1540 = vpop.permute.xlu0 %1539
      %1541 = vrot.lane.b32.xlu0 %v1530, 69
      %v1542 = vpop.permute.xlu0 %1541
      %vm1543 = vcmask 564224
      %v1544 = vsel %vm1543, %v1532, %v1534
      %v1545 = vsel %vm1543, %v1534, %v1536
      %v1546 = vsel %vm1543, %v1536, %v1538
      %v1547 = vsel %vm1543, %v1538, %v1540
      %v1548 = vsel %vm1543, %v1540, %v1542
      %v1554 = vmul.f32 %v1502, %v1544
      %v1555 = vmul.f32 %v1502, %v1545
      %v1556 = vmul.f32 %v1502, %v1546
      %v1557 = vmul.f32 %v1502, %v1547
      %v1558 = vmul.f32 %v1502, %v1548
      %v1559 = vadd.f32 %v1491, %v1554
      %v1560 = vadd.f32 %v1492, %v1555
      %v1561 = vadd.f32 %v1493, %v1556
      %v1562 = vadd.f32 %v1494, %v1557
      %v1563 = vadd.f32 %v1495, %v1558
      %v1564 = vld [vmem:[#allocation2] sm:$0xff]
      %v1565 = vld [vmem:[#allocation2 + $0x8] sm:$0xf]
      %v1566 = vld [vmem:[%s6] sm:$0x3]
      %1568 = vset.pattern.permute.xlu0 7
      %1569 = vperm.xlu0 %1568, %v1566
      %v1570 = vpop.permute.xlu0 %1569
      %v1574 = vcombine.high %v1564, %v1564
      %v1576 = vunpack.c.l.s4 1983009808
      %v1577 = vunpack.c.0.s8 %v1576
      %v1578 = vlaneseq
      %v1579 = vshrl.u32 %v1578, 7
      %v1580 = vsub.s32 %v1577, %v1579
      %v1581 = vrot.slane %v1564, %v1580
      %v1583 = vunpack.c.l.s4 1983009808
      %v1584 = vunpack.c.0.s8 %v1583
      %v1585 = vlaneseq
      %v1586 = vshrl.u32 %v1585, 7
      %v1587 = vsub.s32 %v1584, %v1586
      %v1588 = vrot.slane %v1574, %v1587
      %v1589 = vcombine.high %v1581, %v1581
      %v1590 = vcombine.high %v1588, %v1588
      %v1592 = vunpack.c.l.s4 1983009808
      %v1593 = vunpack.c.0.s8 %v1592
      %v1594 = vlaneseq
      %v1595 = vshrl.u32 %v1594, 7
      %v1596 = vsub.s32 %v1593, %v1595
      %v1597 = vrot.slane %v1565, %v1596
      %v1598 = vcombine.high %v1597, %v1597
      %1599 = vrot.lane.b32.xlu0 %v1581, 51
      %v1600 = vpop.permute.xlu0 %1599
      %1601 = vrot.lane.b32.xlu0 %v1589, 51
      %v1602 = vpop.permute.xlu0 %1601
      %1603 = vrot.lane.b32.xlu0 %v1588, 51
      %v1604 = vpop.permute.xlu0 %1603
      %1605 = vrot.lane.b32.xlu0 %v1590, 51
      %v1606 = vpop.permute.xlu0 %1605
      %1607 = vrot.lane.b32.xlu0 %v1597, 51
      %v1608 = vpop.permute.xlu0 %1607
      %1609 = vrot.lane.b32.xlu0 %v1598, 51
      %v1610 = vpop.permute.xlu0 %1609
      %vm1611 = vcmask 416768
      %v1612 = vsel %vm1611, %v1600, %v1602
      %v1613 = vsel %vm1611, %v1602, %v1604
      %v1614 = vsel %vm1611, %v1604, %v1606
      %v1615 = vsel %vm1611, %v1606, %v1608
      %v1616 = vsel %vm1611, %v1608, %v1610
      %v1622 = vmul.f32 %v1570, %v1612
      %v1623 = vmul.f32 %v1570, %v1613
      %v1624 = vmul.f32 %v1570, %v1614
      %v1625 = vmul.f32 %v1570, %v1615
      %v1626 = vmul.f32 %v1570, %v1616
      %v1627 = vadd.f32 %v1559, %v1622
      %v1628 = vadd.f32 %v1560, %v1623
      %v1629 = vadd.f32 %v1561, %v1624
      %v1630 = vadd.f32 %v1562, %v1625
      %v1631 = vadd.f32 %v1563, %v1626
      %v1632 = vld [vmem:[#allocation2] sm:$0xff]
      %v1633 = vld [vmem:[#allocation2 + $0x8] sm:$0xf]
      %v1634 = vld [vmem:[%s6] sm:$0x3]
      %1636 = vset.pattern.permute.xlu0 8
      %1637 = vperm.xlu0 %1636, %v1634
      %v1638 = vpop.permute.xlu0 %1637
      %v1642 = vcombine.high %v1632, %v1632
      %v1644 = vunpack.c.l.s4 1983009808
      %v1645 = vunpack.c.0.s8 %v1644
      %v1646 = vlaneseq
      %v1647 = vshrl.u32 %v1646, 7
      %v1648 = vsub.s32 %v1645, %v1647
      %v1649 = vrot.slane %v1632, %v1648
      %v1651 = vunpack.c.l.s4 1983009808
      %v1652 = vunpack.c.0.s8 %v1651
      %v1653 = vlaneseq
      %v1654 = vshrl.u32 %v1653, 7
      %v1655 = vsub.s32 %v1652, %v1654
      %v1656 = vrot.slane %v1642, %v1655
      %v1657 = vcombine.high %v1649, %v1649
      %v1658 = vcombine.high %v1656, %v1656
      %v1660 = vunpack.c.l.s4 1983009808
      %v1661 = vunpack.c.0.s8 %v1660
      %v1662 = vlaneseq
      %v1663 = vshrl.u32 %v1662, 7
      %v1664 = vsub.s32 %v1661, %v1663
      %v1665 = vrot.slane %v1633, %v1664
      %v1666 = vcombine.high %v1665, %v1665
      %1667 = vrot.lane.b32.xlu0 %v1649, 50
      %v1668 = vpop.permute.xlu0 %1667
      %1669 = vrot.lane.b32.xlu0 %v1657, 50
      %v1670 = vpop.permute.xlu0 %1669
      %1671 = vrot.lane.b32.xlu0 %v1656, 50
      %v1672 = vpop.permute.xlu0 %1671
      %1673 = vrot.lane.b32.xlu0 %v1658, 50
      %v1674 = vpop.permute.xlu0 %1673
      %1675 = vrot.lane.b32.xlu0 %v1665, 50
      %v1676 = vpop.permute.xlu0 %1675
      %1677 = vrot.lane.b32.xlu0 %v1666, 50
      %v1678 = vpop.permute.xlu0 %1677
      %vm1679 = vcmask 408576
      %v1680 = vsel %vm1679, %v1668, %v1670
      %v1681 = vsel %vm1679, %v1670, %v1672
      %v1682 = vsel %vm1679, %v1672, %v1674
      %v1683 = vsel %vm1679, %v1674, %v1676
      %v1684 = vsel %vm1679, %v1676, %v1678
      %v1690 = vmul.f32 %v1638, %v1680
      %v1691 = vmul.f32 %v1638, %v1681
      %v1692 = vmul.f32 %v1638, %v1682
      %v1693 = vmul.f32 %v1638, %v1683
      %v1694 = vmul.f32 %v1638, %v1684
      %v1695 = vadd.f32 %v1627, %v1690
      %v1696 = vadd.f32 %v1628, %v1691
      %v1697 = vadd.f32 %v1629, %v1692
      %v1698 = vadd.f32 %v1630, %v1693
      %v1699 = vadd.f32 %v1631, %v1694
      %v1700 = vld [vmem:[#allocation2] sm:$0xff]
      %v1701 = vld [vmem:[#allocation2 + $0x8] sm:$0xf]
      %v1702 = vld [vmem:[%s6] sm:$0x3]
      %1704 = vset.pattern.permute.xlu0 9
      %1705 = vperm.xlu0 %1704, %v1702
      %v1706 = vpop.permute.xlu0 %1705
      %v1710 = vcombine.high %v1700, %v1700
      %v1712 = vunpack.c.l.s4 1983009808
      %v1713 = vunpack.c.0.s8 %v1712
      %v1714 = vlaneseq
      %v1715 = vshrl.u32 %v1714, 7
      %v1716 = vsub.s32 %v1713, %v1715
      %v1717 = vrot.slane %v1700, %v1716
      %v1719 = vunpack.c.l.s4 1983009808
      %v1720 = vunpack.c.0.s8 %v1719
      %v1721 = vlaneseq
      %v1722 = vshrl.u32 %v1721, 7
      %v1723 = vsub.s32 %v1720, %v1722
      %v1724 = vrot.slane %v1710, %v1723
      %v1725 = vcombine.high %v1717, %v1717
      %v1726 = vcombine.high %v1724, %v1724
      %v1728 = vunpack.c.l.s4 1983009808
      %v1729 = vunpack.c.0.s8 %v1728
      %v1730 = vlaneseq
      %v1731 = vshrl.u32 %v1730, 7
      %v1732 = vsub.s32 %v1729, %v1731
      %v1733 = vrot.slane %v1701, %v1732
      %v1734 = vcombine.high %v1733, %v1733
      %1735 = vrot.lane.b32.xlu0 %v1717, 49
      %v1736 = vpop.permute.xlu0 %1735
      %1737 = vrot.lane.b32.xlu0 %v1725, 49
      %v1738 = vpop.permute.xlu0 %1737
      %1739 = vrot.lane.b32.xlu0 %v1724, 49
      %v1740 = vpop.permute.xlu0 %1739
      %1741 = vrot.lane.b32.xlu0 %v1726, 49
      %v1742 = vpop.permute.xlu0 %1741
      %1743 = vrot.lane.b32.xlu0 %v1733, 49
      %v1744 = vpop.permute.xlu0 %1743
      %1745 = vrot.lane.b32.xlu0 %v1734, 49
      %v1746 = vpop.permute.xlu0 %1745
      %vm1747 = vcmask 400384
      %v1748 = vsel %vm1747, %v1736, %v1738
      %v1749 = vsel %vm1747, %v1738, %v1740
      %v1750 = vsel %vm1747, %v1740, %v1742
      %v1751 = vsel %vm1747, %v1742, %v1744
      %v1752 = vsel %vm1747, %v1744, %v1746
      %v1758 = vmul.f32 %v1706, %v1748
      %v1759 = vmul.f32 %v1706, %v1749
      %v1760 = vmul.f32 %v1706, %v1750
      %v1761 = vmul.f32 %v1706, %v1751
      %v1762 = vmul.f32 %v1706, %v1752
      %v1763 = vadd.f32 %v1695, %v1758
      %v1764 = vadd.f32 %v1696, %v1759
      %v1765 = vadd.f32 %v1697, %v1760
      %v1766 = vadd.f32 %v1698, %v1761
      %v1767 = vadd.f32 %v1699, %v1762
      %v1768 = vld [vmem:[#allocation2] sm:$0xff]
      %v1769 = vld [vmem:[#allocation2 + $0x8] sm:$0xf]
      %v1770 = vld [vmem:[%s6] sm:$0x3]
      %1772 = vset.pattern.permute.xlu0 10
      %1773 = vperm.xlu0 %1772, %v1770
      %v1774 = vpop.permute.xlu0 %1773
      %v1778 = vcombine.high %v1768, %v1768
      %v1780 = vunpack.c.l.s4 1983009808
      %v1781 = vunpack.c.0.s8 %v1780
      %v1782 = vlaneseq
      %v1783 = vshrl.u32 %v1782, 7
      %v1784 = vsub.s32 %v1781, %v1783
      %v1785 = vrot.slane %v1768, %v1784
      %v1787 = vunpack.c.l.s4 1983009808
      %v1788 = vunpack.c.0.s8 %v1787
      %v1789 = vlaneseq
      %v1790 = vshrl.u32 %v1789, 7
      %v1791 = vsub.s32 %v1788, %v1790
      %v1792 = vrot.slane %v1778, %v1791
      %v1793 = vcombine.high %v1785, %v1785
      %v1794 = vcombine.high %v1792, %v1792
      %v1796 = vunpack.c.l.s4 1983009808
      %v1797 = vunpack.c.0.s8 %v1796
      %v1798 = vlaneseq
      %v1799 = vshrl.u32 %v1798, 7
      %v1800 = vsub.s32 %v1797, %v1799
      %v1801 = vrot.slane %v1769, %v1800
      %v1802 = vcombine.high %v1801, %v1801
      %1803 = vrot.lane.b32.xlu0 %v1785, 48
      %v1804 = vpop.permute.xlu0 %1803
      %1805 = vrot.lane.b32.xlu0 %v1793, 48
      %v1806 = vpop.permute.xlu0 %1805
      %1807 = vrot.lane.b32.xlu0 %v1792, 48
      %v1808 = vpop.permute.xlu0 %1807
      %1809 = vrot.lane.b32.xlu0 %v1794, 48
      %v1810 = vpop.permute.xlu0 %1809
      %1811 = vrot.lane.b32.xlu0 %v1801, 48
      %v1812 = vpop.permute.xlu0 %1811
      %1813 = vrot.lane.b32.xlu0 %v1802, 48
      %v1814 = vpop.permute.xlu0 %1813
      %vm1815 = vcmask 392192
      %v1816 = vsel %vm1815, %v1804, %v1806
      %v1817 = vsel %vm1815, %v1806, %v1808
      %v1818 = vsel %vm1815, %v1808, %v1810
      %v1819 = vsel %vm1815, %v1810, %v1812
      %v1820 = vsel %vm1815, %v1812, %v1814
      %v1826 = vmul.f32 %v1774, %v1816
      %v1827 = vmul.f32 %v1774, %v1817
      %v1828 = vmul.f32 %v1774, %v1818
      %v1829 = vmul.f32 %v1774, %v1819
      %v1830 = vmul.f32 %v1774, %v1820
      %v1831 = vadd.f32 %v1763, %v1826
      %v1832 = vadd.f32 %v1764, %v1827
      %v1833 = vadd.f32 %v1765, %v1828
      %v1834 = vadd.f32 %v1766, %v1829
      %v1835 = vadd.f32 %v1767, %v1830
      %v1836 = vld [vmem:[#allocation2] sm:$0xff]
      %v1837 = vld [vmem:[#allocation2 + $0x8] sm:$0xf]
      %v1838 = vld [vmem:[%s6] sm:$0x3]
      %1840 = vset.pattern.permute.xlu0 11
      %1841 = vperm.xlu0 %1840, %v1838
      %v1842 = vpop.permute.xlu0 %1841
      %v1846 = vcombine.high %v1836, %v1836
      %v1848 = vunpack.c.l.s4 1983009808
      %v1849 = vunpack.c.0.s8 %v1848
      %v1850 = vlaneseq
      %v1851 = vshrl.u32 %v1850, 7
      %v1852 = vsub.s32 %v1849, %v1851
      %v1853 = vrot.slane %v1836, %v1852
      %v1855 = vunpack.c.l.s4 1983009808
      %v1856 = vunpack.c.0.s8 %v1855
      %v1857 = vlaneseq
      %v1858 = vshrl.u32 %v1857, 7
      %v1859 = vsub.s32 %v1856, %v1858
      %v1860 = vrot.slane %v1846, %v1859
      %v1861 = vcombine.high %v1853, %v1853
      %v1862 = vcombine.high %v1860, %v1860
      %v1864 = vunpack.c.l.s4 1983009808
      %v1865 = vunpack.c.0.s8 %v1864
      %v1866 = vlaneseq
      %v1867 = vshrl.u32 %v1866, 7
      %v1868 = vsub.s32 %v1865, %v1867
      %v1869 = vrot.slane %v1837, %v1868
      %v1870 = vcombine.high %v1869, %v1869
      %1871 = vrot.lane.b32.xlu0 %v1853, 47
      %v1872 = vpop.permute.xlu0 %1871
      %1873 = vrot.lane.b32.xlu0 %v1861, 47
      %v1874 = vpop.permute.xlu0 %1873
      %1875 = vrot.lane.b32.xlu0 %v1860, 47
      %v1876 = vpop.permute.xlu0 %1875
      %1877 = vrot.lane.b32.xlu0 %v1862, 47
      %v1878 = vpop.permute.xlu0 %1877
      %1879 = vrot.lane.b32.xlu0 %v1869, 47
      %v1880 = vpop.permute.xlu0 %1879
      %1881 = vrot.lane.b32.xlu0 %v1870, 47
      %v1882 = vpop.permute.xlu0 %1881
      %vm1883 = vcmask 384000
      %v1884 = vsel %vm1883, %v1872, %v1874
      %v1885 = vsel %vm1883, %v1874, %v1876
      %v1886 = vsel %vm1883, %v1876, %v1878
      %v1887 = vsel %vm1883, %v1878, %v1880
      %v1888 = vsel %vm1883, %v1880, %v1882
      %v1894 = vmul.f32 %v1842, %v1884
      %v1895 = vmul.f32 %v1842, %v1885
      %v1896 = vmul.f32 %v1842, %v1886
      %v1897 = vmul.f32 %v1842, %v1887
      %v1898 = vmul.f32 %v1842, %v1888
      %v1899 = vadd.f32 %v1831, %v1894
      %v1900 = vadd.f32 %v1832, %v1895
      %v1901 = vadd.f32 %v1833, %v1896
      %v1902 = vadd.f32 %v1834, %v1897
      %v1903 = vadd.f32 %v1835, %v1898
      %v1904 = vld [vmem:[#allocation2] sm:$0xff]
      %v1905 = vld [vmem:[#allocation2 + $0x8] sm:$0xf]
      %v1906 = vld [vmem:[%s6] sm:$0x3]
      %1908 = vset.pattern.permute.xlu0 12
      %1909 = vperm.xlu0 %1908, %v1906
      %v1910 = vpop.permute.xlu0 %1909
      %v1914 = vcombine.high %v1904, %v1904
      %v1916 = vunpack.c.l.s4 1983009808
      %v1917 = vunpack.c.0.s8 %v1916
      %v1918 = vlaneseq
      %v1919 = vshrl.u32 %v1918, 7
      %v1920 = vsub.s32 %v1917, %v1919
      %v1921 = vrot.slane %v1904, %v1920
      %v1923 = vunpack.c.l.s4 1983009808
      %v1924 = vunpack.c.0.s8 %v1923
      %v1925 = vlaneseq
      %v1926 = vshrl.u32 %v1925, 7
      %v1927 = vsub.s32 %v1924, %v1926
      %v1928 = vrot.slane %v1914, %v1927
      %v1929 = vcombine.high %v1921, %v1921
      %v1930 = vcombine.high %v1928, %v1928
      %v1932 = vunpack.c.l.s4 1983009808
      %v1933 = vunpack.c.0.s8 %v1932
      %v1934 = vlaneseq
      %v1935 = vshrl.u32 %v1934, 7
      %v1936 = vsub.s32 %v1933, %v1935
      %v1937 = vrot.slane %v1905, %v1936
      %v1938 = vcombine.high %v1937, %v1937
      %1939 = vrot.lane.b32.xlu0 %v1921, 46
      %v1940 = vpop.permute.xlu0 %1939
      %1941 = vrot.lane.b32.xlu0 %v1929, 46
      %v1942 = vpop.permute.xlu0 %1941
      %1943 = vrot.lane.b32.xlu0 %v1928, 46
      %v1944 = vpop.permute.xlu0 %1943
      %1945 = vrot.lane.b32.xlu0 %v1930, 46
      %v1946 = vpop.permute.xlu0 %1945
      %1947 = vrot.lane.b32.xlu0 %v1937, 46
      %v1948 = vpop.permute.xlu0 %1947
      %1949 = vrot.lane.b32.xlu0 %v1938, 46
      %v1950 = vpop.permute.xlu0 %1949
      %vm1951 = vcmask 375808
      %v1952 = vsel %vm1951, %v1940, %v1942
      %v1953 = vsel %vm1951, %v1942, %v1944
      %v1954 = vsel %vm1951, %v1944, %v1946
      %v1955 = vsel %vm1951, %v1946, %v1948
      %v1956 = vsel %vm1951, %v1948, %v1950
      %v1962 = vmul.f32 %v1910, %v1952
      %v1963 = vmul.f32 %v1910, %v1953
      %v1964 = vmul.f32 %v1910, %v1954
      %v1965 = vmul.f32 %v1910, %v1955
      %v1966 = vmul.f32 %v1910, %v1956
      %v1967 = vadd.f32 %v1899, %v1962
      %v1968 = vadd.f32 %v1900, %v1963
      %v1969 = vadd.f32 %v1901, %v1964
      %v1970 = vadd.f32 %v1902, %v1965
      %v1971 = vadd.f32 %v1903, %v1966
      %v1972 = vld [vmem:[#allocation2] sm:$0xff]
      %v1973 = vld [vmem:[#allocation2 + $0x8] sm:$0xf]
      %v1974 = vld [vmem:[%s6] sm:$0x3]
      %1976 = vset.pattern.permute.xlu0 13
      %1977 = vperm.xlu0 %1976, %v1974
      %v1978 = vpop.permute.xlu0 %1977
      %v1982 = vcombine.high %v1972, %v1972
      %v1984 = vunpack.c.l.s4 1983009808
      %v1985 = vunpack.c.0.s8 %v1984
      %v1986 = vlaneseq
      %v1987 = vshrl.u32 %v1986, 7
      %v1988 = vsub.s32 %v1985, %v1987
      %v1989 = vrot.slane %v1972, %v1988
      %v1991 = vunpack.c.l.s4 1983009808
      %v1992 = vunpack.c.0.s8 %v1991
      %v1993 = vlaneseq
      %v1994 = vshrl.u32 %v1993, 7
      %v1995 = vsub.s32 %v1992, %v1994
      %v1996 = vrot.slane %v1982, %v1995
      %v1997 = vcombine.high %v1989, %v1989
      %v1998 = vcombine.high %v1996, %v1996
      %v2000 = vunpack.c.l.s4 1983009808
      %v2001 = vunpack.c.0.s8 %v2000
      %v2002 = vlaneseq
      %v2003 = vshrl.u32 %v2002, 7
      %v2004 = vsub.s32 %v2001, %v2003
      %v2005 = vrot.slane %v1973, %v2004
      %v2006 = vcombine.high %v2005, %v2005
      %2007 = vrot.lane.b32.xlu0 %v1989, 45
      %v2008 = vpop.permute.xlu0 %2007
      %2009 = vrot.lane.b32.xlu0 %v1997, 45
      %v2010 = vpop.permute.xlu0 %2009
      %2011 = vrot.lane.b32.xlu0 %v1996, 45
      %v2012 = vpop.permute.xlu0 %2011
      %2013 = vrot.lane.b32.xlu0 %v1998, 45
      %v2014 = vpop.permute.xlu0 %2013
      %2015 = vrot.lane.b32.xlu0 %v2005, 45
      %v2016 = vpop.permute.xlu0 %2015
      %2017 = vrot.lane.b32.xlu0 %v2006, 45
      %v2018 = vpop.permute.xlu0 %2017
      %vm2019 = vcmask 367616
      %v2020 = vsel %vm2019, %v2008, %v2010
      %v2021 = vsel %vm2019, %v2010, %v2012
      %v2022 = vsel %vm2019, %v2012, %v2014
      %v2023 = vsel %vm2019, %v2014, %v2016
      %v2024 = vsel %vm2019, %v2016, %v2018
      %v2030 = vmul.f32 %v1978, %v2020
      %v2031 = vmul.f32 %v1978, %v2021
      %v2032 = vmul.f32 %v1978, %v2022
      %v2033 = vmul.f32 %v1978, %v2023
      %v2034 = vmul.f32 %v1978, %v2024
      %v2035 = vadd.f32 %v1967, %v2030
      %v2036 = vadd.f32 %v1968, %v2031
      %v2037 = vadd.f32 %v1969, %v2032
      %v2038 = vadd.f32 %v1970, %v2033
      %v2039 = vadd.f32 %v1971, %v2034
      %v2040 = vld [vmem:[#allocation2] sm:$0xff]
      %v2041 = vld [vmem:[#allocation2 + $0x8] sm:$0xf]
      %v2042 = vld [vmem:[%s6] sm:$0x3]
      %2044 = vset.pattern.permute.xlu0 14
      %2045 = vperm.xlu0 %2044, %v2042
      %v2046 = vpop.permute.xlu0 %2045
      %v2050 = vcombine.high %v2040, %v2040
      %v2052 = vunpack.c.l.s4 1983009808
      %v2053 = vunpack.c.0.s8 %v2052
      %v2054 = vlaneseq
      %v2055 = vshrl.u32 %v2054, 7
      %v2056 = vsub.s32 %v2053, %v2055
      %v2057 = vrot.slane %v2040, %v2056
      %v2059 = vunpack.c.l.s4 1983009808
      %v2060 = vunpack.c.0.s8 %v2059
      %v2061 = vlaneseq
      %v2062 = vshrl.u32 %v2061, 7
      %v2063 = vsub.s32 %v2060, %v2062
      %v2064 = vrot.slane %v2050, %v2063
      %v2065 = vcombine.high %v2057, %v2057
      %v2066 = vcombine.high %v2064, %v2064
      %v2068 = vunpack.c.l.s4 1983009808
      %v2069 = vunpack.c.0.s8 %v2068
      %v2070 = vlaneseq
      %v2071 = vshrl.u32 %v2070, 7
      %v2072 = vsub.s32 %v2069, %v2071
      %v2073 = vrot.slane %v2041, %v2072
      %v2074 = vcombine.high %v2073, %v2073
      %2075 = vrot.lane.b32.xlu0 %v2057, 27
      %v2076 = vpop.permute.xlu0 %2075
      %2077 = vrot.lane.b32.xlu0 %v2065, 27
      %v2078 = vpop.permute.xlu0 %2077
      %2079 = vrot.lane.b32.xlu0 %v2064, 27
      %v2080 = vpop.permute.xlu0 %2079
      %2081 = vrot.lane.b32.xlu0 %v2066, 27
      %v2082 = vpop.permute.xlu0 %2081
      %2083 = vrot.lane.b32.xlu0 %v2073, 27
      %v2084 = vpop.permute.xlu0 %2083
      %2085 = vrot.lane.b32.xlu0 %v2074, 27
      %v2086 = vpop.permute.xlu0 %2085
      %vm2087 = vcmask 220160
      %v2088 = vsel %vm2087, %v2076, %v2078
      %v2089 = vsel %vm2087, %v2078, %v2080
      %v2090 = vsel %vm2087, %v2080, %v2082
      %v2091 = vsel %vm2087, %v2082, %v2084
      %v2092 = vsel %vm2087, %v2084, %v2086
      %v2098 = vmul.f32 %v2046, %v2088
      %v2099 = vmul.f32 %v2046, %v2089
      %v2100 = vmul.f32 %v2046, %v2090
      %v2101 = vmul.f32 %v2046, %v2091
      %v2102 = vmul.f32 %v2046, %v2092
      %v2103 = vadd.f32 %v2035, %v2098
      %v2104 = vadd.f32 %v2036, %v2099
      %v2105 = vadd.f32 %v2037, %v2100
      %v2106 = vadd.f32 %v2038, %v2101
      %v2107 = vadd.f32 %v2039, %v2102
      %v2108 = vld [vmem:[#allocation2] sm:$0xff]
      %v2109 = vld [vmem:[#allocation2 + $0x8] sm:$0xf]
      %v2110 = vld [vmem:[%s6] sm:$0x3]
      %2112 = vset.pattern.permute.xlu0 15
      %2113 = vperm.xlu0 %2112, %v2110
      %v2114 = vpop.permute.xlu0 %2113
      %v2118 = vcombine.high %v2108, %v2108
      %v2120 = vunpack.c.l.s4 1983009808
      %v2121 = vunpack.c.0.s8 %v2120
      %v2122 = vlaneseq
      %v2123 = vshrl.u32 %v2122, 7
      %v2124 = vsub.s32 %v2121, %v2123
      %v2125 = vrot.slane %v2108, %v2124
      %v2127 = vunpack.c.l.s4 1983009808
      %v2128 = vunpack.c.0.s8 %v2127
      %v2129 = vlaneseq
      %v2130 = vshrl.u32 %v2129, 7
      %v2131 = vsub.s32 %v2128, %v2130
      %v2132 = vrot.slane %v2118, %v2131
      %v2133 = vcombine.high %v2125, %v2125
      %v2134 = vcombine.high %v2132, %v2132
      %v2136 = vunpack.c.l.s4 1983009808
      %v2137 = vunpack.c.0.s8 %v2136
      %v2138 = vlaneseq
      %v2139 = vshrl.u32 %v2138, 7
      %v2140 = vsub.s32 %v2137, %v2139
      %v2141 = vrot.slane %v2109, %v2140
      %v2142 = vcombine.high %v2141, %v2141
      %2143 = vrot.lane.b32.xlu0 %v2125, 26
      %v2144 = vpop.permute.xlu0 %2143
      %2145 = vrot.lane.b32.xlu0 %v2133, 26
      %v2146 = vpop.permute.xlu0 %2145
      %2147 = vrot.lane.b32.xlu0 %v2132, 26
      %v2148 = vpop.permute.xlu0 %2147
      %2149 = vrot.lane.b32.xlu0 %v2134, 26
      %v2150 = vpop.permute.xlu0 %2149
      %2151 = vrot.lane.b32.xlu0 %v2141, 26
      %v2152 = vpop.permute.xlu0 %2151
      %2153 = vrot.lane.b32.xlu0 %v2142, 26
      %v2154 = vpop.permute.xlu0 %2153
      %vm2155 = vcmask 211968
      %v2156 = vsel %vm2155, %v2144, %v2146
      %v2157 = vsel %vm2155, %v2146, %v2148
      %v2158 = vsel %vm2155, %v2148, %v2150
      %v2159 = vsel %vm2155, %v2150, %v2152
      %v2160 = vsel %vm2155, %v2152, %v2154
      %v2166 = vmul.f32 %v2114, %v2156
      %v2167 = vmul.f32 %v2114, %v2157
      %v2168 = vmul.f32 %v2114, %v2158
      %v2169 = vmul.f32 %v2114, %v2159
      %v2170 = vmul.f32 %v2114, %v2160
      %v2171 = vadd.f32 %v2103, %v2166
      %v2172 = vadd.f32 %v2104, %v2167
      %v2173 = vadd.f32 %v2105, %v2168
      %v2174 = vadd.f32 %v2106, %v2169
      %v2175 = vadd.f32 %v2107, %v2170
      %v2176 = vld [vmem:[#allocation2] sm:$0xff]
      %v2177 = vld [vmem:[#allocation2 + $0x8] sm:$0xf]
      %v2178 = vld [vmem:[%s6] sm:$0x3]
      %2180 = vset.pattern.permute.xlu0 16
      %2181 = vperm.xlu0 %2180, %v2178
      %v2182 = vpop.permute.xlu0 %2181
      %v2186 = vcombine.high %v2176, %v2176
      %v2188 = vunpack.c.l.s4 1983009808
      %v2189 = vunpack.c.0.s8 %v2188
      %v2190 = vlaneseq
      %v2191 = vshrl.u32 %v2190, 7
      %v2192 = vsub.s32 %v2189, %v2191
      %v2193 = vrot.slane %v2176, %v2192
      %v2195 = vunpack.c.l.s4 1983009808
      %v2196 = vunpack.c.0.s8 %v2195
      %v2197 = vlaneseq
      %v2198 = vshrl.u32 %v2197, 7
      %v2199 = vsub.s32 %v2196, %v2198
      %v2200 = vrot.slane %v2186, %v2199
      %v2201 = vcombine.high %v2193, %v2193
      %v2202 = vcombine.high %v2200, %v2200
      %v2204 = vunpack.c.l.s4 1983009808
      %v2205 = vunpack.c.0.s8 %v2204
      %v2206 = vlaneseq
      %v2207 = vshrl.u32 %v2206, 7
      %v2208 = vsub.s32 %v2205, %v2207
      %v2209 = vrot.slane %v2177, %v2208
      %v2210 = vcombine.high %v2209, %v2209
      %2211 = vrot.lane.b32.xlu0 %v2193, 25
      %v2212 = vpop.permute.xlu0 %2211
      %2213 = vrot.lane.b32.xlu0 %v2201, 25
      %v2214 = vpop.permute.xlu0 %2213
      %2215 = vrot.lane.b32.xlu0 %v2200, 25
      %v2216 = vpop.permute.xlu0 %2215
      %2217 = vrot.lane.b32.xlu0 %v2202, 25
      %v2218 = vpop.permute.xlu0 %2217
      %2219 = vrot.lane.b32.xlu0 %v2209, 25
      %v2220 = vpop.permute.xlu0 %2219
      %2221 = vrot.lane.b32.xlu0 %v2210, 25
      %v2222 = vpop.permute.xlu0 %2221
      %vm2223 = vcmask 203776
      %v2224 = vsel %vm2223, %v2212, %v2214
      %v2225 = vsel %vm2223, %v2214, %v2216
      %v2226 = vsel %vm2223, %v2216, %v2218
      %v2227 = vsel %vm2223, %v2218, %v2220
      %v2228 = vsel %vm2223, %v2220, %v2222
      %v2234 = vmul.f32 %v2182, %v2224
      %v2235 = vmul.f32 %v2182, %v2225
      %v2236 = vmul.f32 %v2182, %v2226
      %v2237 = vmul.f32 %v2182, %v2227
      %v2238 = vmul.f32 %v2182, %v2228
      %v2239 = vadd.f32 %v2171, %v2234
      %v2240 = vadd.f32 %v2172, %v2235
      %v2241 = vadd.f32 %v2173, %v2236
      %v2242 = vadd.f32 %v2174, %v2237
      %v2243 = vadd.f32 %v2175, %v2238
      %v2244 = vld [vmem:[#allocation2] sm:$0xff]
      %v2245 = vld [vmem:[#allocation2 + $0x8] sm:$0xf]
      %v2246 = vld [vmem:[%s6] sm:$0x3]
      %2248 = vset.pattern.permute.xlu0 17
      %2249 = vperm.xlu0 %2248, %v2246
      %v2250 = vpop.permute.xlu0 %2249
      %v2254 = vcombine.high %v2244, %v2244
      %v2256 = vunpack.c.l.s4 1983009808
      %v2257 = vunpack.c.0.s8 %v2256
      %v2258 = vlaneseq
      %v2259 = vshrl.u32 %v2258, 7
      %v2260 = vsub.s32 %v2257, %v2259
      %v2261 = vrot.slane %v2244, %v2260
      %v2263 = vunpack.c.l.s4 1983009808
      %v2264 = vunpack.c.0.s8 %v2263
      %v2265 = vlaneseq
      %v2266 = vshrl.u32 %v2265, 7
      %v2267 = vsub.s32 %v2264, %v2266
      %v2268 = vrot.slane %v2254, %v2267
      %v2269 = vcombine.high %v2261, %v2261
      %v2270 = vcombine.high %v2268, %v2268
      %v2272 = vunpack.c.l.s4 1983009808
      %v2273 = vunpack.c.0.s8 %v2272
      %v2274 = vlaneseq
      %v2275 = vshrl.u32 %v2274, 7
      %v2276 = vsub.s32 %v2273, %v2275
      %v2277 = vrot.slane %v2245, %v2276
      %v2278 = vcombine.high %v2277, %v2277
      %2279 = vrot.lane.b32.xlu0 %v2261, 24
      %v2280 = vpop.permute.xlu0 %2279
      %2281 = vrot.lane.b32.xlu0 %v2269, 24
      %v2282 = vpop.permute.xlu0 %2281
      %2283 = vrot.lane.b32.xlu0 %v2268, 24
      %v2284 = vpop.permute.xlu0 %2283
      %2285 = vrot.lane.b32.xlu0 %v2270, 24
      %v2286 = vpop.permute.xlu0 %2285
      %2287 = vrot.lane.b32.xlu0 %v2277, 24
      %v2288 = vpop.permute.xlu0 %2287
      %2289 = vrot.lane.b32.xlu0 %v2278, 24
      %v2290 = vpop.permute.xlu0 %2289
      %vm2291 = vcmask 195584
      %v2292 = vsel %vm2291, %v2280, %v2282
      %v2293 = vsel %vm2291, %v2282, %v2284
      %v2294 = vsel %vm2291, %v2284, %v2286
      %v2295 = vsel %vm2291, %v2286, %v2288
      %v2296 = vsel %vm2291, %v2288, %v2290
      %v2302 = vmul.f32 %v2250, %v2292
      %v2303 = vmul.f32 %v2250, %v2293
      %v2304 = vmul.f32 %v2250, %v2294
      %v2305 = vmul.f32 %v2250, %v2295
      %v2306 = vmul.f32 %v2250, %v2296
      %v2307 = vadd.f32 %v2239, %v2302
      %v2308 = vadd.f32 %v2240, %v2303
      %v2309 = vadd.f32 %v2241, %v2304
      %v2310 = vadd.f32 %v2242, %v2305
      %v2311 = vadd.f32 %v2243, %v2306
      %v2312 = vld [vmem:[#allocation2] sm:$0xff]
      %v2313 = vld [vmem:[#allocation2 + $0x8] sm:$0xf]
      %v2314 = vld [vmem:[%s6] sm:$0x3]
      %2316 = vset.pattern.permute.xlu0 18
      %2317 = vperm.xlu0 %2316, %v2314
      %v2318 = vpop.permute.xlu0 %2317
      %v2322 = vcombine.high %v2312, %v2312
      %v2324 = vunpack.c.l.s4 1983009808
      %v2325 = vunpack.c.0.s8 %v2324
      %v2326 = vlaneseq
      %v2327 = vshrl.u32 %v2326, 7
      %v2328 = vsub.s32 %v2325, %v2327
      %v2329 = vrot.slane %v2312, %v2328
      %v2331 = vunpack.c.l.s4 1983009808
      %v2332 = vunpack.c.0.s8 %v2331
      %v2333 = vlaneseq
      %v2334 = vshrl.u32 %v2333, 7
      %v2335 = vsub.s32 %v2332, %v2334
      %v2336 = vrot.slane %v2322, %v2335
      %v2337 = vcombine.high %v2329, %v2329
      %v2338 = vcombine.high %v2336, %v2336
      %v2340 = vunpack.c.l.s4 1983009808
      %v2341 = vunpack.c.0.s8 %v2340
      %v2342 = vlaneseq
      %v2343 = vshrl.u32 %v2342, 7
      %v2344 = vsub.s32 %v2341, %v2343
      %v2345 = vrot.slane %v2313, %v2344
      %v2346 = vcombine.high %v2345, %v2345
      %2347 = vrot.lane.b32.xlu0 %v2329, 23
      %v2348 = vpop.permute.xlu0 %2347
      %2349 = vrot.lane.b32.xlu0 %v2337, 23
      %v2350 = vpop.permute.xlu0 %2349
      %2351 = vrot.lane.b32.xlu0 %v2336, 23
      %v2352 = vpop.permute.xlu0 %2351
      %2353 = vrot.lane.b32.xlu0 %v2338, 23
      %v2354 = vpop.permute.xlu0 %2353
      %2355 = vrot.lane.b32.xlu0 %v2345, 23
      %v2356 = vpop.permute.xlu0 %2355
      %2357 = vrot.lane.b32.xlu0 %v2346, 23
      %v2358 = vpop.permute.xlu0 %2357
      %vm2359 = vcmask 187392
      %v2360 = vsel %vm2359, %v2348, %v2350
      %v2361 = vsel %vm2359, %v2350, %v2352
      %v2362 = vsel %vm2359, %v2352, %v2354
      %v2363 = vsel %vm2359, %v2354, %v2356
      %v2364 = vsel %vm2359, %v2356, %v2358
      %v2370 = vmul.f32 %v2318, %v2360
      %v2371 = vmul.f32 %v2318, %v2361
      %v2372 = vmul.f32 %v2318, %v2362
      %v2373 = vmul.f32 %v2318, %v2363
      %v2374 = vmul.f32 %v2318, %v2364
      %v2375 = vadd.f32 %v2307, %v2370
      %v2376 = vadd.f32 %v2308, %v2371
      %v2377 = vadd.f32 %v2309, %v2372
      %v2378 = vadd.f32 %v2310, %v2373
      %v2379 = vadd.f32 %v2311, %v2374
      %v2380 = vld [vmem:[#allocation2] sm:$0xff]
      %v2381 = vld [vmem:[#allocation2 + $0x8] sm:$0xf]
      %v2382 = vld [vmem:[%s6] sm:$0x3]
      %2384 = vset.pattern.permute.xlu0 19
      %2385 = vperm.xlu0 %2384, %v2382
      %v2386 = vpop.permute.xlu0 %2385
      %v2390 = vcombine.high %v2380, %v2380
      %v2392 = vunpack.c.l.s4 1983009808
      %v2393 = vunpack.c.0.s8 %v2392
      %v2394 = vlaneseq
      %v2395 = vshrl.u32 %v2394, 7
      %v2396 = vsub.s32 %v2393, %v2395
      %v2397 = vrot.slane %v2380, %v2396
      %v2399 = vunpack.c.l.s4 1983009808
      %v2400 = vunpack.c.0.s8 %v2399
      %v2401 = vlaneseq
      %v2402 = vshrl.u32 %v2401, 7
      %v2403 = vsub.s32 %v2400, %v2402
      %v2404 = vrot.slane %v2390, %v2403
      %v2405 = vcombine.high %v2397, %v2397
      %v2406 = vcombine.high %v2404, %v2404
      %v2408 = vunpack.c.l.s4 1983009808
      %v2409 = vunpack.c.0.s8 %v2408
      %v2410 = vlaneseq
      %v2411 = vshrl.u32 %v2410, 7
      %v2412 = vsub.s32 %v2409, %v2411
      %v2413 = vrot.slane %v2381, %v2412
      %v2414 = vcombine.high %v2413, %v2413
      %2415 = vrot.lane.b32.xlu0 %v2397, 22
      %v2416 = vpop.permute.xlu0 %2415
      %2417 = vrot.lane.b32.xlu0 %v2405, 22
      %v2418 = vpop.permute.xlu0 %2417
      %2419 = vrot.lane.b32.xlu0 %v2404, 22
      %v2420 = vpop.permute.xlu0 %2419
      %2421 = vrot.lane.b32.xlu0 %v2406, 22
      %v2422 = vpop.permute.xlu0 %2421
      %2423 = vrot.lane.b32.xlu0 %v2413, 22
      %v2424 = vpop.permute.xlu0 %2423
      %2425 = vrot.lane.b32.xlu0 %v2414, 22
      %v2426 = vpop.permute.xlu0 %2425
      %vm2427 = vcmask 179200
      %v2428 = vsel %vm2427, %v2416, %v2418
      %v2429 = vsel %vm2427, %v2418, %v2420
      %v2430 = vsel %vm2427, %v2420, %v2422
      %v2431 = vsel %vm2427, %v2422, %v2424
      %v2432 = vsel %vm2427, %v2424, %v2426
      %v2438 = vmul.f32 %v2386, %v2428
      %v2439 = vmul.f32 %v2386, %v2429
      %v2440 = vmul.f32 %v2386, %v2430
      %v2441 = vmul.f32 %v2386, %v2431
      %v2442 = vmul.f32 %v2386, %v2432
      %v2443 = vadd.f32 %v2375, %v2438
      %v2444 = vadd.f32 %v2376, %v2439
      %v2445 = vadd.f32 %v2377, %v2440
      %v2446 = vadd.f32 %v2378, %v2441
      %v2447 = vadd.f32 %v2379, %v2442
      %v2448 = vld [vmem:[#allocation2] sm:$0xff]
      %v2449 = vld [vmem:[#allocation2 + $0x8] sm:$0xf]
      %v2450 = vld [vmem:[%s6] sm:$0x3]
      %2452 = vset.pattern.permute.xlu0 20
      %2453 = vperm.xlu0 %2452, %v2450
      %v2454 = vpop.permute.xlu0 %2453
      %v2458 = vcombine.high %v2448, %v2448
      %v2460 = vunpack.c.l.s4 1983009808
      %v2461 = vunpack.c.0.s8 %v2460
      %v2462 = vlaneseq
      %v2463 = vshrl.u32 %v2462, 7
      %v2464 = vsub.s32 %v2461, %v2463
      %v2465 = vrot.slane %v2448, %v2464
      %v2467 = vunpack.c.l.s4 1983009808
      %v2468 = vunpack.c.0.s8 %v2467
      %v2469 = vlaneseq
      %v2470 = vshrl.u32 %v2469, 7
      %v2471 = vsub.s32 %v2468, %v2470
      %v2472 = vrot.slane %v2458, %v2471
      %v2473 = vcombine.high %v2465, %v2465
      %v2474 = vcombine.high %v2472, %v2472
      %v2476 = vunpack.c.l.s4 1983009808
      %v2477 = vunpack.c.0.s8 %v2476
      %v2478 = vlaneseq
      %v2479 = vshrl.u32 %v2478, 7
      %v2480 = vsub.s32 %v2477, %v2479
      %v2481 = vrot.slane %v2449, %v2480
      %v2482 = vcombine.high %v2481, %v2481
      %2483 = vrot.lane.b32.xlu0 %v2465, 21
      %v2484 = vpop.permute.xlu0 %2483
      %2485 = vrot.lane.b32.xlu0 %v2473, 21
      %v2486 = vpop.permute.xlu0 %2485
      %2487 = vrot.lane.b32.xlu0 %v2472, 21
      %v2488 = vpop.permute.xlu0 %2487
      %2489 = vrot.lane.b32.xlu0 %v2474, 21
      %v2490 = vpop.permute.xlu0 %2489
      %2491 = vrot.lane.b32.xlu0 %v2481, 21
      %v2492 = vpop.permute.xlu0 %2491
      %2493 = vrot.lane.b32.xlu0 %v2482, 21
      %v2494 = vpop.permute.xlu0 %2493
      %vm2495 = vcmask 171008
      %v2496 = vsel %vm2495, %v2484, %v2486
      %v2497 = vsel %vm2495, %v2486, %v2488
      %v2498 = vsel %vm2495, %v2488, %v2490
      %v2499 = vsel %vm2495, %v2490, %v2492
      %v2500 = vsel %vm2495, %v2492, %v2494
      %v2506 = vmul.f32 %v2454, %v2496
      %v2507 = vmul.f32 %v2454, %v2497
      %v2508 = vmul.f32 %v2454, %v2498
      %v2509 = vmul.f32 %v2454, %v2499
      %v2510 = vmul.f32 %v2454, %v2500
      %v2511 = vadd.f32 %v2443, %v2506
      %v2512 = vadd.f32 %v2444, %v2507
      %v2513 = vadd.f32 %v2445, %v2508
      %v2514 = vadd.f32 %v2446, %v2509
      %v2515 = vadd.f32 %v2447, %v2510
      %v2516 = vld [vmem:[#allocation2] sm:$0xff]
      %v2517 = vld [vmem:[#allocation2 + $0x8] sm:$0xf]
      %v2518 = vld [vmem:[%s6] sm:$0x3]
      %2520 = vset.pattern.permute.xlu0 21
      %2521 = vperm.xlu0 %2520, %v2518
      %v2522 = vpop.permute.xlu0 %2521
      %v2526 = vcombine.high %v2516, %v2516
      %v2528 = vunpack.c.l.s4 1983009808
      %v2529 = vunpack.c.0.s8 %v2528
      %v2530 = vlaneseq
      %v2531 = vshrl.u32 %v2530, 7
      %v2532 = vsub.s32 %v2529, %v2531
      %v2533 = vrot.slane %v2516, %v2532
      %v2535 = vunpack.c.l.s4 1983009808
      %v2536 = vunpack.c.0.s8 %v2535
      %v2537 = vlaneseq
      %v2538 = vshrl.u32 %v2537, 7
      %v2539 = vsub.s32 %v2536, %v2538
      %v2540 = vrot.slane %v2526, %v2539
      %v2541 = vcombine.high %v2533, %v2533
      %v2542 = vcombine.high %v2540, %v2540
      %v2544 = vunpack.c.l.s4 1983009808
      %v2545 = vunpack.c.0.s8 %v2544
      %v2546 = vlaneseq
      %v2547 = vshrl.u32 %v2546, 7
      %v2548 = vsub.s32 %v2545, %v2547
      %v2549 = vrot.slane %v2517, %v2548
      %v2550 = vcombine.high %v2549, %v2549
      %2551 = vrot.lane.b32.xlu0 %v2533, 3
      %v2552 = vpop.permute.xlu0 %2551
      %2553 = vrot.lane.b32.xlu0 %v2541, 3
      %v2554 = vpop.permute.xlu0 %2553
      %2555 = vrot.lane.b32.xlu0 %v2540, 3
      %v2556 = vpop.permute.xlu0 %2555
      %2557 = vrot.lane.b32.xlu0 %v2542, 3
      %v2558 = vpop.permute.xlu0 %2557
      %2559 = vrot.lane.b32.xlu0 %v2549, 3
      %v2560 = vpop.permute.xlu0 %2559
      %2561 = vrot.lane.b32.xlu0 %v2550, 3
      %v2562 = vpop.permute.xlu0 %2561
      %v2563 = vsel %vm798, %v2552, %v2554
      %v2564 = vsel %vm798, %v2554, %v2556
      %v2565 = vsel %vm798, %v2556, %v2558
      %v2566 = vsel %vm798, %v2558, %v2560
      %v2567 = vsel %vm798, %v2560, %v2562
      %v2573 = vmul.f32 %v2522, %v2563
      %v2574 = vmul.f32 %v2522, %v2564
      %v2575 = vmul.f32 %v2522, %v2565
      %v2576 = vmul.f32 %v2522, %v2566
      %v2577 = vmul.f32 %v2522, %v2567
      %v2578 = vadd.f32 %v2511, %v2573
      %v2579 = vadd.f32 %v2512, %v2574
      %v2580 = vadd.f32 %v2513, %v2575
      %v2581 = vadd.f32 %v2514, %v2576
      %v2582 = vadd.f32 %v2515, %v2577
      %v2583 = vld [vmem:[#allocation2] sm:$0xff]
      %v2584 = vld [vmem:[#allocation2 + $0x8] sm:$0xf]
      %v2585 = vld [vmem:[%s6] sm:$0x3]
      %2587 = vset.pattern.permute.xlu0 22
      %2588 = vperm.xlu0 %2587, %v2585
      %v2589 = vpop.permute.xlu0 %2588
      %v2593 = vcombine.high %v2583, %v2583
      %v2595 = vunpack.c.l.s4 1983009808
      %v2596 = vunpack.c.0.s8 %v2595
      %v2597 = vlaneseq
      %v2598 = vshrl.u32 %v2597, 7
      %v2599 = vsub.s32 %v2596, %v2598
      %v2600 = vrot.slane %v2583, %v2599
      %v2602 = vunpack.c.l.s4 1983009808
      %v2603 = vunpack.c.0.s8 %v2602
      %v2604 = vlaneseq
      %v2605 = vshrl.u32 %v2604, 7
      %v2606 = vsub.s32 %v2603, %v2605
      %v2607 = vrot.slane %v2593, %v2606
      %v2608 = vcombine.high %v2600, %v2600
      %v2609 = vcombine.high %v2607, %v2607
      %v2611 = vunpack.c.l.s4 1983009808
      %v2612 = vunpack.c.0.s8 %v2611
      %v2613 = vlaneseq
      %v2614 = vshrl.u32 %v2613, 7
      %v2615 = vsub.s32 %v2612, %v2614
      %v2616 = vrot.slane %v2584, %v2615
      %v2617 = vcombine.high %v2616, %v2616
      %2618 = vrot.lane.b32.xlu0 %v2600, 2
      %v2619 = vpop.permute.xlu0 %2618
      %2620 = vrot.lane.b32.xlu0 %v2608, 2
      %v2621 = vpop.permute.xlu0 %2620
      %2622 = vrot.lane.b32.xlu0 %v2607, 2
      %v2623 = vpop.permute.xlu0 %2622
      %2624 = vrot.lane.b32.xlu0 %v2609, 2
      %v2625 = vpop.permute.xlu0 %2624
      %2626 = vrot.lane.b32.xlu0 %v2616, 2
      %v2627 = vpop.permute.xlu0 %2626
      %2628 = vrot.lane.b32.xlu0 %v2617, 2
      %v2629 = vpop.permute.xlu0 %2628
      %v2630 = vsel %vm796, %v2619, %v2621
      %v2631 = vsel %vm796, %v2621, %v2623
      %v2632 = vsel %vm796, %v2623, %v2625
      %v2633 = vsel %vm796, %v2625, %v2627
      %v2634 = vsel %vm796, %v2627, %v2629
      %v2640 = vmul.f32 %v2589, %v2630
      %v2641 = vmul.f32 %v2589, %v2631
      %v2642 = vmul.f32 %v2589, %v2632
      %v2643 = vmul.f32 %v2589, %v2633
      %v2644 = vmul.f32 %v2589, %v2634
      %v2645 = vadd.f32 %v2578, %v2640
      %v2646 = vadd.f32 %v2579, %v2641
      %v2647 = vadd.f32 %v2580, %v2642
      %v2648 = vadd.f32 %v2581, %v2643
      %v2649 = vadd.f32 %v2582, %v2644
      %v2650 = vld [vmem:[#allocation2] sm:$0xff]
      %v2651 = vld [vmem:[#allocation2 + $0x8] sm:$0xf]
      %v2652 = vld [vmem:[%s6] sm:$0x3]
      %2654 = vset.pattern.permute.xlu0 23
      %2655 = vperm.xlu0 %2654, %v2652
      %v2656 = vpop.permute.xlu0 %2655
      %v2660 = vcombine.high %v2650, %v2650
      %v2662 = vunpack.c.l.s4 1983009808
      %v2663 = vunpack.c.0.s8 %v2662
      %v2664 = vlaneseq
      %v2665 = vshrl.u32 %v2664, 7
      %v2666 = vsub.s32 %v2663, %v2665
      %v2667 = vrot.slane %v2650, %v2666
      %v2669 = vunpack.c.l.s4 1983009808
      %v2670 = vunpack.c.0.s8 %v2669
      %v2671 = vlaneseq
      %v2672 = vshrl.u32 %v2671, 7
      %v2673 = vsub.s32 %v2670, %v2672
      %v2674 = vrot.slane %v2660, %v2673
      %v2675 = vcombine.high %v2667, %v2667
      %v2676 = vcombine.high %v2674, %v2674
      %v2678 = vunpack.c.l.s4 1983009808
      %v2679 = vunpack.c.0.s8 %v2678
      %v2680 = vlaneseq
      %v2681 = vshrl.u32 %v2680, 7
      %v2682 = vsub.s32 %v2679, %v2681
      %v2683 = vrot.slane %v2651, %v2682
      %v2684 = vcombine.high %v2683, %v2683
      %2685 = vrot.lane.b32.xlu0 %v2667, 1
      %v2686 = vpop.permute.xlu0 %2685
      %2687 = vrot.lane.b32.xlu0 %v2675, 1
      %v2688 = vpop.permute.xlu0 %2687
      %2689 = vrot.lane.b32.xlu0 %v2674, 1
      %v2690 = vpop.permute.xlu0 %2689
      %2691 = vrot.lane.b32.xlu0 %v2676, 1
      %v2692 = vpop.permute.xlu0 %2691
      %2693 = vrot.lane.b32.xlu0 %v2683, 1
      %v2694 = vpop.permute.xlu0 %2693
      %2695 = vrot.lane.b32.xlu0 %v2684, 1
      %v2696 = vpop.permute.xlu0 %2695
      %v2697 = vsel %vm794, %v2686, %v2688
      %v2698 = vsel %vm794, %v2688, %v2690
      %v2699 = vsel %vm794, %v2690, %v2692
      %v2700 = vsel %vm794, %v2692, %v2694
      %v2701 = vsel %vm794, %v2694, %v2696
      %v2707 = vmul.f32 %v2656, %v2697
      %v2708 = vmul.f32 %v2656, %v2698
      %v2709 = vmul.f32 %v2656, %v2699
      %v2710 = vmul.f32 %v2656, %v2700
      %v2711 = vmul.f32 %v2656, %v2701
      %v2712 = vadd.f32 %v2645, %v2707
      %v2713 = vadd.f32 %v2646, %v2708
      %v2714 = vadd.f32 %v2647, %v2709
      %v2715 = vadd.f32 %v2648, %v2710
      %v2716 = vadd.f32 %v2649, %v2711
      %v2717 = vld [vmem:[#allocation2 + $0x2] sm:$0xff]
      %v2718 = vld [vmem:[#allocation2 + $0xa] sm:$0x3]
      %v2719 = vld [vmem:[%s6] sm:$0x3]
      %2721 = vset.pattern.permute.xlu0 24
      %2722 = vperm.xlu0 %2721, %v2719
      %v2723 = vpop.permute.xlu0 %2722
      %v2727 = vcombine.high %v2717, %v2717
      %v2729 = vunpack.c.l.s4 1983009808
      %v2730 = vunpack.c.0.s8 %v2729
      %v2731 = vlaneseq
      %v2732 = vshrl.u32 %v2731, 7
      %v2733 = vsub.s32 %v2730, %v2732
      %v2734 = vrot.slane %v2717, %v2733
      %v2736 = vunpack.c.l.s4 1983009808
      %v2737 = vunpack.c.0.s8 %v2736
      %v2738 = vlaneseq
      %v2739 = vshrl.u32 %v2738, 7
      %v2740 = vsub.s32 %v2737, %v2739
      %v2741 = vrot.slane %v2727, %v2740
      %v2742 = vcombine.high %v2734, %v2734
      %v2743 = vcombine.high %v2741, %v2741
      %v2745 = vunpack.c.l.s4 1983009808
      %v2746 = vunpack.c.0.s8 %v2745
      %v2747 = vlaneseq
      %v2748 = vshrl.u32 %v2747, 7
      %v2749 = vsub.s32 %v2746, %v2748
      %v2750 = vrot.slane %v2718, %v2749
      %v2756 = vmul.f32 %v2723, %v2734
      %v2757 = vmul.f32 %v2723, %v2742
      %v2758 = vmul.f32 %v2723, %v2741
      %v2759 = vmul.f32 %v2723, %v2743
      %v2760 = vmul.f32 %v2723, %v2750
      %v2761 = vadd.f32 %v2712, %v2756
      %v2762 = vadd.f32 %v2713, %v2757
      %v2763 = vadd.f32 %v2714, %v2758
      %v2764 = vadd.f32 %v2715, %v2759
      %v2765 = vadd.f32 %v2716, %v2760
      %v2766 = vld [vmem:[#allocation2 + $0x2] sm:$0xff]
      %v2767 = vld [vmem:[#allocation2 + $0xa] sm:$0xf]
      %v2768 = vld [vmem:[%s6] sm:$0x3]
      %2770 = vset.pattern.permute.xlu0 25
      %2771 = vperm.xlu0 %2770, %v2768
      %v2772 = vpop.permute.xlu0 %2771
      %v2776 = vcombine.high %v2766, %v2766
      %v2778 = vunpack.c.l.s4 1983009808
      %v2779 = vunpack.c.0.s8 %v2778
      %v2780 = vlaneseq
      %v2781 = vshrl.u32 %v2780, 7
      %v2782 = vsub.s32 %v2779, %v2781
      %v2783 = vrot.slane %v2766, %v2782
      %v2785 = vunpack.c.l.s4 1983009808
      %v2786 = vunpack.c.0.s8 %v2785
      %v2787 = vlaneseq
      %v2788 = vshrl.u32 %v2787, 7
      %v2789 = vsub.s32 %v2786, %v2788
      %v2790 = vrot.slane %v2776, %v2789
      %v2791 = vcombine.high %v2783, %v2783
      %v2792 = vcombine.high %v2790, %v2790
      %v2794 = vunpack.c.l.s4 1983009808
      %v2795 = vunpack.c.0.s8 %v2794
      %v2796 = vlaneseq
      %v2797 = vshrl.u32 %v2796, 7
      %v2798 = vsub.s32 %v2795, %v2797
      %v2799 = vrot.slane %v2767, %v2798
      %v2800 = vcombine.high %v2799, %v2799
      %2801 = vrot.lane.b32.xlu0 %v2783, 127
      %v2802 = vpop.permute.xlu0 %2801
      %2803 = vrot.lane.b32.xlu0 %v2791, 127
      %v2804 = vpop.permute.xlu0 %2803
      %2805 = vrot.lane.b32.xlu0 %v2790, 127
      %v2806 = vpop.permute.xlu0 %2805
      %2807 = vrot.lane.b32.xlu0 %v2792, 127
      %v2808 = vpop.permute.xlu0 %2807
      %2809 = vrot.lane.b32.xlu0 %v2799, 127
      %v2810 = vpop.permute.xlu0 %2809
      %2811 = vrot.lane.b32.xlu0 %v2800, 127
      %v2812 = vpop.permute.xlu0 %2811
      %v2813 = vsel %vm318, %v2802, %v2804
      %v2814 = vsel %vm318, %v2804, %v2806
      %v2815 = vsel %vm318, %v2806, %v2808
      %v2816 = vsel %vm318, %v2808, %v2810
      %v2817 = vsel %vm318, %v2810, %v2812
      %v2823 = vmul.f32 %v2772, %v2813
      %v2824 = vmul.f32 %v2772, %v2814
      %v2825 = vmul.f32 %v2772, %v2815
      %v2826 = vmul.f32 %v2772, %v2816
      %v2827 = vmul.f32 %v2772, %v2817
      %v2828 = vadd.f32 %v2761, %v2823
      %v2829 = vadd.f32 %v2762, %v2824
      %v2830 = vadd.f32 %v2763, %v2825
      %v2831 = vadd.f32 %v2764, %v2826
      %v2832 = vadd.f32 %v2765, %v2827
      %v2833 = vld [vmem:[#allocation2 + $0x2] sm:$0xff]
      %v2834 = vld [vmem:[#allocation2 + $0xa] sm:$0xf]
      %v2835 = vld [vmem:[%s6] sm:$0x3]
      %2837 = vset.pattern.permute.xlu0 26
      %2838 = vperm.xlu0 %2837, %v2835
      %v2839 = vpop.permute.xlu0 %2838
      %v2843 = vcombine.high %v2833, %v2833
      %v2845 = vunpack.c.l.s4 1983009808
      %v2846 = vunpack.c.0.s8 %v2845
      %v2847 = vlaneseq
      %v2848 = vshrl.u32 %v2847, 7
      %v2849 = vsub.s32 %v2846, %v2848
      %v2850 = vrot.slane %v2833, %v2849
      %v2852 = vunpack.c.l.s4 1983009808
      %v2853 = vunpack.c.0.s8 %v2852
      %v2854 = vlaneseq
      %v2855 = vshrl.u32 %v2854, 7
      %v2856 = vsub.s32 %v2853, %v2855
      %v2857 = vrot.slane %v2843, %v2856
      %v2858 = vcombine.high %v2850, %v2850
      %v2859 = vcombine.high %v2857, %v2857
      %v2861 = vunpack.c.l.s4 1983009808
      %v2862 = vunpack.c.0.s8 %v2861
      %v2863 = vlaneseq
      %v2864 = vshrl.u32 %v2863, 7
      %v2865 = vsub.s32 %v2862, %v2864
      %v2866 = vrot.slane %v2834, %v2865
      %v2867 = vcombine.high %v2866, %v2866
      %2868 = vrot.lane.b32.xlu0 %v2850, 126
      %v2869 = vpop.permute.xlu0 %2868
      %2870 = vrot.lane.b32.xlu0 %v2858, 126
      %v2871 = vpop.permute.xlu0 %2870
      %2872 = vrot.lane.b32.xlu0 %v2857, 126
      %v2873 = vpop.permute.xlu0 %2872
      %2874 = vrot.lane.b32.xlu0 %v2859, 126
      %v2875 = vpop.permute.xlu0 %2874
      %2876 = vrot.lane.b32.xlu0 %v2866, 126
      %v2877 = vpop.permute.xlu0 %2876
      %2878 = vrot.lane.b32.xlu0 %v2867, 126
      %v2879 = vpop.permute.xlu0 %2878
      %v2880 = vsel %vm344, %v2869, %v2871
      %v2881 = vsel %vm344, %v2871, %v2873
      %v2882 = vsel %vm344, %v2873, %v2875
      %v2883 = vsel %vm344, %v2875, %v2877
      %v2884 = vsel %vm344, %v2877, %v2879
      %v2890 = vmul.f32 %v2839, %v2880
      %v2891 = vmul.f32 %v2839, %v2881
      %v2892 = vmul.f32 %v2839, %v2882
      %v2893 = vmul.f32 %v2839, %v2883
      %v2894 = vmul.f32 %v2839, %v2884
      %v2895 = vadd.f32 %v2828, %v2890
      %v2896 = vadd.f32 %v2829, %v2891
      %v2897 = vadd.f32 %v2830, %v2892
      %v2898 = vadd.f32 %v2831, %v2893
      %v2899 = vadd.f32 %v2832, %v2894
      %v2900 = vld [vmem:[#allocation2 + $0x2] sm:$0xff]
      %v2901 = vld [vmem:[#allocation2 + $0xa] sm:$0xf]
      %v2902 = vld [vmem:[%s6] sm:$0x3]
      %2904 = vset.pattern.permute.xlu0 27
      %2905 = vperm.xlu0 %2904, %v2902
      %v2906 = vpop.permute.xlu0 %2905
      %v2910 = vcombine.high %v2900, %v2900
      %v2912 = vunpack.c.l.s4 1983009808
      %v2913 = vunpack.c.0.s8 %v2912
      %v2914 = vlaneseq
      %v2915 = vshrl.u32 %v2914, 7
      %v2916 = vsub.s32 %v2913, %v2915
      %v2917 = vrot.slane %v2900, %v2916
      %v2919 = vunpack.c.l.s4 1983009808
      %v2920 = vunpack.c.0.s8 %v2919
      %v2921 = vlaneseq
      %v2922 = vshrl.u32 %v2921, 7
      %v2923 = vsub.s32 %v2920, %v2922
      %v2924 = vrot.slane %v2910, %v2923
      %v2925 = vcombine.high %v2917, %v2917
      %v2926 = vcombine.high %v2924, %v2924
      %v2928 = vunpack.c.l.s4 1983009808
      %v2929 = vunpack.c.0.s8 %v2928
      %v2930 = vlaneseq
      %v2931 = vshrl.u32 %v2930, 7
      %v2932 = vsub.s32 %v2929, %v2931
      %v2933 = vrot.slane %v2901, %v2932
      %v2934 = vcombine.high %v2933, %v2933
      %2935 = vrot.lane.b32.xlu0 %v2917, 125
      %v2936 = vpop.permute.xlu0 %2935
      %2937 = vrot.lane.b32.xlu0 %v2925, 125
      %v2938 = vpop.permute.xlu0 %2937
      %2939 = vrot.lane.b32.xlu0 %v2924, 125
      %v2940 = vpop.permute.xlu0 %2939
      %2941 = vrot.lane.b32.xlu0 %v2926, 125
      %v2942 = vpop.permute.xlu0 %2941
      %2943 = vrot.lane.b32.xlu0 %v2933, 125
      %v2944 = vpop.permute.xlu0 %2943
      %2945 = vrot.lane.b32.xlu0 %v2934, 125
      %v2946 = vpop.permute.xlu0 %2945
      %vm2947 = vcmask 1022976
      %v2948 = vsel %vm2947, %v2936, %v2938
      %v2949 = vsel %vm2947, %v2938, %v2940
      %v2950 = vsel %vm2947, %v2940, %v2942
      %v2951 = vsel %vm2947, %v2942, %v2944
      %v2952 = vsel %vm2947, %v2944, %v2946
      %v2958 = vmul.f32 %v2906, %v2948
      %v2959 = vmul.f32 %v2906, %v2949
      %v2960 = vmul.f32 %v2906, %v2950
      %v2961 = vmul.f32 %v2906, %v2951
      %v2962 = vmul.f32 %v2906, %v2952
      %v2963 = vadd.f32 %v2895, %v2958
      %v2964 = vadd.f32 %v2896, %v2959
      %v2965 = vadd.f32 %v2897, %v2960
      %v2966 = vadd.f32 %v2898, %v2961
      %v2967 = vadd.f32 %v2899, %v2962
      %v2968 = vld [vmem:[#allocation2 + $0x2] sm:$0xff]
      %v2969 = vld [vmem:[#allocation2 + $0xa] sm:$0xf]
      %v2970 = vld [vmem:[%s6] sm:$0x3]
      %2972 = vset.pattern.permute.xlu0 28
      %2973 = vperm.xlu0 %2972, %v2970
      %v2974 = vpop.permute.xlu0 %2973
      %v2978 = vcombine.high %v2968, %v2968
      %v2980 = vunpack.c.l.s4 1983009808
      %v2981 = vunpack.c.0.s8 %v2980
      %v2982 = vlaneseq
      %v2983 = vshrl.u32 %v2982, 7
      %v2984 = vsub.s32 %v2981, %v2983
      %v2985 = vrot.slane %v2968, %v2984
      %v2987 = vunpack.c.l.s4 1983009808
      %v2988 = vunpack.c.0.s8 %v2987
      %v2989 = vlaneseq
      %v2990 = vshrl.u32 %v2989, 7
      %v2991 = vsub.s32 %v2988, %v2990
      %v2992 = vrot.slane %v2978, %v2991
      %v2993 = vcombine.high %v2985, %v2985
      %v2994 = vcombine.high %v2992, %v2992
      %v2996 = vunpack.c.l.s4 1983009808
      %v2997 = vunpack.c.0.s8 %v2996
      %v2998 = vlaneseq
      %v2999 = vshrl.u32 %v2998, 7
      %v3000 = vsub.s32 %v2997, %v2999
      %v3001 = vrot.slane %v2969, %v3000
      %v3002 = vcombine.high %v3001, %v3001
      %3003 = vrot.lane.b32.xlu0 %v2985, 107
      %v3004 = vpop.permute.xlu0 %3003
      %3005 = vrot.lane.b32.xlu0 %v2993, 107
      %v3006 = vpop.permute.xlu0 %3005
      %3007 = vrot.lane.b32.xlu0 %v2992, 107
      %v3008 = vpop.permute.xlu0 %3007
      %3009 = vrot.lane.b32.xlu0 %v2994, 107
      %v3010 = vpop.permute.xlu0 %3009
      %3011 = vrot.lane.b32.xlu0 %v3001, 107
      %v3012 = vpop.permute.xlu0 %3011
      %3013 = vrot.lane.b32.xlu0 %v3002, 107
      %v3014 = vpop.permute.xlu0 %3013
      %vm3015 = vcmask 875520
      %v3016 = vsel %vm3015, %v3004, %v3006
      %v3017 = vsel %vm3015, %v3006, %v3008
      %v3018 = vsel %vm3015, %v3008, %v3010
      %v3019 = vsel %vm3015, %v3010, %v3012
      %v3020 = vsel %vm3015, %v3012, %v3014
      %v3026 = vmul.f32 %v2974, %v3016
      %v3027 = vmul.f32 %v2974, %v3017
      %v3028 = vmul.f32 %v2974, %v3018
      %v3029 = vmul.f32 %v2974, %v3019
      %v3030 = vmul.f32 %v2974, %v3020
      %v3031 = vadd.f32 %v2963, %v3026
      %v3032 = vadd.f32 %v2964, %v3027
      %v3033 = vadd.f32 %v2965, %v3028
      %v3034 = vadd.f32 %v2966, %v3029
      %v3035 = vadd.f32 %v2967, %v3030
      %v3036 = vld [vmem:[#allocation2 + $0x2] sm:$0xff]
      %v3037 = vld [vmem:[#allocation2 + $0xa] sm:$0xf]
      %v3038 = vld [vmem:[%s6] sm:$0x3]
      %3040 = vset.pattern.permute.xlu0 29
      %3041 = vperm.xlu0 %3040, %v3038
      %v3042 = vpop.permute.xlu0 %3041
      %v3046 = vcombine.high %v3036, %v3036
      %v3048 = vunpack.c.l.s4 1983009808
      %v3049 = vunpack.c.0.s8 %v3048
      %v3050 = vlaneseq
      %v3051 = vshrl.u32 %v3050, 7
      %v3052 = vsub.s32 %v3049, %v3051
      %v3053 = vrot.slane %v3036, %v3052
      %v3055 = vunpack.c.l.s4 1983009808
      %v3056 = vunpack.c.0.s8 %v3055
      %v3057 = vlaneseq
      %v3058 = vshrl.u32 %v3057, 7
      %v3059 = vsub.s32 %v3056, %v3058
      %v3060 = vrot.slane %v3046, %v3059
      %v3061 = vcombine.high %v3053, %v3053
      %v3062 = vcombine.high %v3060, %v3060
      %v3064 = vunpack.c.l.s4 1983009808
      %v3065 = vunpack.c.0.s8 %v3064
      %v3066 = vlaneseq
      %v3067 = vshrl.u32 %v3066, 7
      %v3068 = vsub.s32 %v3065, %v3067
      %v3069 = vrot.slane %v3037, %v3068
      %v3070 = vcombine.high %v3069, %v3069
      %3071 = vrot.lane.b32.xlu0 %v3053, 106
      %v3072 = vpop.permute.xlu0 %3071
      %3073 = vrot.lane.b32.xlu0 %v3061, 106
      %v3074 = vpop.permute.xlu0 %3073
      %3075 = vrot.lane.b32.xlu0 %v3060, 106
      %v3076 = vpop.permute.xlu0 %3075
      %3077 = vrot.lane.b32.xlu0 %v3062, 106
      %v3078 = vpop.permute.xlu0 %3077
      %3079 = vrot.lane.b32.xlu0 %v3069, 106
      %v3080 = vpop.permute.xlu0 %3079
      %3081 = vrot.lane.b32.xlu0 %v3070, 106
      %v3082 = vpop.permute.xlu0 %3081
      %vm3083 = vcmask 867328
      %v3084 = vsel %vm3083, %v3072, %v3074
      %v3085 = vsel %vm3083, %v3074, %v3076
      %v3086 = vsel %vm3083, %v3076, %v3078
      %v3087 = vsel %vm3083, %v3078, %v3080
      %v3088 = vsel %vm3083, %v3080, %v3082
      %v3094 = vmul.f32 %v3042, %v3084
      %v3095 = vmul.f32 %v3042, %v3085
      %v3096 = vmul.f32 %v3042, %v3086
      %v3097 = vmul.f32 %v3042, %v3087
      %v3098 = vmul.f32 %v3042, %v3088
      %v3099 = vadd.f32 %v3031, %v3094
      %v3100 = vadd.f32 %v3032, %v3095
      %v3101 = vadd.f32 %v3033, %v3096
      %v3102 = vadd.f32 %v3034, %v3097
      %v3103 = vadd.f32 %v3035, %v3098
      %v3104 = vld [vmem:[#allocation2 + $0x2] sm:$0xff]
      %v3105 = vld [vmem:[#allocation2 + $0xa] sm:$0xf]
      %v3106 = vld [vmem:[%s6] sm:$0x3]
      %3108 = vset.pattern.permute.xlu0 30
      %3109 = vperm.xlu0 %3108, %v3106
      %v3110 = vpop.permute.xlu0 %3109
      %v3114 = vcombine.high %v3104, %v3104
      %v3116 = vunpack.c.l.s4 1983009808
      %v3117 = vunpack.c.0.s8 %v3116
      %v3118 = vlaneseq
      %v3119 = vshrl.u32 %v3118, 7
      %v3120 = vsub.s32 %v3117, %v3119
      %v3121 = vrot.slane %v3104, %v3120
      %v3123 = vunpack.c.l.s4 1983009808
      %v3124 = vunpack.c.0.s8 %v3123
      %v3125 = vlaneseq
      %v3126 = vshrl.u32 %v3125, 7
      %v3127 = vsub.s32 %v3124, %v3126
      %v3128 = vrot.slane %v3114, %v3127
      %v3129 = vcombine.high %v3121, %v3121
      %v3130 = vcombine.high %v3128, %v3128
      %v3132 = vunpack.c.l.s4 1983009808
      %v3133 = vunpack.c.0.s8 %v3132
      %v3134 = vlaneseq
      %v3135 = vshrl.u32 %v3134, 7
      %v3136 = vsub.s32 %v3133, %v3135
      %v3137 = vrot.slane %v3105, %v3136
      %v3138 = vcombine.high %v3137, %v3137
      %3139 = vrot.lane.b32.xlu0 %v3121, 105
      %v3140 = vpop.permute.xlu0 %3139
      %3141 = vrot.lane.b32.xlu0 %v3129, 105
      %v3142 = vpop.permute.xlu0 %3141
      %3143 = vrot.lane.b32.xlu0 %v3128, 105
      %v3144 = vpop.permute.xlu0 %3143
      %3145 = vrot.lane.b32.xlu0 %v3130, 105
      %v3146 = vpop.permute.xlu0 %3145
      %3147 = vrot.lane.b32.xlu0 %v3137, 105
      %v3148 = vpop.permute.xlu0 %3147
      %3149 = vrot.lane.b32.xlu0 %v3138, 105
      %v3150 = vpop.permute.xlu0 %3149
      %vm3151 = vcmask 859136
      %v3152 = vsel %vm3151, %v3140, %v3142
      %v3153 = vsel %vm3151, %v3142, %v3144
      %v3154 = vsel %vm3151, %v3144, %v3146
      %v3155 = vsel %vm3151, %v3146, %v3148
      %v3156 = vsel %vm3151, %v3148, %v3150
      %v3162 = vmul.f32 %v3110, %v3152
      %v3163 = vmul.f32 %v3110, %v3153
      %v3164 = vmul.f32 %v3110, %v3154
      %v3165 = vmul.f32 %v3110, %v3155
      %v3166 = vmul.f32 %v3110, %v3156
      %v3167 = vadd.f32 %v3099, %v3162
      %v3168 = vadd.f32 %v3100, %v3163
      %v3169 = vadd.f32 %v3101, %v3164
      %v3170 = vadd.f32 %v3102, %v3165
      %v3171 = vadd.f32 %v3103, %v3166
      %v3172 = vld [vmem:[#allocation2 + $0x2] sm:$0xff]
      %v3173 = vld [vmem:[#allocation2 + $0xa] sm:$0xf]
      %v3174 = vld [vmem:[%s6] sm:$0x3]
      %3176 = vset.pattern.permute.xlu0 31
      %3177 = vperm.xlu0 %3176, %v3174
      %v3178 = vpop.permute.xlu0 %3177
      %v3182 = vcombine.high %v3172, %v3172
      %v3184 = vunpack.c.l.s4 1983009808
      %v3185 = vunpack.c.0.s8 %v3184
      %v3186 = vlaneseq
      %v3187 = vshrl.u32 %v3186, 7
      %v3188 = vsub.s32 %v3185, %v3187
      %v3189 = vrot.slane %v3172, %v3188
      %v3191 = vunpack.c.l.s4 1983009808
      %v3192 = vunpack.c.0.s8 %v3191
      %v3193 = vlaneseq
      %v3194 = vshrl.u32 %v3193, 7
      %v3195 = vsub.s32 %v3192, %v3194
      %v3196 = vrot.slane %v3182, %v3195
      %v3197 = vcombine.high %v3189, %v3189
      %v3198 = vcombine.high %v3196, %v3196
      %v3200 = vunpack.c.l.s4 1983009808
      %v3201 = vunpack.c.0.s8 %v3200
      %v3202 = vlaneseq
      %v3203 = vshrl.u32 %v3202, 7
      %v3204 = vsub.s32 %v3201, %v3203
      %v3205 = vrot.slane %v3173, %v3204
      %v3206 = vcombine.high %v3205, %v3205
      %3207 = vrot.lane.b32.xlu0 %v3189, 104
      %v3208 = vpop.permute.xlu0 %3207
      %3209 = vrot.lane.b32.xlu0 %v3197, 104
      %v3210 = vpop.permute.xlu0 %3209
      %3211 = vrot.lane.b32.xlu0 %v3196, 104
      %v3212 = vpop.permute.xlu0 %3211
      %3213 = vrot.lane.b32.xlu0 %v3198, 104
      %v3214 = vpop.permute.xlu0 %3213
      %3215 = vrot.lane.b32.xlu0 %v3205, 104
      %v3216 = vpop.permute.xlu0 %3215
      %3217 = vrot.lane.b32.xlu0 %v3206, 104
      %v3218 = vpop.permute.xlu0 %3217
      %v3219 = vsel %vm367, %v3208, %v3210
      %v3220 = vsel %vm367, %v3210, %v3212
      %v3221 = vsel %vm367, %v3212, %v3214
      %v3222 = vsel %vm367, %v3214, %v3216
      %v3223 = vsel %vm367, %v3216, %v3218
      %v3229 = vmul.f32 %v3178, %v3219
      %v3230 = vmul.f32 %v3178, %v3220
      %v3231 = vmul.f32 %v3178, %v3221
      %v3232 = vmul.f32 %v3178, %v3222
      %v3233 = vmul.f32 %v3178, %v3223
      %v3234 = vadd.f32 %v3167, %v3229
      %v3235 = vadd.f32 %v3168, %v3230
      %v3236 = vadd.f32 %v3169, %v3231
      %v3237 = vadd.f32 %v3170, %v3232
      %v3238 = vadd.f32 %v3171, %v3233
      %v3239 = vld [vmem:[#allocation2 + $0x2] sm:$0xff]
      %v3240 = vld [vmem:[#allocation2 + $0xa] sm:$0xf]
      %v3241 = vld [vmem:[%s6] sm:$0x3]
      %3243 = vset.pattern.permute.xlu0 32
      %3244 = vperm.xlu0 %3243, %v3241
      %v3245 = vpop.permute.xlu0 %3244
      %v3249 = vcombine.high %v3239, %v3239
      %v3251 = vunpack.c.l.s4 1983009808
      %v3252 = vunpack.c.0.s8 %v3251
      %v3253 = vlaneseq
      %v3254 = vshrl.u32 %v3253, 7
      %v3255 = vsub.s32 %v3252, %v3254
      %v3256 = vrot.slane %v3239, %v3255
      %v3258 = vunpack.c.l.s4 1983009808
      %v3259 = vunpack.c.0.s8 %v3258
      %v3260 = vlaneseq
      %v3261 = vshrl.u32 %v3260, 7
      %v3262 = vsub.s32 %v3259, %v3261
      %v3263 = vrot.slane %v3249, %v3262
      %v3264 = vcombine.high %v3256, %v3256
      %v3265 = vcombine.high %v3263, %v3263
      %v3267 = vunpack.c.l.s4 1983009808
      %v3268 = vunpack.c.0.s8 %v3267
      %v3269 = vlaneseq
      %v3270 = vshrl.u32 %v3269, 7
      %v3271 = vsub.s32 %v3268, %v3270
      %v3272 = vrot.slane %v3240, %v3271
      %v3273 = vcombine.high %v3272, %v3272
      %3274 = vrot.lane.b32.xlu0 %v3256, 103
      %v3275 = vpop.permute.xlu0 %3274
      %3276 = vrot.lane.b32.xlu0 %v3264, 103
      %v3277 = vpop.permute.xlu0 %3276
      %3278 = vrot.lane.b32.xlu0 %v3263, 103
      %v3279 = vpop.permute.xlu0 %3278
      %3280 = vrot.lane.b32.xlu0 %v3265, 103
      %v3281 = vpop.permute.xlu0 %3280
      %3282 = vrot.lane.b32.xlu0 %v3272, 103
      %v3283 = vpop.permute.xlu0 %3282
      %3284 = vrot.lane.b32.xlu0 %v3273, 103
      %v3285 = vpop.permute.xlu0 %3284
      %v3286 = vsel %vm390, %v3275, %v3277
      %v3287 = vsel %vm390, %v3277, %v3279
      %v3288 = vsel %vm390, %v3279, %v3281
      %v3289 = vsel %vm390, %v3281, %v3283
      %v3290 = vsel %vm390, %v3283, %v3285
      %v3296 = vmul.f32 %v3245, %v3286
      %v3297 = vmul.f32 %v3245, %v3287
      %v3298 = vmul.f32 %v3245, %v3288
      %v3299 = vmul.f32 %v3245, %v3289
      %v3300 = vmul.f32 %v3245, %v3290
      %v3301 = vadd.f32 %v3234, %v3296
      %v3302 = vadd.f32 %v3235, %v3297
      %v3303 = vadd.f32 %v3236, %v3298
      %v3304 = vadd.f32 %v3237, %v3299
      %v3305 = vadd.f32 %v3238, %v3300
      %v3306 = vld [vmem:[#allocation2 + $0x2] sm:$0xff]
      %v3307 = vld [vmem:[#allocation2 + $0xa] sm:$0xf]
      %v3308 = vld [vmem:[%s6] sm:$0x3]
      %3310 = vset.pattern.permute.xlu0 33
      %3311 = vperm.xlu0 %3310, %v3308
      %v3312 = vpop.permute.xlu0 %3311
      %v3316 = vcombine.high %v3306, %v3306
      %v3318 = vunpack.c.l.s4 1983009808
      %v3319 = vunpack.c.0.s8 %v3318
      %v3320 = vlaneseq
      %v3321 = vshrl.u32 %v3320, 7
      %v3322 = vsub.s32 %v3319, %v3321
      %v3323 = vrot.slane %v3306, %v3322
      %v3325 = vunpack.c.l.s4 1983009808
      %v3326 = vunpack.c.0.s8 %v3325
      %v3327 = vlaneseq
      %v3328 = vshrl.u32 %v3327, 7
      %v3329 = vsub.s32 %v3326, %v3328
      %v3330 = vrot.slane %v3316, %v3329
      %v3331 = vcombine.high %v3323, %v3323
      %v3332 = vcombine.high %v3330, %v3330
      %v3334 = vunpack.c.l.s4 1983009808
      %v3335 = vunpack.c.0.s8 %v3334
      %v3336 = vlaneseq
      %v3337 = vshrl.u32 %v3336, 7
      %v3338 = vsub.s32 %v3335, %v3337
      %v3339 = vrot.slane %v3307, %v3338
      %v3340 = vcombine.high %v3339, %v3339
      %3341 = vrot.lane.b32.xlu0 %v3323, 102
      %v3342 = vpop.permute.xlu0 %3341
      %3343 = vrot.lane.b32.xlu0 %v3331, 102
      %v3344 = vpop.permute.xlu0 %3343
      %3345 = vrot.lane.b32.xlu0 %v3330, 102
      %v3346 = vpop.permute.xlu0 %3345
      %3347 = vrot.lane.b32.xlu0 %v3332, 102
      %v3348 = vpop.permute.xlu0 %3347
      %3349 = vrot.lane.b32.xlu0 %v3339, 102
      %v3350 = vpop.permute.xlu0 %3349
      %3351 = vrot.lane.b32.xlu0 %v3340, 102
      %v3352 = vpop.permute.xlu0 %3351
      %v3353 = vsel %vm413, %v3342, %v3344
      %v3354 = vsel %vm413, %v3344, %v3346
      %v3355 = vsel %vm413, %v3346, %v3348
      %v3356 = vsel %vm413, %v3348, %v3350
      %v3357 = vsel %vm413, %v3350, %v3352
      %v3363 = vmul.f32 %v3312, %v3353
      %v3364 = vmul.f32 %v3312, %v3354
      %v3365 = vmul.f32 %v3312, %v3355
      %v3366 = vmul.f32 %v3312, %v3356
      %v3367 = vmul.f32 %v3312, %v3357
      %v3368 = vadd.f32 %v3301, %v3363
      %v3369 = vadd.f32 %v3302, %v3364
      %v3370 = vadd.f32 %v3303, %v3365
      %v3371 = vadd.f32 %v3304, %v3366
      %v3372 = vadd.f32 %v3305, %v3367
      %v3373 = vld [vmem:[#allocation2 + $0x2] sm:$0xff]
      %v3374 = vld [vmem:[#allocation2 + $0xa] sm:$0xf]
      %v3375 = vld [vmem:[%s6] sm:$0x3]
      %3377 = vset.pattern.permute.xlu0 34
      %3378 = vperm.xlu0 %3377, %v3375
      %v3379 = vpop.permute.xlu0 %3378
      %v3383 = vcombine.high %v3373, %v3373
      %v3385 = vunpack.c.l.s4 1983009808
      %v3386 = vunpack.c.0.s8 %v3385
      %v3387 = vlaneseq
      %v3388 = vshrl.u32 %v3387, 7
      %v3389 = vsub.s32 %v3386, %v3388
      %v3390 = vrot.slane %v3373, %v3389
      %v3392 = vunpack.c.l.s4 1983009808
      %v3393 = vunpack.c.0.s8 %v3392
      %v3394 = vlaneseq
      %v3395 = vshrl.u32 %v3394, 7
      %v3396 = vsub.s32 %v3393, %v3395
      %v3397 = vrot.slane %v3383, %v3396
      %v3398 = vcombine.high %v3390, %v3390
      %v3399 = vcombine.high %v3397, %v3397
      %v3401 = vunpack.c.l.s4 1983009808
      %v3402 = vunpack.c.0.s8 %v3401
      %v3403 = vlaneseq
      %v3404 = vshrl.u32 %v3403, 7
      %v3405 = vsub.s32 %v3402, %v3404
      %v3406 = vrot.slane %v3374, %v3405
      %v3407 = vcombine.high %v3406, %v3406
      %3408 = vrot.lane.b32.xlu0 %v3390, 101
      %v3409 = vpop.permute.xlu0 %3408
      %3410 = vrot.lane.b32.xlu0 %v3398, 101
      %v3411 = vpop.permute.xlu0 %3410
      %3412 = vrot.lane.b32.xlu0 %v3397, 101
      %v3413 = vpop.permute.xlu0 %3412
      %3414 = vrot.lane.b32.xlu0 %v3399, 101
      %v3415 = vpop.permute.xlu0 %3414
      %3416 = vrot.lane.b32.xlu0 %v3406, 101
      %v3417 = vpop.permute.xlu0 %3416
      %3418 = vrot.lane.b32.xlu0 %v3407, 101
      %v3419 = vpop.permute.xlu0 %3418
      %vm3420 = vcmask 826368
      %v3421 = vsel %vm3420, %v3409, %v3411
      %v3422 = vsel %vm3420, %v3411, %v3413
      %v3423 = vsel %vm3420, %v3413, %v3415
      %v3424 = vsel %vm3420, %v3415, %v3417
      %v3425 = vsel %vm3420, %v3417, %v3419
      %v3431 = vmul.f32 %v3379, %v3421
      %v3432 = vmul.f32 %v3379, %v3422
      %v3433 = vmul.f32 %v3379, %v3423
      %v3434 = vmul.f32 %v3379, %v3424
      %v3435 = vmul.f32 %v3379, %v3425
      %v3436 = vadd.f32 %v3368, %v3431
      %v3437 = vadd.f32 %v3369, %v3432
      %v3438 = vadd.f32 %v3370, %v3433
      %v3439 = vadd.f32 %v3371, %v3434
      %v3440 = vadd.f32 %v3372, %v3435
      %v3441 = vld [vmem:[#allocation2 + $0x2] sm:$0xff]
      %v3442 = vld [vmem:[#allocation2 + $0xa] sm:$0xf]
      %v3443 = vld [vmem:[%s6] sm:$0x3]
      %3445 = vset.pattern.permute.xlu0 35
      %3446 = vperm.xlu0 %3445, %v3443
      %v3447 = vpop.permute.xlu0 %3446
      %v3451 = vcombine.high %v3441, %v3441
      %v3453 = vunpack.c.l.s4 1983009808
      %v3454 = vunpack.c.0.s8 %v3453
      %v3455 = vlaneseq
      %v3456 = vshrl.u32 %v3455, 7
      %v3457 = vsub.s32 %v3454, %v3456
      %v3458 = vrot.slane %v3441, %v3457
      %v3460 = vunpack.c.l.s4 1983009808
      %v3461 = vunpack.c.0.s8 %v3460
      %v3462 = vlaneseq
      %v3463 = vshrl.u32 %v3462, 7
      %v3464 = vsub.s32 %v3461, %v3463
      %v3465 = vrot.slane %v3451, %v3464
      %v3466 = vcombine.high %v3458, %v3458
      %v3467 = vcombine.high %v3465, %v3465
      %v3469 = vunpack.c.l.s4 1983009808
      %v3470 = vunpack.c.0.s8 %v3469
      %v3471 = vlaneseq
      %v3472 = vshrl.u32 %v3471, 7
      %v3473 = vsub.s32 %v3470, %v3472
      %v3474 = vrot.slane %v3442, %v3473
      %v3475 = vcombine.high %v3474, %v3474
      %3476 = vrot.lane.b32.xlu0 %v3458, 83
      %v3477 = vpop.permute.xlu0 %3476
      %3478 = vrot.lane.b32.xlu0 %v3466, 83
      %v3479 = vpop.permute.xlu0 %3478
      %3480 = vrot.lane.b32.xlu0 %v3465, 83
      %v3481 = vpop.permute.xlu0 %3480
      %3482 = vrot.lane.b32.xlu0 %v3467, 83
      %v3483 = vpop.permute.xlu0 %3482
      %3484 = vrot.lane.b32.xlu0 %v3474, 83
      %v3485 = vpop.permute.xlu0 %3484
      %3486 = vrot.lane.b32.xlu0 %v3475, 83
      %v3487 = vpop.permute.xlu0 %3486
      %vm3488 = vcmask 678912
      %v3489 = vsel %vm3488, %v3477, %v3479
      %v3490 = vsel %vm3488, %v3479, %v3481
      %v3491 = vsel %vm3488, %v3481, %v3483
      %v3492 = vsel %vm3488, %v3483, %v3485
      %v3493 = vsel %vm3488, %v3485, %v3487
      %v3499 = vmul.f32 %v3447, %v3489
      %v3500 = vmul.f32 %v3447, %v3490
      %v3501 = vmul.f32 %v3447, %v3491
      %v3502 = vmul.f32 %v3447, %v3492
      %v3503 = vmul.f32 %v3447, %v3493
      %v3504 = vadd.f32 %v3436, %v3499
      %v3505 = vadd.f32 %v3437, %v3500
      %v3506 = vadd.f32 %v3438, %v3501
      %v3507 = vadd.f32 %v3439, %v3502
      %v3508 = vadd.f32 %v3440, %v3503
      %v3509 = vld [vmem:[#allocation2 + $0x2] sm:$0xff]
      %v3510 = vld [vmem:[#allocation2 + $0xa] sm:$0xf]
      %v3511 = vld [vmem:[%s6] sm:$0x3]
      %3513 = vset.pattern.permute.xlu0 36
      %3514 = vperm.xlu0 %3513, %v3511
      %v3515 = vpop.permute.xlu0 %3514
      %v3519 = vcombine.high %v3509, %v3509
      %v3521 = vunpack.c.l.s4 1983009808
      %v3522 = vunpack.c.0.s8 %v3521
      %v3523 = vlaneseq
      %v3524 = vshrl.u32 %v3523, 7
      %v3525 = vsub.s32 %v3522, %v3524
      %v3526 = vrot.slane %v3509, %v3525
      %v3528 = vunpack.c.l.s4 1983009808
      %v3529 = vunpack.c.0.s8 %v3528
      %v3530 = vlaneseq
      %v3531 = vshrl.u32 %v3530, 7
      %v3532 = vsub.s32 %v3529, %v3531
      %v3533 = vrot.slane %v3519, %v3532
      %v3534 = vcombine.high %v3526, %v3526
      %v3535 = vcombine.high %v3533, %v3533
      %v3537 = vunpack.c.l.s4 1983009808
      %v3538 = vunpack.c.0.s8 %v3537
      %v3539 = vlaneseq
      %v3540 = vshrl.u32 %v3539, 7
      %v3541 = vsub.s32 %v3538, %v3540
      %v3542 = vrot.slane %v3510, %v3541
      %v3543 = vcombine.high %v3542, %v3542
      %3544 = vrot.lane.b32.xlu0 %v3526, 82
      %v3545 = vpop.permute.xlu0 %3544
      %3546 = vrot.lane.b32.xlu0 %v3534, 82
      %v3547 = vpop.permute.xlu0 %3546
      %3548 = vrot.lane.b32.xlu0 %v3533, 82
      %v3549 = vpop.permute.xlu0 %3548
      %3550 = vrot.lane.b32.xlu0 %v3535, 82
      %v3551 = vpop.permute.xlu0 %3550
      %3552 = vrot.lane.b32.xlu0 %v3542, 82
      %v3553 = vpop.permute.xlu0 %3552
      %3554 = vrot.lane.b32.xlu0 %v3543, 82
      %v3555 = vpop.permute.xlu0 %3554
      %vm3556 = vcmask 670720
      %v3557 = vsel %vm3556, %v3545, %v3547
      %v3558 = vsel %vm3556, %v3547, %v3549
      %v3559 = vsel %vm3556, %v3549, %v3551
      %v3560 = vsel %vm3556, %v3551, %v3553
      %v3561 = vsel %vm3556, %v3553, %v3555
      %v3567 = vmul.f32 %v3515, %v3557
      %v3568 = vmul.f32 %v3515, %v3558
      %v3569 = vmul.f32 %v3515, %v3559
      %v3570 = vmul.f32 %v3515, %v3560
      %v3571 = vmul.f32 %v3515, %v3561
      %v3572 = vadd.f32 %v3504, %v3567
      %v3573 = vadd.f32 %v3505, %v3568
      %v3574 = vadd.f32 %v3506, %v3569
      %v3575 = vadd.f32 %v3507, %v3570
      %v3576 = vadd.f32 %v3508, %v3571
      %v3577 = vld [vmem:[#allocation2 + $0x2] sm:$0xff]
      %v3578 = vld [vmem:[#allocation2 + $0xa] sm:$0xf]
      %v3579 = vld [vmem:[%s6] sm:$0x3]
      %3581 = vset.pattern.permute.xlu0 37
      %3582 = vperm.xlu0 %3581, %v3579
      %v3583 = vpop.permute.xlu0 %3582
      %v3587 = vcombine.high %v3577, %v3577
      %v3589 = vunpack.c.l.s4 1983009808
      %v3590 = vunpack.c.0.s8 %v3589
      %v3591 = vlaneseq
      %v3592 = vshrl.u32 %v3591, 7
      %v3593 = vsub.s32 %v3590, %v3592
      %v3594 = vrot.slane %v3577, %v3593
      %v3596 = vunpack.c.l.s4 1983009808
      %v3597 = vunpack.c.0.s8 %v3596
      %v3598 = vlaneseq
      %v3599 = vshrl.u32 %v3598, 7
      %v3600 = vsub.s32 %v3597, %v3599
      %v3601 = vrot.slane %v3587, %v3600
      %v3602 = vcombine.high %v3594, %v3594
      %v3603 = vcombine.high %v3601, %v3601
      %v3605 = vunpack.c.l.s4 1983009808
      %v3606 = vunpack.c.0.s8 %v3605
      %v3607 = vlaneseq
      %v3608 = vshrl.u32 %v3607, 7
      %v3609 = vsub.s32 %v3606, %v3608
      %v3610 = vrot.slane %v3578, %v3609
      %v3611 = vcombine.high %v3610, %v3610
      %3612 = vrot.lane.b32.xlu0 %v3594, 81
      %v3613 = vpop.permute.xlu0 %3612
      %3614 = vrot.lane.b32.xlu0 %v3602, 81
      %v3615 = vpop.permute.xlu0 %3614
      %3616 = vrot.lane.b32.xlu0 %v3601, 81
      %v3617 = vpop.permute.xlu0 %3616
      %3618 = vrot.lane.b32.xlu0 %v3603, 81
      %v3619 = vpop.permute.xlu0 %3618
      %3620 = vrot.lane.b32.xlu0 %v3610, 81
      %v3621 = vpop.permute.xlu0 %3620
      %3622 = vrot.lane.b32.xlu0 %v3611, 81
      %v3623 = vpop.permute.xlu0 %3622
      %vm3624 = vcmask 662528
      %v3625 = vsel %vm3624, %v3613, %v3615
      %v3626 = vsel %vm3624, %v3615, %v3617
      %v3627 = vsel %vm3624, %v3617, %v3619
      %v3628 = vsel %vm3624, %v3619, %v3621
      %v3629 = vsel %vm3624, %v3621, %v3623
      %v3635 = vmul.f32 %v3583, %v3625
      %v3636 = vmul.f32 %v3583, %v3626
      %v3637 = vmul.f32 %v3583, %v3627
      %v3638 = vmul.f32 %v3583, %v3628
      %v3639 = vmul.f32 %v3583, %v3629
      %v3640 = vadd.f32 %v3572, %v3635
      %v3641 = vadd.f32 %v3573, %v3636
      %v3642 = vadd.f32 %v3574, %v3637
      %v3643 = vadd.f32 %v3575, %v3638
      %v3644 = vadd.f32 %v3576, %v3639
      %v3645 = vld [vmem:[#allocation2 + $0x2] sm:$0xff]
      %v3646 = vld [vmem:[#allocation2 + $0xa] sm:$0xf]
      %v3647 = vld [vmem:[%s6] sm:$0x3]
      %3649 = vset.pattern.permute.xlu0 38
      %3650 = vperm.xlu0 %3649, %v3647
      %v3651 = vpop.permute.xlu0 %3650
      %v3655 = vcombine.high %v3645, %v3645
      %v3657 = vunpack.c.l.s4 1983009808
      %v3658 = vunpack.c.0.s8 %v3657
      %v3659 = vlaneseq
      %v3660 = vshrl.u32 %v3659, 7
      %v3661 = vsub.s32 %v3658, %v3660
      %v3662 = vrot.slane %v3645, %v3661
      %v3664 = vunpack.c.l.s4 1983009808
      %v3665 = vunpack.c.0.s8 %v3664
      %v3666 = vlaneseq
      %v3667 = vshrl.u32 %v3666, 7
      %v3668 = vsub.s32 %v3665, %v3667
      %v3669 = vrot.slane %v3655, %v3668
      %v3670 = vcombine.high %v3662, %v3662
      %v3671 = vcombine.high %v3669, %v3669
      %v3673 = vunpack.c.l.s4 1983009808
      %v3674 = vunpack.c.0.s8 %v3673
      %v3675 = vlaneseq
      %v3676 = vshrl.u32 %v3675, 7
      %v3677 = vsub.s32 %v3674, %v3676
      %v3678 = vrot.slane %v3646, %v3677
      %v3679 = vcombine.high %v3678, %v3678
      %3680 = vrot.lane.b32.xlu0 %v3662, 80
      %v3681 = vpop.permute.xlu0 %3680
      %3682 = vrot.lane.b32.xlu0 %v3670, 80
      %v3683 = vpop.permute.xlu0 %3682
      %3684 = vrot.lane.b32.xlu0 %v3669, 80
      %v3685 = vpop.permute.xlu0 %3684
      %3686 = vrot.lane.b32.xlu0 %v3671, 80
      %v3687 = vpop.permute.xlu0 %3686
      %3688 = vrot.lane.b32.xlu0 %v3678, 80
      %v3689 = vpop.permute.xlu0 %3688
      %3690 = vrot.lane.b32.xlu0 %v3679, 80
      %v3691 = vpop.permute.xlu0 %3690
      %v3692 = vsel %vm436, %v3681, %v3683
      %v3693 = vsel %vm436, %v3683, %v3685
      %v3694 = vsel %vm436, %v3685, %v3687
      %v3695 = vsel %vm436, %v3687, %v3689
      %v3696 = vsel %vm436, %v3689, %v3691
      %v3702 = vmul.f32 %v3651, %v3692
      %v3703 = vmul.f32 %v3651, %v3693
      %v3704 = vmul.f32 %v3651, %v3694
      %v3705 = vmul.f32 %v3651, %v3695
      %v3706 = vmul.f32 %v3651, %v3696
      %v3707 = vadd.f32 %v3640, %v3702
      %v3708 = vadd.f32 %v3641, %v3703
      %v3709 = vadd.f32 %v3642, %v3704
      %v3710 = vadd.f32 %v3643, %v3705
      %v3711 = vadd.f32 %v3644, %v3706
      %v3712 = vld [vmem:[#allocation2 + $0x2] sm:$0xff]
      %v3713 = vld [vmem:[#allocation2 + $0xa] sm:$0xf]
      %v3714 = vld [vmem:[%s6] sm:$0x3]
      %3716 = vset.pattern.permute.xlu0 39
      %3717 = vperm.xlu0 %3716, %v3714
      %v3718 = vpop.permute.xlu0 %3717
      %v3722 = vcombine.high %v3712, %v3712
      %v3724 = vunpack.c.l.s4 1983009808
      %v3725 = vunpack.c.0.s8 %v3724
      %v3726 = vlaneseq
      %v3727 = vshrl.u32 %v3726, 7
      %v3728 = vsub.s32 %v3725, %v3727
      %v3729 = vrot.slane %v3712, %v3728
      %v3731 = vunpack.c.l.s4 1983009808
      %v3732 = vunpack.c.0.s8 %v3731
      %v3733 = vlaneseq
      %v3734 = vshrl.u32 %v3733, 7
      %v3735 = vsub.s32 %v3732, %v3734
      %v3736 = vrot.slane %v3722, %v3735
      %v3737 = vcombine.high %v3729, %v3729
      %v3738 = vcombine.high %v3736, %v3736
      %v3740 = vunpack.c.l.s4 1983009808
      %v3741 = vunpack.c.0.s8 %v3740
      %v3742 = vlaneseq
      %v3743 = vshrl.u32 %v3742, 7
      %v3744 = vsub.s32 %v3741, %v3743
      %v3745 = vrot.slane %v3713, %v3744
      %v3746 = vcombine.high %v3745, %v3745
      %3747 = vrot.lane.b32.xlu0 %v3729, 79
      %v3748 = vpop.permute.xlu0 %3747
      %3749 = vrot.lane.b32.xlu0 %v3737, 79
      %v3750 = vpop.permute.xlu0 %3749
      %3751 = vrot.lane.b32.xlu0 %v3736, 79
      %v3752 = vpop.permute.xlu0 %3751
      %3753 = vrot.lane.b32.xlu0 %v3738, 79
      %v3754 = vpop.permute.xlu0 %3753
      %3755 = vrot.lane.b32.xlu0 %v3745, 79
      %v3756 = vpop.permute.xlu0 %3755
      %3757 = vrot.lane.b32.xlu0 %v3746, 79
      %v3758 = vpop.permute.xlu0 %3757
      %v3759 = vsel %vm459, %v3748, %v3750
      %v3760 = vsel %vm459, %v3750, %v3752
      %v3761 = vsel %vm459, %v3752, %v3754
      %v3762 = vsel %vm459, %v3754, %v3756
      %v3763 = vsel %vm459, %v3756, %v3758
      %v3769 = vmul.f32 %v3718, %v3759
      %v3770 = vmul.f32 %v3718, %v3760
      %v3771 = vmul.f32 %v3718, %v3761
      %v3772 = vmul.f32 %v3718, %v3762
      %v3773 = vmul.f32 %v3718, %v3763
      %v3774 = vadd.f32 %v3707, %v3769
      %v3775 = vadd.f32 %v3708, %v3770
      %v3776 = vadd.f32 %v3709, %v3771
      %v3777 = vadd.f32 %v3710, %v3772
      %v3778 = vadd.f32 %v3711, %v3773
      %v3779 = vld [vmem:[#allocation2 + $0x2] sm:$0xff]
      %v3780 = vld [vmem:[#allocation2 + $0xa] sm:$0xf]
      %v3781 = vld [vmem:[%s6] sm:$0x3]
      %3783 = vset.pattern.permute.xlu0 40
      %3784 = vperm.xlu0 %3783, %v3781
      %v3785 = vpop.permute.xlu0 %3784
      %v3789 = vcombine.high %v3779, %v3779
      %v3791 = vunpack.c.l.s4 1983009808
      %v3792 = vunpack.c.0.s8 %v3791
      %v3793 = vlaneseq
      %v3794 = vshrl.u32 %v3793, 7
      %v3795 = vsub.s32 %v3792, %v3794
      %v3796 = vrot.slane %v3779, %v3795
      %v3798 = vunpack.c.l.s4 1983009808
      %v3799 = vunpack.c.0.s8 %v3798
      %v3800 = vlaneseq
      %v3801 = vshrl.u32 %v3800, 7
      %v3802 = vsub.s32 %v3799, %v3801
      %v3803 = vrot.slane %v3789, %v3802
      %v3804 = vcombine.high %v3796, %v3796
      %v3805 = vcombine.high %v3803, %v3803
      %v3807 = vunpack.c.l.s4 1983009808
      %v3808 = vunpack.c.0.s8 %v3807
      %v3809 = vlaneseq
      %v3810 = vshrl.u32 %v3809, 7
      %v3811 = vsub.s32 %v3808, %v3810
      %v3812 = vrot.slane %v3780, %v3811
      %v3813 = vcombine.high %v3812, %v3812
      %3814 = vrot.lane.b32.xlu0 %v3796, 78
      %v3815 = vpop.permute.xlu0 %3814
      %3816 = vrot.lane.b32.xlu0 %v3804, 78
      %v3817 = vpop.permute.xlu0 %3816
      %3818 = vrot.lane.b32.xlu0 %v3803, 78
      %v3819 = vpop.permute.xlu0 %3818
      %3820 = vrot.lane.b32.xlu0 %v3805, 78
      %v3821 = vpop.permute.xlu0 %3820
      %3822 = vrot.lane.b32.xlu0 %v3812, 78
      %v3823 = vpop.permute.xlu0 %3822
      %3824 = vrot.lane.b32.xlu0 %v3813, 78
      %v3825 = vpop.permute.xlu0 %3824
      %v3826 = vsel %vm482, %v3815, %v3817
      %v3827 = vsel %vm482, %v3817, %v3819
      %v3828 = vsel %vm482, %v3819, %v3821
      %v3829 = vsel %vm482, %v3821, %v3823
      %v3830 = vsel %vm482, %v3823, %v3825
      %v3836 = vmul.f32 %v3785, %v3826
      %v3837 = vmul.f32 %v3785, %v3827
      %v3838 = vmul.f32 %v3785, %v3828
      %v3839 = vmul.f32 %v3785, %v3829
      %v3840 = vmul.f32 %v3785, %v3830
      %v3841 = vadd.f32 %v3774, %v3836
      %v3842 = vadd.f32 %v3775, %v3837
      %v3843 = vadd.f32 %v3776, %v3838
      %v3844 = vadd.f32 %v3777, %v3839
      %v3845 = vadd.f32 %v3778, %v3840
      %v3846 = vld [vmem:[#allocation2 + $0x2] sm:$0xff]
      %v3847 = vld [vmem:[#allocation2 + $0xa] sm:$0xf]
      %v3848 = vld [vmem:[%s6] sm:$0x3]
      %3850 = vset.pattern.permute.xlu0 41
      %3851 = vperm.xlu0 %3850, %v3848
      %v3852 = vpop.permute.xlu0 %3851
      %v3856 = vcombine.high %v3846, %v3846
      %v3858 = vunpack.c.l.s4 1983009808
      %v3859 = vunpack.c.0.s8 %v3858
      %v3860 = vlaneseq
      %v3861 = vshrl.u32 %v3860, 7
      %v3862 = vsub.s32 %v3859, %v3861
      %v3863 = vrot.slane %v3846, %v3862
      %v3865 = vunpack.c.l.s4 1983009808
      %v3866 = vunpack.c.0.s8 %v3865
      %v3867 = vlaneseq
      %v3868 = vshrl.u32 %v3867, 7
      %v3869 = vsub.s32 %v3866, %v3868
      %v3870 = vrot.slane %v3856, %v3869
      %v3871 = vcombine.high %v3863, %v3863
      %v3872 = vcombine.high %v3870, %v3870
      %v3874 = vunpack.c.l.s4 1983009808
      %v3875 = vunpack.c.0.s8 %v3874
      %v3876 = vlaneseq
      %v3877 = vshrl.u32 %v3876, 7
      %v3878 = vsub.s32 %v3875, %v3877
      %v3879 = vrot.slane %v3847, %v3878
      %v3880 = vcombine.high %v3879, %v3879
      %3881 = vrot.lane.b32.xlu0 %v3863, 77
      %v3882 = vpop.permute.xlu0 %3881
      %3883 = vrot.lane.b32.xlu0 %v3871, 77
      %v3884 = vpop.permute.xlu0 %3883
      %3885 = vrot.lane.b32.xlu0 %v3870, 77
      %v3886 = vpop.permute.xlu0 %3885
      %3887 = vrot.lane.b32.xlu0 %v3872, 77
      %v3888 = vpop.permute.xlu0 %3887
      %3889 = vrot.lane.b32.xlu0 %v3879, 77
      %v3890 = vpop.permute.xlu0 %3889
      %3891 = vrot.lane.b32.xlu0 %v3880, 77
      %v3892 = vpop.permute.xlu0 %3891
      %vm3893 = vcmask 629760
      %v3894 = vsel %vm3893, %v3882, %v3884
      %v3895 = vsel %vm3893, %v3884, %v3886
      %v3896 = vsel %vm3893, %v3886, %v3888
      %v3897 = vsel %vm3893, %v3888, %v3890
      %v3898 = vsel %vm3893, %v3890, %v3892
      %v3904 = vmul.f32 %v3852, %v3894
      %v3905 = vmul.f32 %v3852, %v3895
      %v3906 = vmul.f32 %v3852, %v3896
      %v3907 = vmul.f32 %v3852, %v3897
      %v3908 = vmul.f32 %v3852, %v3898
      %v3909 = vadd.f32 %v3841, %v3904
      %v3910 = vadd.f32 %v3842, %v3905
      %v3911 = vadd.f32 %v3843, %v3906
      %v3912 = vadd.f32 %v3844, %v3907
      %v3913 = vadd.f32 %v3845, %v3908
      %v3914 = vld [vmem:[#allocation2 + $0x2] sm:$0xff]
      %v3915 = vld [vmem:[#allocation2 + $0xa] sm:$0xf]
      %v3916 = vld [vmem:[%s6] sm:$0x3]
      %3918 = vset.pattern.permute.xlu0 42
      %3919 = vperm.xlu0 %3918, %v3916
      %v3920 = vpop.permute.xlu0 %3919
      %v3924 = vcombine.high %v3914, %v3914
      %v3926 = vunpack.c.l.s4 1983009808
      %v3927 = vunpack.c.0.s8 %v3926
      %v3928 = vlaneseq
      %v3929 = vshrl.u32 %v3928, 7
      %v3930 = vsub.s32 %v3927, %v3929
      %v3931 = vrot.slane %v3914, %v3930
      %v3933 = vunpack.c.l.s4 1983009808
      %v3934 = vunpack.c.0.s8 %v3933
      %v3935 = vlaneseq
      %v3936 = vshrl.u32 %v3935, 7
      %v3937 = vsub.s32 %v3934, %v3936
      %v3938 = vrot.slane %v3924, %v3937
      %v3939 = vcombine.high %v3931, %v3931
      %v3940 = vcombine.high %v3938, %v3938
      %v3942 = vunpack.c.l.s4 1983009808
      %v3943 = vunpack.c.0.s8 %v3942
      %v3944 = vlaneseq
      %v3945 = vshrl.u32 %v3944, 7
      %v3946 = vsub.s32 %v3943, %v3945
      %v3947 = vrot.slane %v3915, %v3946
      %v3948 = vcombine.high %v3947, %v3947
      %3949 = vrot.lane.b32.xlu0 %v3931, 59
      %v3950 = vpop.permute.xlu0 %3949
      %3951 = vrot.lane.b32.xlu0 %v3939, 59
      %v3952 = vpop.permute.xlu0 %3951
      %3953 = vrot.lane.b32.xlu0 %v3938, 59
      %v3954 = vpop.permute.xlu0 %3953
      %3955 = vrot.lane.b32.xlu0 %v3940, 59
      %v3956 = vpop.permute.xlu0 %3955
      %3957 = vrot.lane.b32.xlu0 %v3947, 59
      %v3958 = vpop.permute.xlu0 %3957
      %3959 = vrot.lane.b32.xlu0 %v3948, 59
      %v3960 = vpop.permute.xlu0 %3959
      %vm3961 = vcmask 482304
      %v3962 = vsel %vm3961, %v3950, %v3952
      %v3963 = vsel %vm3961, %v3952, %v3954
      %v3964 = vsel %vm3961, %v3954, %v3956
      %v3965 = vsel %vm3961, %v3956, %v3958
      %v3966 = vsel %vm3961, %v3958, %v3960
      %v3972 = vmul.f32 %v3920, %v3962
      %v3973 = vmul.f32 %v3920, %v3963
      %v3974 = vmul.f32 %v3920, %v3964
      %v3975 = vmul.f32 %v3920, %v3965
      %v3976 = vmul.f32 %v3920, %v3966
      %v3977 = vadd.f32 %v3909, %v3972
      %v3978 = vadd.f32 %v3910, %v3973
      %v3979 = vadd.f32 %v3911, %v3974
      %v3980 = vadd.f32 %v3912, %v3975
      %v3981 = vadd.f32 %v3913, %v3976
      %v3982 = vld [vmem:[#allocation2 + $0x2] sm:$0xff]
      %v3983 = vld [vmem:[#allocation2 + $0xa] sm:$0xf]
      %v3984 = vld [vmem:[%s6] sm:$0x3]
      %3986 = vset.pattern.permute.xlu0 43
      %3987 = vperm.xlu0 %3986, %v3984
      %v3988 = vpop.permute.xlu0 %3987
      %v3992 = vcombine.high %v3982, %v3982
      %v3994 = vunpack.c.l.s4 1983009808
      %v3995 = vunpack.c.0.s8 %v3994
      %v3996 = vlaneseq
      %v3997 = vshrl.u32 %v3996, 7
      %v3998 = vsub.s32 %v3995, %v3997
      %v3999 = vrot.slane %v3982, %v3998
      %v4001 = vunpack.c.l.s4 1983009808
      %v4002 = vunpack.c.0.s8 %v4001
      %v4003 = vlaneseq
      %v4004 = vshrl.u32 %v4003, 7
      %v4005 = vsub.s32 %v4002, %v4004
      %v4006 = vrot.slane %v3992, %v4005
      %v4007 = vcombine.high %v3999, %v3999
      %v4008 = vcombine.high %v4006, %v4006
      %v4010 = vunpack.c.l.s4 1983009808
      %v4011 = vunpack.c.0.s8 %v4010
      %v4012 = vlaneseq
      %v4013 = vshrl.u32 %v4012, 7
      %v4014 = vsub.s32 %v4011, %v4013
      %v4015 = vrot.slane %v3983, %v4014
      %v4016 = vcombine.high %v4015, %v4015
      %4017 = vrot.lane.b32.xlu0 %v3999, 58
      %v4018 = vpop.permute.xlu0 %4017
      %4019 = vrot.lane.b32.xlu0 %v4007, 58
      %v4020 = vpop.permute.xlu0 %4019
      %4021 = vrot.lane.b32.xlu0 %v4006, 58
      %v4022 = vpop.permute.xlu0 %4021
      %4023 = vrot.lane.b32.xlu0 %v4008, 58
      %v4024 = vpop.permute.xlu0 %4023
      %4025 = vrot.lane.b32.xlu0 %v4015, 58
      %v4026 = vpop.permute.xlu0 %4025
      %4027 = vrot.lane.b32.xlu0 %v4016, 58
      %v4028 = vpop.permute.xlu0 %4027
      %vm4029 = vcmask 474112
      %v4030 = vsel %vm4029, %v4018, %v4020
      %v4031 = vsel %vm4029, %v4020, %v4022
      %v4032 = vsel %vm4029, %v4022, %v4024
      %v4033 = vsel %vm4029, %v4024, %v4026
      %v4034 = vsel %vm4029, %v4026, %v4028
      %v4040 = vmul.f32 %v3988, %v4030
      %v4041 = vmul.f32 %v3988, %v4031
      %v4042 = vmul.f32 %v3988, %v4032
      %v4043 = vmul.f32 %v3988, %v4033
      %v4044 = vmul.f32 %v3988, %v4034
      %v4045 = vadd.f32 %v3977, %v4040
      %v4046 = vadd.f32 %v3978, %v4041
      %v4047 = vadd.f32 %v3979, %v4042
      %v4048 = vadd.f32 %v3980, %v4043
      %v4049 = vadd.f32 %v3981, %v4044
      %v4050 = vld [vmem:[#allocation2 + $0x2] sm:$0xff]
      %v4051 = vld [vmem:[#allocation2 + $0xa] sm:$0xf]
      %v4052 = vld [vmem:[%s6] sm:$0x3]
      %4054 = vset.pattern.permute.xlu0 44
      %4055 = vperm.xlu0 %4054, %v4052
      %v4056 = vpop.permute.xlu0 %4055
      %v4060 = vcombine.high %v4050, %v4050
      %v4062 = vunpack.c.l.s4 1983009808
      %v4063 = vunpack.c.0.s8 %v4062
      %v4064 = vlaneseq
      %v4065 = vshrl.u32 %v4064, 7
      %v4066 = vsub.s32 %v4063, %v4065
      %v4067 = vrot.slane %v4050, %v4066
      %v4069 = vunpack.c.l.s4 1983009808
      %v4070 = vunpack.c.0.s8 %v4069
      %v4071 = vlaneseq
      %v4072 = vshrl.u32 %v4071, 7
      %v4073 = vsub.s32 %v4070, %v4072
      %v4074 = vrot.slane %v4060, %v4073
      %v4075 = vcombine.high %v4067, %v4067
      %v4076 = vcombine.high %v4074, %v4074
      %v4078 = vunpack.c.l.s4 1983009808
      %v4079 = vunpack.c.0.s8 %v4078
      %v4080 = vlaneseq
      %v4081 = vshrl.u32 %v4080, 7
      %v4082 = vsub.s32 %v4079, %v4081
      %v4083 = vrot.slane %v4051, %v4082
      %v4084 = vcombine.high %v4083, %v4083
      %4085 = vrot.lane.b32.xlu0 %v4067, 57
      %v4086 = vpop.permute.xlu0 %4085
      %4087 = vrot.lane.b32.xlu0 %v4075, 57
      %v4088 = vpop.permute.xlu0 %4087
      %4089 = vrot.lane.b32.xlu0 %v4074, 57
      %v4090 = vpop.permute.xlu0 %4089
      %4091 = vrot.lane.b32.xlu0 %v4076, 57
      %v4092 = vpop.permute.xlu0 %4091
      %4093 = vrot.lane.b32.xlu0 %v4083, 57
      %v4094 = vpop.permute.xlu0 %4093
      %4095 = vrot.lane.b32.xlu0 %v4084, 57
      %v4096 = vpop.permute.xlu0 %4095
      %vm4097 = vcmask 465920
      %v4098 = vsel %vm4097, %v4086, %v4088
      %v4099 = vsel %vm4097, %v4088, %v4090
      %v4100 = vsel %vm4097, %v4090, %v4092
      %v4101 = vsel %vm4097, %v4092, %v4094
      %v4102 = vsel %vm4097, %v4094, %v4096
      %v4108 = vmul.f32 %v4056, %v4098
      %v4109 = vmul.f32 %v4056, %v4099
      %v4110 = vmul.f32 %v4056, %v4100
      %v4111 = vmul.f32 %v4056, %v4101
      %v4112 = vmul.f32 %v4056, %v4102
      %v4113 = vadd.f32 %v4045, %v4108
      %v4114 = vadd.f32 %v4046, %v4109
      %v4115 = vadd.f32 %v4047, %v4110
      %v4116 = vadd.f32 %v4048, %v4111
      %v4117 = vadd.f32 %v4049, %v4112
      %v4118 = vld [vmem:[#allocation2 + $0x2] sm:$0xff]
      %v4119 = vld [vmem:[#allocation2 + $0xa] sm:$0xf]
      %v4120 = vld [vmem:[%s6] sm:$0x3]
      %4122 = vset.pattern.permute.xlu0 45
      %4123 = vperm.xlu0 %4122, %v4120
      %v4124 = vpop.permute.xlu0 %4123
      %v4128 = vcombine.high %v4118, %v4118
      %v4130 = vunpack.c.l.s4 1983009808
      %v4131 = vunpack.c.0.s8 %v4130
      %v4132 = vlaneseq
      %v4133 = vshrl.u32 %v4132, 7
      %v4134 = vsub.s32 %v4131, %v4133
      %v4135 = vrot.slane %v4118, %v4134
      %v4137 = vunpack.c.l.s4 1983009808
      %v4138 = vunpack.c.0.s8 %v4137
      %v4139 = vlaneseq
      %v4140 = vshrl.u32 %v4139, 7
      %v4141 = vsub.s32 %v4138, %v4140
      %v4142 = vrot.slane %v4128, %v4141
      %v4143 = vcombine.high %v4135, %v4135
      %v4144 = vcombine.high %v4142, %v4142
      %v4146 = vunpack.c.l.s4 1983009808
      %v4147 = vunpack.c.0.s8 %v4146
      %v4148 = vlaneseq
      %v4149 = vshrl.u32 %v4148, 7
      %v4150 = vsub.s32 %v4147, %v4149
      %v4151 = vrot.slane %v4119, %v4150
      %v4152 = vcombine.high %v4151, %v4151
      %4153 = vrot.lane.b32.xlu0 %v4135, 56
      %v4154 = vpop.permute.xlu0 %4153
      %4155 = vrot.lane.b32.xlu0 %v4143, 56
      %v4156 = vpop.permute.xlu0 %4155
      %4157 = vrot.lane.b32.xlu0 %v4142, 56
      %v4158 = vpop.permute.xlu0 %4157
      %4159 = vrot.lane.b32.xlu0 %v4144, 56
      %v4160 = vpop.permute.xlu0 %4159
      %4161 = vrot.lane.b32.xlu0 %v4151, 56
      %v4162 = vpop.permute.xlu0 %4161
      %4163 = vrot.lane.b32.xlu0 %v4152, 56
      %v4164 = vpop.permute.xlu0 %4163
      %vm4165 = vcmask 457728
      %v4166 = vsel %vm4165, %v4154, %v4156
      %v4167 = vsel %vm4165, %v4156, %v4158
      %v4168 = vsel %vm4165, %v4158, %v4160
      %v4169 = vsel %vm4165, %v4160, %v4162
      %v4170 = vsel %vm4165, %v4162, %v4164
      %v4176 = vmul.f32 %v4124, %v4166
      %v4177 = vmul.f32 %v4124, %v4167
      %v4178 = vmul.f32 %v4124, %v4168
      %v4179 = vmul.f32 %v4124, %v4169
      %v4180 = vmul.f32 %v4124, %v4170
      %v4181 = vadd.f32 %v4113, %v4176
      %v4182 = vadd.f32 %v4114, %v4177
      %v4183 = vadd.f32 %v4115, %v4178
      %v4184 = vadd.f32 %v4116, %v4179
      %v4185 = vadd.f32 %v4117, %v4180
      %v4186 = vld [vmem:[#allocation2 + $0x2] sm:$0xff]
      %v4187 = vld [vmem:[#allocation2 + $0xa] sm:$0xf]
      %v4188 = vld [vmem:[%s6] sm:$0x3]
      %4190 = vset.pattern.permute.xlu0 46
      %4191 = vperm.xlu0 %4190, %v4188
      %v4192 = vpop.permute.xlu0 %4191
      %v4196 = vcombine.high %v4186, %v4186
      %v4198 = vunpack.c.l.s4 1983009808
      %v4199 = vunpack.c.0.s8 %v4198
      %v4200 = vlaneseq
      %v4201 = vshrl.u32 %v4200, 7
      %v4202 = vsub.s32 %v4199, %v4201
      %v4203 = vrot.slane %v4186, %v4202
      %v4205 = vunpack.c.l.s4 1983009808
      %v4206 = vunpack.c.0.s8 %v4205
      %v4207 = vlaneseq
      %v4208 = vshrl.u32 %v4207, 7
      %v4209 = vsub.s32 %v4206, %v4208
      %v4210 = vrot.slane %v4196, %v4209
      %v4211 = vcombine.high %v4203, %v4203
      %v4212 = vcombine.high %v4210, %v4210
      %v4214 = vunpack.c.l.s4 1983009808
      %v4215 = vunpack.c.0.s8 %v4214
      %v4216 = vlaneseq
      %v4217 = vshrl.u32 %v4216, 7
      %v4218 = vsub.s32 %v4215, %v4217
      %v4219 = vrot.slane %v4187, %v4218
      %v4220 = vcombine.high %v4219, %v4219
      %4221 = vrot.lane.b32.xlu0 %v4203, 55
      %v4222 = vpop.permute.xlu0 %4221
      %4223 = vrot.lane.b32.xlu0 %v4211, 55
      %v4224 = vpop.permute.xlu0 %4223
      %4225 = vrot.lane.b32.xlu0 %v4210, 55
      %v4226 = vpop.permute.xlu0 %4225
      %4227 = vrot.lane.b32.xlu0 %v4212, 55
      %v4228 = vpop.permute.xlu0 %4227
      %4229 = vrot.lane.b32.xlu0 %v4219, 55
      %v4230 = vpop.permute.xlu0 %4229
      %4231 = vrot.lane.b32.xlu0 %v4220, 55
      %v4232 = vpop.permute.xlu0 %4231
      %vm4233 = vcmask 449536
      %v4234 = vsel %vm4233, %v4222, %v4224
      %v4235 = vsel %vm4233, %v4224, %v4226
      %v4236 = vsel %vm4233, %v4226, %v4228
      %v4237 = vsel %vm4233, %v4228, %v4230
      %v4238 = vsel %vm4233, %v4230, %v4232
      %v4244 = vmul.f32 %v4192, %v4234
      %v4245 = vmul.f32 %v4192, %v4235
      %v4246 = vmul.f32 %v4192, %v4236
      %v4247 = vmul.f32 %v4192, %v4237
      %v4248 = vmul.f32 %v4192, %v4238
      %v4249 = vadd.f32 %v4181, %v4244
      %v4250 = vadd.f32 %v4182, %v4245
      %v4251 = vadd.f32 %v4183, %v4246
      %v4252 = vadd.f32 %v4184, %v4247
      %v4253 = vadd.f32 %v4185, %v4248
      %v4254 = vld [vmem:[#allocation2 + $0x2] sm:$0xff]
      %v4255 = vld [vmem:[#allocation2 + $0xa] sm:$0xf]
      %v4256 = vld [vmem:[%s6] sm:$0x3]
      %4258 = vset.pattern.permute.xlu0 47
      %4259 = vperm.xlu0 %4258, %v4256
      %v4260 = vpop.permute.xlu0 %4259
      %v4264 = vcombine.high %v4254, %v4254
      %v4266 = vunpack.c.l.s4 1983009808
      %v4267 = vunpack.c.0.s8 %v4266
      %v4268 = vlaneseq
      %v4269 = vshrl.u32 %v4268, 7
      %v4270 = vsub.s32 %v4267, %v4269
      %v4271 = vrot.slane %v4254, %v4270
      %v4273 = vunpack.c.l.s4 1983009808
      %v4274 = vunpack.c.0.s8 %v4273
      %v4275 = vlaneseq
      %v4276 = vshrl.u32 %v4275, 7
      %v4277 = vsub.s32 %v4274, %v4276
      %v4278 = vrot.slane %v4264, %v4277
      %v4279 = vcombine.high %v4271, %v4271
      %v4280 = vcombine.high %v4278, %v4278
      %v4282 = vunpack.c.l.s4 1983009808
      %v4283 = vunpack.c.0.s8 %v4282
      %v4284 = vlaneseq
      %v4285 = vshrl.u32 %v4284, 7
      %v4286 = vsub.s32 %v4283, %v4285
      %v4287 = vrot.slane %v4255, %v4286
      %v4288 = vcombine.high %v4287, %v4287
      %4289 = vrot.lane.b32.xlu0 %v4271, 54
      %v4290 = vpop.permute.xlu0 %4289
      %4291 = vrot.lane.b32.xlu0 %v4279, 54
      %v4292 = vpop.permute.xlu0 %4291
      %4293 = vrot.lane.b32.xlu0 %v4278, 54
      %v4294 = vpop.permute.xlu0 %4293
      %4295 = vrot.lane.b32.xlu0 %v4280, 54
      %v4296 = vpop.permute.xlu0 %4295
      %4297 = vrot.lane.b32.xlu0 %v4287, 54
      %v4298 = vpop.permute.xlu0 %4297
      %4299 = vrot.lane.b32.xlu0 %v4288, 54
      %v4300 = vpop.permute.xlu0 %4299
      %vm4301 = vcmask 441344
      %v4302 = vsel %vm4301, %v4290, %v4292
      %v4303 = vsel %vm4301, %v4292, %v4294
      %v4304 = vsel %vm4301, %v4294, %v4296
      %v4305 = vsel %vm4301, %v4296, %v4298
      %v4306 = vsel %vm4301, %v4298, %v4300
      %v4312 = vmul.f32 %v4260, %v4302
      %v4313 = vmul.f32 %v4260, %v4303
      %v4314 = vmul.f32 %v4260, %v4304
      %v4315 = vmul.f32 %v4260, %v4305
      %v4316 = vmul.f32 %v4260, %v4306
      %v4317 = vadd.f32 %v4249, %v4312
      %v4318 = vadd.f32 %v4250, %v4313
      %v4319 = vadd.f32 %v4251, %v4314
      %v4320 = vadd.f32 %v4252, %v4315
      %v4321 = vadd.f32 %v4253, %v4316
      %v4322 = vld [vmem:[#allocation2 + $0x2] sm:$0xff]
      %v4323 = vld [vmem:[#allocation2 + $0xa] sm:$0xf]
      %v4324 = vld [vmem:[%s6] sm:$0x3]
      %4326 = vset.pattern.permute.xlu0 48
      %4327 = vperm.xlu0 %4326, %v4324
      %v4328 = vpop.permute.xlu0 %4327
      %v4332 = vcombine.high %v4322, %v4322
      %v4334 = vunpack.c.l.s4 1983009808
      %v4335 = vunpack.c.0.s8 %v4334
      %v4336 = vlaneseq
      %v4337 = vshrl.u32 %v4336, 7
      %v4338 = vsub.s32 %v4335, %v4337
      %v4339 = vrot.slane %v4322, %v4338
      %v4341 = vunpack.c.l.s4 1983009808
      %v4342 = vunpack.c.0.s8 %v4341
      %v4343 = vlaneseq
      %v4344 = vshrl.u32 %v4343, 7
      %v4345 = vsub.s32 %v4342, %v4344
      %v4346 = vrot.slane %v4332, %v4345
      %v4347 = vcombine.high %v4339, %v4339
      %v4348 = vcombine.high %v4346, %v4346
      %v4350 = vunpack.c.l.s4 1983009808
      %v4351 = vunpack.c.0.s8 %v4350
      %v4352 = vlaneseq
      %v4353 = vshrl.u32 %v4352, 7
      %v4354 = vsub.s32 %v4351, %v4353
      %v4355 = vrot.slane %v4323, %v4354
      %v4356 = vcombine.high %v4355, %v4355
      %4357 = vrot.lane.b32.xlu0 %v4339, 53
      %v4358 = vpop.permute.xlu0 %4357
      %4359 = vrot.lane.b32.xlu0 %v4347, 53
      %v4360 = vpop.permute.xlu0 %4359
      %4361 = vrot.lane.b32.xlu0 %v4346, 53
      %v4362 = vpop.permute.xlu0 %4361
      %4363 = vrot.lane.b32.xlu0 %v4348, 53
      %v4364 = vpop.permute.xlu0 %4363
      %4365 = vrot.lane.b32.xlu0 %v4355, 53
      %v4366 = vpop.permute.xlu0 %4365
      %4367 = vrot.lane.b32.xlu0 %v4356, 53
      %v4368 = vpop.permute.xlu0 %4367
      %vm4369 = vcmask 433152
      %v4370 = vsel %vm4369, %v4358, %v4360
      %v4371 = vsel %vm4369, %v4360, %v4362
      %v4372 = vsel %vm4369, %v4362, %v4364
      %v4373 = vsel %vm4369, %v4364, %v4366
      %v4374 = vsel %vm4369, %v4366, %v4368
      %v4380 = vmul.f32 %v4328, %v4370
      %v4381 = vmul.f32 %v4328, %v4371
      %v4382 = vmul.f32 %v4328, %v4372
      %v4383 = vmul.f32 %v4328, %v4373
      %v4384 = vmul.f32 %v4328, %v4374
      %v4385 = vadd.f32 %v4317, %v4380
      %v4386 = vadd.f32 %v4318, %v4381
      %v4387 = vadd.f32 %v4319, %v4382
      %v4388 = vadd.f32 %v4320, %v4383
      %v4389 = vadd.f32 %v4321, %v4384
      %v4395 = vrot.slane %v4385, 1
      %v4396 = vrot.slane %v4386, 1
      %v4397 = vrot.slane %v4387, 1
      %v4398 = vrot.slane %v4388, 1
      %v4399 = vrot.slane %v4389, 1
      %v4405 = vadd.f32 %v4385, %v4395
      %v4406 = vadd.f32 %v4386, %v4396
      %v4407 = vadd.f32 %v4387, %v4397
      %v4408 = vadd.f32 %v4388, %v4398
      %v4409 = vadd.f32 %v4389, %v4399
      %v4410 = vxor.u32 %v4405, 2147483648
      %v4411 = vxor.u32 %v4406, 2147483648
      %v4412 = vxor.u32 %v4407, 2147483648
      %v4413 = vxor.u32 %v4408, 2147483648
      %v4414 = vxor.u32 %v4409, 2147483648
      %v4415 = vmul.f32 %v4410, 1.442695
      %v4416 = vpow.pop %v4415
      %v4417 = vmul.f32 %v4411, 1.442695
      %v4418 = vpow.pop %v4417
      %v4419 = vmul.f32 %v4412, 1.442695
      %v4420 = vpow.pop %v4419
      %v4421 = vmul.f32 %v4413, 1.442695
      %v4422 = vpow.pop %v4421
      %v4423 = vmul.f32 %v4414, 1.442695
      %v4424 = vpow.pop %v4423
      %v4425 = vadd.f32 %v4416, 1.0
      %v4426 = vadd.f32 %v4418, 1.0
      %v4427 = vadd.f32 %v4420, 1.0
      %v4428 = vadd.f32 %v4422, 1.0
      %v4429 = vadd.f32 %v4424, 1.0
      %v4430 = vrcp.pop %v4425
      %v4431 = vmul.f32 1.0, %v4430
      %v4432 = vrcp.pop %v4426
      %v4433 = vmul.f32 1.0, %v4432
      %v4434 = vrcp.pop %v4427
      %v4435 = vmul.f32 1.0, %v4434
      %v4436 = vrcp.pop %v4428
      %v4437 = vmul.f32 1.0, %v4436
      %v4438 = vrcp.pop %v4429
      %v4439 = vmul.f32 1.0, %v4438
      %v4440 = vlaneseq
      %v4441 = vshrl.u32 %v4440, 7
      %v4442 = vsub.s32 0, %v4441
      %v4443 = vrot.slane %v4431, %v4442
      %v4444 = vlaneseq
      %v4445 = vshrl.u32 %v4444, 7
      %v4446 = vsub.s32 0, %v4445
      %v4447 = vrot.slane %v4433, %v4446
      %v4448 = vlaneseq
      %v4449 = vshrl.u32 %v4448, 7
      %v4450 = vsub.s32 0, %v4449
      %v4451 = vrot.slane %v4435, %v4450
      %v4452 = vlaneseq
      %v4453 = vshrl.u32 %v4452, 7
      %v4454 = vsub.s32 0, %v4453
      %v4455 = vrot.slane %v4437, %v4454
      %v4456 = vlaneseq
      %v4457 = vshrl.u32 %v4456, 7
      %v4458 = vsub.s32 0, %v4457
      %v4459 = vrot.slane %v4439, %v4458
      %v4460 = vmul.f32 %v972, %v4443
      %v4461 = vmul.f32 %v973, %v4447
      %v4462 = vmul.f32 %v974, %v4451
      %v4463 = vmul.f32 %v975, %v4455
      %v4464 = vmul.f32 %v976, %v4459
      %4465 = vst [vmem:[%s278] sm:$0xff] %v4460
      %4466 = vst [vmem:[%s278 + $0x8] sm:$0xff] %v4461
      %4467 = vst [vmem:[%s278 + $0x10] sm:$0xff] %v4462
      %4468 = vst [vmem:[%s278 + $0x18] sm:$0xff] %v4463
      %4469 = vst [vmem:[%s278 + $0x20] sm:$0xff] %v4464
      %p4470 = scmp.lt.s32.totalorder %s18, 1
      %s4471 = scalar_select %p4470, %s18, 1
      %s4472 = smul.addr %s4471, 5
      %s4473 = smul.addr %s4472, 8
      %s4474 = scalar_lea.vmem %s7, %s4473
      // Predicated region
      $region53: #{upblock_forward.1} parent=47 // pred_check
        %p4475 = pneg %p188
      $region54: #{upblock_forward.1} parent=47 // pred_check_branch
        %4477 = sbr.rel (%p4475) target = $region56
      $region55: #{upblock_forward.1} parent=47 // pred_region
        _
      $region56: #{upblock_forward.1} parent=47 // pred_fallthru
        _
    $region48: #{upblock_forward.1} parent=5 // pred_fallthru
      _
    %p4478 = scmp.le.s32.totalorder 2, %s13
    // Predicated region
    $region57: #{upblock_forward.1} parent=5 // pred_check
      %p4479 = pneg %p4478
    $region58: #{upblock_forward.1} parent=5 // pred_check_branch
      %4481 = sbr.rel (%p4479) target = $region60
    $region59: #{upblock_forward.1} parent=5 // pred_region
      %s4482 = ssub.s32 %s13, 2
      // Predicated region
      $region61: #{upblock_forward.1} parent=59 // pred_check
        %p4483 = pneg %p194
      $region62: #{upblock_forward.1} parent=59 // pred_check_branch
        %4485 = sbr.rel (%p4483) target = $region64
      $region63: #{upblock_forward.1} parent=59 // pred_region
        %p4486 = scmp.lt.s32.totalorder %s19, 1
        %s4487 = scalar_select %p4486, %s19, 1
        %s4488 = smul.addr %s4487, 5
        %s4489 = smul.addr %s4488, 8
        %s4490 = scalar_lea.vmem %s7, %s4489
      $region64: #{upblock_forward.1} parent=59 // pred_fallthru
        _
    $region60: #{upblock_forward.1} parent=5 // pred_fallthru
      _
  $region6: #{upblock_forward.1} parent=0 // loop_footer
    %s17 = sadd.s32 1, %s13
  $region7: #{upblock_forward.1} parent=0 // loop_footer_branch
    %12 = sbr.rel target = $region3
  $region8: #{upblock_forward.1} parent=0 // loop_exit
    _

</llo_original>
